<compile_context>
chip_gen: v7x
topology: tpu7x:2x2x1
jax: 0.10.0
libtpu: 0.0.40
codegen_flags: <defaults>
</compile_context>

<pallas_src>
import jax
import jax.numpy as jnp
from jax.experimental import pallas as pl
from jax.experimental.pallas import tpu as pltpu

D_IN = 1024      # 1 * 32 * 32
HIDDEN = 128
N_OUT = 23
N_PAD = 128      # lane-dense padded output width


def _round_up(x, m):
    return ((x + m - 1) // m) * m


def mlp_kernel(x_ref, w1_ref, b1_ref, w2_ref, b2_ref, o_ref):
    # x_ref: (TB, 1024), w1_ref: (1024, 128), b1_ref: (1, 128)
    # w2_ref: (128, 128) zero-padded, b2_ref: (1, 128) zero-padded
    # o_ref: (TB, 128) lane-dense; the real 23 columns are sliced in the wrapper.
    h = jnp.dot(x_ref[...], w1_ref[...],
                preferred_element_type=jnp.float32,
                precision=jax.lax.Precision.HIGHEST)
    h = jnp.maximum(h + b1_ref[...], 0.0)            # bias + ReLU
    y = jnp.dot(h, w2_ref[...],
                preferred_element_type=jnp.float32,
                precision=jax.lax.Precision.HIGHEST)
    o_ref[...] = (y + b2_ref[...]).astype(o_ref.dtype)


def prepare_params(w1, b1, w2, b2):
    """One-time param prep: pad the final projection to 128 output lanes
    (free on the MXU, avoids masked vst.msk partial stores on the 23-wide output)."""
    w2p = jnp.zeros((HIDDEN, N_PAD), w2.dtype).at[:, :N_OUT].set(w2)
    b2p = jnp.zeros((1, N_PAD), b2.dtype).at[:, :N_OUT].set(b2)
    return w1, b1.reshape(1, HIDDEN), w2p, b2p


def network_forward(x_nchw, params):
    """x_nchw: (B, 1, 32, 32) float32. Returns (B, 23) float32."""
    w1, b1, w2p, b2p = params
    B = x_nchw.shape[0]
    x_flat = x_nchw.reshape(B, D_IN)                 # torch.flatten(start_dim=1) order

    # Batch tile: large enough to amortize the ~0.35 us per-grid-step overhead
    # (up to 1024 rows -> 4 MiB x-tile DMAs), but capped at ceil(B/2) so the grid
    # has >= 2 steps and v7x's two TensorCores both get work. Multiple of 8 for
    # the sublane rule. VMEM @ TB=1024 f32: 2x 4 MiB x-tiles + 2x 0.5 MiB out-tiles
    # + ~1.2 MiB weights -> ~10.5 MiB, under the default scoped VMEM limit everywhere.
    TB = min(1024, _round_up(-(-B // 2), 8))
    grid = pl.cdiv(B, TB)                            # ragged last block: no jnp.pad copy

    out = pl.pallas_call(
        mlp_kernel,
        out_shape=jax.ShapeDtypeStruct((B, N_PAD), jnp.float32),
        grid=(grid,),
        in_specs=[
            pl.BlockSpec((TB, D_IN), lambda i: (i, 0)),     # x: streamed per tile
            pl.BlockSpec((D_IN, HIDDEN), lambda i: (0, 0)),  # W1: loop-invariant
            pl.BlockSpec((1, HIDDEN), lambda i: (0, 0)),     # b1: loop-invariant
            pl.BlockSpec((HIDDEN, N_PAD), lambda i: (0, 0)),  # W2 (padded)
            pl.BlockSpec((1, N_PAD), lambda i: (0, 0)),       # b2 (padded)
        ],
        out_specs=pl.BlockSpec((TB, N_PAD), lambda i: (i, 0)),
        compiler_params=pltpu.CompilerParams(
            dimension_semantics=("parallel",),               # shard batch across TCs (v7x)
        ),
    )(x_flat, w1, b1, w2p, b2p)

    # Drop the zero output columns (batch rows past B are never written).
    return out[:, :N_OUT]


def init_params(key):
    """Deterministic init matching nn.Linear shapes.
    torch stores weight as (out, in); we keep the transposed (in, out) form."""
    k1, k2, k3, k4 = jax.random.split(key, 4)
    bound1 = 1.0 / jnp.sqrt(float(D_IN))
    bound2 = 1.0 / jnp.sqrt(float(HIDDEN))
    w1 = jax.random.uniform(k1, (D_IN, HIDDEN), jnp.float32, -bound1, bound1)
    b1 = jax.random.uniform(k2, (1, HIDDEN), jnp.float32, -bound1, bound1)
    w2 = jax.random.uniform(k3, (HIDDEN, N_OUT), jnp.float32, -bound2, bound2)
    b2 = jax.random.uniform(k4, (1, N_OUT), jnp.float32, -bound2, bound2)
    return w1, b1, w2, b2


if __name__ == "__main__":
    key = jax.random.PRNGKey(0)
    kx, kp = jax.random.split(key)
    # Small batch, module's natural input shape: (B, 1, 32, 32)
    x = jax.random.uniform(kx, (2, 1, 32, 32), jnp.float32)
    w1, b1, w2, b2 = init_params(kp)
    params = prepare_params(w1, b1, w2, b2)          # one-time padding, off the fwd path

    out = network_forward(x, params)
    out = jax.block_until_ready(out)

    # Reference check in plain JAX (same math as the PyTorch module), same precision.
    x_flat = x.reshape(x.shape[0], -1)
    hidden = jnp.maximum(
        jnp.dot(x_flat, w1, precision=jax.lax.Precision.HIGHEST) + b1, 0.0)
    ref = jnp.dot(hidden, w2, precision=jax.lax.Precision.HIGHEST) + b2
    assert out.shape == (2, N_OUT)
    assert jnp.allclose(out, ref, atol=1e-4, rtol=1e-4)

    print("KERNEL_OK")
</pallas_src>

<mosaic_0001>
module attributes {stable_mosaic.version = 11 : i64} {
  func.func @mlp_kernel(%arg0: i32, %arg1: memref<8x1024xf32, #tpu.memory_space<vmem>>, %arg2: memref<1024x128xf32, #tpu.memory_space<vmem>>, %arg3: memref<1x128xf32, #tpu.memory_space<vmem>>, %arg4: memref<128x128xf32, #tpu.memory_space<vmem>>, %arg5: memref<1x128xf32, #tpu.memory_space<vmem>>, %arg6: memref<8x128xf32, #tpu.memory_space<vmem>>) attributes {dimension_semantics = [#tpu.dimension_semantics<parallel>], iteration_bounds = array<i64: 1>, scalar_prefetch = 0 : i64, scratch_operands = 0 : i64, tpu.core_type = #tpu.core_type<tc>, window_params = [{transform_indices = @transform_0, window_bounds = array<i64: 8, 1024>}, {pipeline_mode = #tpu.pipeline_mode<synchronous>, transform_indices = @transform_1, window_bounds = array<i64: 1024, 128>}, {pipeline_mode = #tpu.pipeline_mode<synchronous>, transform_indices = @transform_2, window_bounds = array<i64: 1, 128>}, {pipeline_mode = #tpu.pipeline_mode<synchronous>, transform_indices = @transform_3, window_bounds = array<i64: 128, 128>}, {pipeline_mode = #tpu.pipeline_mode<synchronous>, transform_indices = @transform_4, window_bounds = array<i64: 1, 128>}, {transform_indices = @transform_5, window_bounds = array<i64: 8, 128>}]} {
    %c0 = arith.constant 0 : index
    %c0_0 = arith.constant 0 : index
    %0 = vector.load %arg1[%c0, %c0_0] : memref<8x1024xf32, #tpu.memory_space<vmem>>, vector<8x1024xf32>
    %c0_1 = arith.constant 0 : index
    %c0_2 = arith.constant 0 : index
    %1 = vector.load %arg2[%c0_1, %c0_2] : memref<1024x128xf32, #tpu.memory_space<vmem>>, vector<1024x128xf32>
    %cst = arith.constant dense<0.000000e+00> : vector<8x128xf32>
    %2 = tpu.matmul %0, %1, %cst {dimension_numbers = #tpu.dot_dimension_numbers<[1], [0], [0], [1], [0, 0, 1, 1], [], []>, precision = #tpu.contract_precision<fp32>} : vector<8x1024xf32>, vector<1024x128xf32>, vector<8x128xf32> -> vector<8x128xf32>
    %c0_3 = arith.constant 0 : index
    %c0_4 = arith.constant 0 : index
    %3 = vector.load %arg3[%c0_3, %c0_4] : memref<1x128xf32, #tpu.memory_space<vmem>>, vector<1x128xf32>
    %4 = vector.broadcast %3 : vector<1x128xf32> to vector<8x128xf32>
    %5 = arith.addf %2, %4 : vector<8x128xf32>
    %cst_5 = arith.constant 0.000000e+00 : f32
    %6 = vector.broadcast %cst_5 : f32 to vector<8x128xf32>
    %7 = arith.maximumf %5, %6 : vector<8x128xf32>
    %c0_6 = arith.constant 0 : index
    %c0_7 = arith.constant 0 : index
    %8 = vector.load %arg4[%c0_6, %c0_7] : memref<128x128xf32, #tpu.memory_space<vmem>>, vector<128x128xf32>
    %cst_8 = arith.constant dense<0.000000e+00> : vector<8x128xf32>
    %9 = tpu.matmul %7, %8, %cst_8 {dimension_numbers = #tpu.dot_dimension_numbers<[1], [0], [0], [1], [0, 0, 1, 1], [], []>, precision = #tpu.contract_precision<fp32>} : vector<8x128xf32>, vector<128x128xf32>, vector<8x128xf32> -> vector<8x128xf32>
    %c0_9 = arith.constant 0 : index
    %c0_10 = arith.constant 0 : index
    %10 = vector.load %arg5[%c0_9, %c0_10] : memref<1x128xf32, #tpu.memory_space<vmem>>, vector<1x128xf32>
    %11 = vector.broadcast %10 : vector<1x128xf32> to vector<8x128xf32>
    %12 = arith.addf %9, %11 : vector<8x128xf32>
    %c0_11 = arith.constant 0 : index
    %c0_12 = arith.constant 0 : index
    %13 = vector.load %arg6[%c0_11, %c0_12] : memref<8x128xf32, #tpu.memory_space<vmem>>, vector<8x128xf32>
    tpu.vector_store %arg6[%c0_11, %c0_12], %12 {strides = array<i32>} : memref<8x128xf32, #tpu.memory_space<vmem>>, vector<8x128xf32>,
    return
  }
  func.func @transform_0(%arg0: i32) -> (i32, i32) {
    %c0_i32 = arith.constant 0 : i32
    %c0_i32_0 = arith.constant 0 : i32
    return %arg0, %c0_i32 : i32, i32
  }
  func.func @transform_1(%arg0: i32) -> (i32, i32) {
    %c0_i32 = arith.constant 0 : i32
    %c0_i32_0 = arith.constant 0 : i32
    %c0_i32_1 = arith.constant 0 : i32
    return %c0_i32, %c0_i32_0 : i32, i32
  }
  func.func @transform_2(%arg0: i32) -> (i32, i32) {
    %c0_i32 = arith.constant 0 : i32
    %c0_i32_0 = arith.constant 0 : i32
    %c0_i32_1 = arith.constant 0 : i32
    return %c0_i32, %c0_i32_0 : i32, i32
  }
  func.func @transform_3(%arg0: i32) -> (i32, i32) {
    %c0_i32 = arith.constant 0 : i32
    %c0_i32_0 = arith.constant 0 : i32
    %c0_i32_1 = arith.constant 0 : i32
    return %c0_i32, %c0_i32_0 : i32, i32
  }
  func.func @transform_4(%arg0: i32) -> (i32, i32) {
    %c0_i32 = arith.constant 0 : i32
    %c0_i32_0 = arith.constant 0 : i32
    %c0_i32_1 = arith.constant 0 : i32
    return %c0_i32, %c0_i32_0 : i32, i32
  }
  func.func @transform_5(%arg0: i32) -> (i32, i32) {
    %c0_i32 = arith.constant 0 : i32
    %c0_i32_0 = arith.constant 0 : i32
    return %arg0, %c0_i32 : i32, i32
  }
}

</mosaic_0001>

<llo_original>
// kernel: tpu_custom_call.1
$region0: #{tpu_custom_call.1}
  #allocation0 [shape = 'u32[]', space=smem, size = 0x4, offset = 0x4, fixed_abs, tag = 'smem constant byte address 0x4 - core index']
  #allocation1 [shape = 'u32[144,128]{1,0:T(1,128)}', space=vmem, size = 0x12000, scoped, tag = 'internal scratch']
  %s0 = inlined_call_operand.hbm [shape: f32[2,1024], index: 0, kind: input, shape index: {}]
  %s1 = inlined_call_operand.hbm [shape: f32[1024,128], index: 1, kind: input, shape index: {}]
  %s2 = inlined_call_operand.vmem [shape: f32[1,128], index: 2, kind: input, shape index: {}]
  %s3 = inlined_call_operand.hbm [shape: f32[128,128], index: 3, kind: input, shape index: {}]
  %s4 = inlined_call_operand.vmem [shape: f32[1,128], index: 4, kind: input, shape index: {}]
  %s5 = inlined_call_operand.hbm [shape: f32[2,128], index: 5, kind: output, shape index: {}]
  %s6 = sld [smem:[#allocation0]]
  $region42: #{tpu_custom_call.1} parent=0
    _
  %s8 = ssub.s32 1, %s6
  %s9 = scalar_select 0, %s8, %s6
  $region1: #{tpu_custom_call.1} parent=0
    #allocation2 [shape = 'u8[32768]{0}', space=vmem, size = 0x8000, scoped, tag = 'input window, operand 0, single buffered']
    #allocation3 [shape = 's32[1]{0}', space=sflag, size = 0x4, scoped, tag = 'scoped memory for tpu_custom_call.1']
    #allocation4 [shape = 's32[1]{0}', space=sflag, size = 0x4, scoped, tag = 'scoped memory for tpu_custom_call.1']
    #allocation5 [shape = 'u8[524288]{0}', space=vmem, size = 0x80000, scoped, tag = 'input window, operand 1, single buffered']
    #allocation6 [shape = 's32[1]{0}', space=sflag, size = 0x4, scoped, tag = 'scoped memory for tpu_custom_call.1']
    #allocation7 [shape = 'u8[65536]{0}', space=vmem, size = 0x10000, scoped, tag = 'input window, operand 3, single buffered']
    #allocation8 [shape = 'u8[4096]{0}', space=vmem, size = 0x1000, scoped, tag = 'output window, operand 0, single buffered']
    %10 = vsyncpa [#allocation3], 0
    %11 = vsyncpa [#allocation6], 0
    %12 = vsyncpa [#allocation4], 0
    // Predicated region
    $region2: #{tpu_custom_call.1} parent=1 // pred_check
      _
    $region3: #{tpu_custom_call.1} parent=1 // pred_check_branch
      %14 = sbr.rel (0) target = $region5
    $region4: #{tpu_custom_call.1} parent=1 // pred_region
      %s16 = ssub.s32 1024, 256
      %17 = vsyncadd [#allocation3], %s16
      %s18 = sshll.u32 [#allocation2], 4
      %s19 = int_to_ptr.vmem [resolvable:$true] %s18
      %24 = dma.hbm_to_vmem [thread:$0]  %s0, 256, %s19, [#allocation3], 256, 256, 16
    $region5: #{tpu_custom_call.1} parent=1 // pred_fallthru
      _
    // Predicated region
    $region6: #{tpu_custom_call.1} parent=1 // pred_check
      _
    $region7: #{tpu_custom_call.1} parent=1 // pred_check_branch
      %26 = sbr.rel (0) target = $region9
    $region8: #{tpu_custom_call.1} parent=1 // pred_region
      %s28 = ssub.s32 16384, 16384
      %29 = vsyncadd [#allocation6], %s28
      %s30 = sshll.u32 [#allocation5], 4
      %s31 = int_to_ptr.vmem [resolvable:$true] %s30
      %36 = dma.hbm_to_vmem [thread:$0]  %s1, 16384, %s31, [#allocation6], 128, 128, 8
    $region9: #{tpu_custom_call.1} parent=1 // pred_fallthru
      _
    // Predicated region
    $region10: #{tpu_custom_call.1} parent=1 // pred_check
      _
    $region11: #{tpu_custom_call.1} parent=1 // pred_check_branch
      %38 = sbr.rel (0) target = $region13
    $region12: #{tpu_custom_call.1} parent=1 // pred_region
      _
    $region13: #{tpu_custom_call.1} parent=1 // pred_fallthru
      _
    // Predicated region
    $region14: #{tpu_custom_call.1} parent=1 // pred_check
      _
    $region15: #{tpu_custom_call.1} parent=1 // pred_check_branch
      %40 = sbr.rel (0) target = $region17
    $region16: #{tpu_custom_call.1} parent=1 // pred_region
      %s42 = ssub.s32 2048, 2048
      %43 = vsyncadd [#allocation6], %s42
      %s44 = sshll.u32 [#allocation7], 4
      %s45 = int_to_ptr.vmem [resolvable:$true] %s44
      %50 = dma.hbm_to_vmem [thread:$0]  %s3, 2048, %s45, [#allocation6], 128, 128, 8
    $region17: #{tpu_custom_call.1} parent=1 // pred_fallthru
      _
    // Predicated region
    $region18: #{tpu_custom_call.1} parent=1 // pred_check
      _
    $region19: #{tpu_custom_call.1} parent=1 // pred_check_branch
      %52 = sbr.rel (0) target = $region21
    $region20: #{tpu_custom_call.1} parent=1 // pred_region
      _
    $region21: #{tpu_custom_call.1} parent=1 // pred_fallthru
      _
    // Predicated region
    $region22: #{tpu_custom_call.1} parent=1 // pred_check
      _
    $region23: #{tpu_custom_call.1} parent=1 // pred_check_branch
      %54 = sbr.rel (0) target = $region25
    $region24: #{tpu_custom_call.1} parent=1 // pred_region
      %55 = dma.done [#allocation3], 1024
    $region25: #{tpu_custom_call.1} parent=1 // pred_fallthru
      _
    // Predicated region
    $region26: #{tpu_custom_call.1} parent=1 // pred_check
      _
    $region27: #{tpu_custom_call.1} parent=1 // pred_check_branch
      %57 = sbr.rel (0) target = $region29
    $region28: #{tpu_custom_call.1} parent=1 // pred_region
      %58 = dma.done [#allocation6], 16384
    $region29: #{tpu_custom_call.1} parent=1 // pred_fallthru
      _
    // Predicated region
    $region30: #{tpu_custom_call.1} parent=1 // pred_check
      _
    $region31: #{tpu_custom_call.1} parent=1 // pred_check_branch
      %60 = sbr.rel (0) target = $region33
    $region32: #{tpu_custom_call.1} parent=1 // pred_region
      %61 = dma.done [#allocation6], 2048
    $region33: #{tpu_custom_call.1} parent=1 // pred_fallthru
      _
    %v62 = vld [vmem:[#allocation2] sm:$0xff]
    %v63 = vld [vmem:[#allocation2 + $0x8] sm:$0xff]
    %v64 = vld [vmem:[#allocation2 + $0x10] sm:$0xff]
    %v65 = vld [vmem:[#allocation2 + $0x18] sm:$0xff]
    %v66 = vld [vmem:[#allocation2 + $0x20] sm:$0xff]
    %v67 = vld [vmem:[#allocation2 + $0x28] sm:$0xff]
    %v68 = vld [vmem:[#allocation2 + $0x30] sm:$0xff]
    %v69 = vld [vmem:[#allocation2 + $0x38] sm:$0xff]
    %v70 = vld [vmem:[#allocation5] sm:$0xff]
    %v71 = vld [vmem:[#allocation5 + $0x8] sm:$0xff]
    %v72 = vld [vmem:[#allocation5 + $0x10] sm:$0xff]
    %v73 = vld [vmem:[#allocation5 + $0x18] sm:$0xff]
    %v74 = vld [vmem:[#allocation5 + $0x20] sm:$0xff]
    %v75 = vld [vmem:[#allocation5 + $0x28] sm:$0xff]
    %v76 = vld [vmem:[#allocation5 + $0x30] sm:$0xff]
    %v77 = vld [vmem:[#allocation5 + $0x38] sm:$0xff]
    %v78 = vld [vmem:[#allocation5 + $0x40] sm:$0xff]
    %v79 = vld [vmem:[#allocation5 + $0x48] sm:$0xff]
    %v80 = vld [vmem:[#allocation5 + $0x50] sm:$0xff]
    %v81 = vld [vmem:[#allocation5 + $0x58] sm:$0xff]
    %v82 = vld [vmem:[#allocation5 + $0x60] sm:$0xff]
    %v83 = vld [vmem:[#allocation5 + $0x68] sm:$0xff]
    %v84 = vld [vmem:[#allocation5 + $0x70] sm:$0xff]
    %v85 = vld [vmem:[#allocation5 + $0x78] sm:$0xff]
    %v86 = vld [vmem:[#allocation5 + $0x80] sm:$0xff]
    %v87 = vld [vmem:[#allocation5 + $0x88] sm:$0xff]
    %v88 = vld [vmem:[#allocation5 + $0x90] sm:$0xff]
    %v89 = vld [vmem:[#allocation5 + $0x98] sm:$0xff]
    %v90 = vld [vmem:[#allocation5 + $0xa0] sm:$0xff]
    %v91 = vld [vmem:[#allocation5 + $0xa8] sm:$0xff]
    %v92 = vld [vmem:[#allocation5 + $0xb0] sm:$0xff]
    %v93 = vld [vmem:[#allocation5 + $0xb8] sm:$0xff]
    %v94 = vld [vmem:[#allocation5 + $0xc0] sm:$0xff]
    %v95 = vld [vmem:[#allocation5 + $0xc8] sm:$0xff]
    %v96 = vld [vmem:[#allocation5 + $0xd0] sm:$0xff]
    %v97 = vld [vmem:[#allocation5 + $0xd8] sm:$0xff]
    %v98 = vld [vmem:[#allocation5 + $0xe0] sm:$0xff]
    %v99 = vld [vmem:[#allocation5 + $0xe8] sm:$0xff]
    %v100 = vld [vmem:[#allocation5 + $0xf0] sm:$0xff]
    %v101 = vld [vmem:[#allocation5 + $0xf8] sm:$0xff]
    %v102 = vld [vmem:[#allocation5 + $0x100] sm:$0xff]
    %v103 = vld [vmem:[#allocation5 + $0x108] sm:$0xff]
    %v104 = vld [vmem:[#allocation5 + $0x110] sm:$0xff]
    %v105 = vld [vmem:[#allocation5 + $0x118] sm:$0xff]
    %v106 = vld [vmem:[#allocation5 + $0x120] sm:$0xff]
    %v107 = vld [vmem:[#allocation5 + $0x128] sm:$0xff]
    %v108 = vld [vmem:[#allocation5 + $0x130] sm:$0xff]
    %v109 = vld [vmem:[#allocation5 + $0x138] sm:$0xff]
    %v110 = vld [vmem:[#allocation5 + $0x140] sm:$0xff]
    %v111 = vld [vmem:[#allocation5 + $0x148] sm:$0xff]
    %v112 = vld [vmem:[#allocation5 + $0x150] sm:$0xff]
    %v113 = vld [vmem:[#allocation5 + $0x158] sm:$0xff]
    %v114 = vld [vmem:[#allocation5 + $0x160] sm:$0xff]
    %v115 = vld [vmem:[#allocation5 + $0x168] sm:$0xff]
    %v116 = vld [vmem:[#allocation5 + $0x170] sm:$0xff]
    %v117 = vld [vmem:[#allocation5 + $0x178] sm:$0xff]
    %v118 = vld [vmem:[#allocation5 + $0x180] sm:$0xff]
    %v119 = vld [vmem:[#allocation5 + $0x188] sm:$0xff]
    %v120 = vld [vmem:[#allocation5 + $0x190] sm:$0xff]
    %v121 = vld [vmem:[#allocation5 + $0x198] sm:$0xff]
    %v122 = vld [vmem:[#allocation5 + $0x1a0] sm:$0xff]
    %v123 = vld [vmem:[#allocation5 + $0x1a8] sm:$0xff]
    %v124 = vld [vmem:[#allocation5 + $0x1b0] sm:$0xff]
    %v125 = vld [vmem:[#allocation5 + $0x1b8] sm:$0xff]
    %v126 = vld [vmem:[#allocation5 + $0x1c0] sm:$0xff]
    %v127 = vld [vmem:[#allocation5 + $0x1c8] sm:$0xff]
    %v128 = vld [vmem:[#allocation5 + $0x1d0] sm:$0xff]
    %v129 = vld [vmem:[#allocation5 + $0x1d8] sm:$0xff]
    %v130 = vld [vmem:[#allocation5 + $0x1e0] sm:$0xff]
    %v131 = vld [vmem:[#allocation5 + $0x1e8] sm:$0xff]
    %v132 = vld [vmem:[#allocation5 + $0x1f0] sm:$0xff]
    %v133 = vld [vmem:[#allocation5 + $0x1f8] sm:$0xff]
    %v134 = vld [vmem:[#allocation5 + $0x200] sm:$0xff]
    %v135 = vld [vmem:[#allocation5 + $0x208] sm:$0xff]
    %v136 = vld [vmem:[#allocation5 + $0x210] sm:$0xff]
    %v137 = vld [vmem:[#allocation5 + $0x218] sm:$0xff]
    %v138 = vld [vmem:[#allocation5 + $0x220] sm:$0xff]
    %v139 = vld [vmem:[#allocation5 + $0x228] sm:$0xff]
    %v140 = vld [vmem:[#allocation5 + $0x230] sm:$0xff]
    %v141 = vld [vmem:[#allocation5 + $0x238] sm:$0xff]
    %v142 = vld [vmem:[#allocation5 + $0x240] sm:$0xff]
    %v143 = vld [vmem:[#allocation5 + $0x248] sm:$0xff]
    %v144 = vld [vmem:[#allocation5 + $0x250] sm:$0xff]
    %v145 = vld [vmem:[#allocation5 + $0x258] sm:$0xff]
    %v146 = vld [vmem:[#allocation5 + $0x260] sm:$0xff]
    %v147 = vld [vmem:[#allocation5 + $0x268] sm:$0xff]
    %v148 = vld [vmem:[#allocation5 + $0x270] sm:$0xff]
    %v149 = vld [vmem:[#allocation5 + $0x278] sm:$0xff]
    %v150 = vld [vmem:[#allocation5 + $0x280] sm:$0xff]
    %v151 = vld [vmem:[#allocation5 + $0x288] sm:$0xff]
    %v152 = vld [vmem:[#allocation5 + $0x290] sm:$0xff]
    %v153 = vld [vmem:[#allocation5 + $0x298] sm:$0xff]
    %v154 = vld [vmem:[#allocation5 + $0x2a0] sm:$0xff]
    %v155 = vld [vmem:[#allocation5 + $0x2a8] sm:$0xff]
    %v156 = vld [vmem:[#allocation5 + $0x2b0] sm:$0xff]
    %v157 = vld [vmem:[#allocation5 + $0x2b8] sm:$0xff]
    %v158 = vld [vmem:[#allocation5 + $0x2c0] sm:$0xff]
    %v159 = vld [vmem:[#allocation5 + $0x2c8] sm:$0xff]
    %v160 = vld [vmem:[#allocation5 + $0x2d0] sm:$0xff]
    %v161 = vld [vmem:[#allocation5 + $0x2d8] sm:$0xff]
    %v162 = vld [vmem:[#allocation5 + $0x2e0] sm:$0xff]
    %v163 = vld [vmem:[#allocation5 + $0x2e8] sm:$0xff]
    %v164 = vld [vmem:[#allocation5 + $0x2f0] sm:$0xff]
    %v165 = vld [vmem:[#allocation5 + $0x2f8] sm:$0xff]
    %v166 = vld [vmem:[#allocation5 + $0x300] sm:$0xff]
    %v167 = vld [vmem:[#allocation5 + $0x308] sm:$0xff]
    %v168 = vld [vmem:[#allocation5 + $0x310] sm:$0xff]
    %v169 = vld [vmem:[#allocation5 + $0x318] sm:$0xff]
    %v170 = vld [vmem:[#allocation5 + $0x320] sm:$0xff]
    %v171 = vld [vmem:[#allocation5 + $0x328] sm:$0xff]
    %v172 = vld [vmem:[#allocation5 + $0x330] sm:$0xff]
    %v173 = vld [vmem:[#allocation5 + $0x338] sm:$0xff]
    %v174 = vld [vmem:[#allocation5 + $0x340] sm:$0xff]
    %v175 = vld [vmem:[#allocation5 + $0x348] sm:$0xff]
    %v176 = vld [vmem:[#allocation5 + $0x350] sm:$0xff]
    %v177 = vld [vmem:[#allocation5 + $0x358] sm:$0xff]
    %v178 = vld [vmem:[#allocation5 + $0x360] sm:$0xff]
    %v179 = vld [vmem:[#allocation5 + $0x368] sm:$0xff]
    %v180 = vld [vmem:[#allocation5 + $0x370] sm:$0xff]
    %v181 = vld [vmem:[#allocation5 + $0x378] sm:$0xff]
    %v182 = vld [vmem:[#allocation5 + $0x380] sm:$0xff]
    %v183 = vld [vmem:[#allocation5 + $0x388] sm:$0xff]
    %v184 = vld [vmem:[#allocation5 + $0x390] sm:$0xff]
    %v185 = vld [vmem:[#allocation5 + $0x398] sm:$0xff]
    %v186 = vld [vmem:[#allocation5 + $0x3a0] sm:$0xff]
    %v187 = vld [vmem:[#allocation5 + $0x3a8] sm:$0xff]
    %v188 = vld [vmem:[#allocation5 + $0x3b0] sm:$0xff]
    %v189 = vld [vmem:[#allocation5 + $0x3b8] sm:$0xff]
    %v190 = vld [vmem:[#allocation5 + $0x3c0] sm:$0xff]
    %v191 = vld [vmem:[#allocation5 + $0x3c8] sm:$0xff]
    %v192 = vld [vmem:[#allocation5 + $0x3d0] sm:$0xff]
    %v193 = vld [vmem:[#allocation5 + $0x3d8] sm:$0xff]
    %v194 = vld [vmem:[#allocation5 + $0x3e0] sm:$0xff]
    %v195 = vld [vmem:[#allocation5 + $0x3e8] sm:$0xff]
    %v196 = vld [vmem:[#allocation5 + $0x3f0] sm:$0xff]
    %v197 = vld [vmem:[#allocation5 + $0x3f8] sm:$0xff]
    %v198 = vld [vmem:[%s2] sm:$0x1]
    %v200 = vlaneseq
    %v201 = vshrl.u32 %v200, 7
    %v202 = vsub.s32 0, %v201
    %v203 = vrot.slane %v198, %v202
    %v213 = vcombine.low %v62, %v64
    %v214 = vcombine.high %v62, %v64
    %v215 = vcombine.low %v66, %v68
    %v216 = vcombine.high %v66, %v68
    %v218 = vunpack.c.l.s4 1983009808
    %v219 = vunpack.c.0.s8 %v218
    %v220 = vlaneseq
    %v221 = vshrl.u32 %v220, 7
    %v222 = vsub.s32 %v219, %v221
    %v223 = vrot.slane %v213, %v222
    %v225 = vunpack.c.l.s4 1983009808
    %v226 = vunpack.c.0.s8 %v225
    %v227 = vlaneseq
    %v228 = vshrl.u32 %v227, 7
    %v229 = vsub.s32 %v226, %v228
    %v230 = vrot.slane %v214, %v229
    %v232 = vunpack.c.l.s4 1983009808
    %v233 = vunpack.c.0.s8 %v232
    %v234 = vlaneseq
    %v235 = vshrl.u32 %v234, 7
    %v236 = vsub.s32 %v233, %v235
    %v237 = vrot.slane %v215, %v236
    %v239 = vunpack.c.l.s4 1983009808
    %v240 = vunpack.c.0.s8 %v239
    %v241 = vlaneseq
    %v242 = vshrl.u32 %v241, 7
    %v243 = vsub.s32 %v240, %v242
    %v244 = vrot.slane %v216, %v243
    %v245 = vcombine.low %v223, %v237
    %v246 = vcombine.high %v223, %v237
    %v247 = vcombine.low %v230, %v244
    %v248 = vcombine.high %v230, %v244
    %v249 = vcombine.low %v63, %v65
    %v250 = vcombine.high %v63, %v65
    %v251 = vcombine.low %v67, %v69
    %v252 = vcombine.high %v67, %v69
    %v254 = vunpack.c.l.s4 1983009808
    %v255 = vunpack.c.0.s8 %v254
    %v256 = vlaneseq
    %v257 = vshrl.u32 %v256, 7
    %v258 = vsub.s32 %v255, %v257
    %v259 = vrot.slane %v249, %v258
    %v261 = vunpack.c.l.s4 1983009808
    %v262 = vunpack.c.0.s8 %v261
    %v263 = vlaneseq
    %v264 = vshrl.u32 %v263, 7
    %v265 = vsub.s32 %v262, %v264
    %v266 = vrot.slane %v250, %v265
    %v268 = vunpack.c.l.s4 1983009808
    %v269 = vunpack.c.0.s8 %v268
    %v270 = vlaneseq
    %v271 = vshrl.u32 %v270, 7
    %v272 = vsub.s32 %v269, %v271
    %v273 = vrot.slane %v251, %v272
    %v275 = vunpack.c.l.s4 1983009808
    %v276 = vunpack.c.0.s8 %v275
    %v277 = vlaneseq
    %v278 = vshrl.u32 %v277, 7
    %v279 = vsub.s32 %v276, %v278
    %v280 = vrot.slane %v252, %v279
    %v281 = vcombine.low %v259, %v273
    %v282 = vcombine.high %v259, %v273
    %v283 = vcombine.low %v266, %v280
    %v284 = vcombine.high %v266, %v280
    %293 = vmatprep.subr.mxu0 0.0
    %v294 = vand.u32 %v70, 4294901760
    %295 = vmatpush1.msra.mxu0 %v294
    %296 = vmatprep.subr.mxu0 0.0
    %v297 = vand.u32 %v71, 4294901760
    %298 = vmatpush1.msra.mxu0 %v297
    %299 = vmatprep.subr.mxu0 0.0
    %v300 = vand.u32 %v72, 4294901760
    %301 = vmatpush1.msra.mxu0 %v300
    %302 = vmatprep.subr.mxu0 0.0
    %v303 = vand.u32 %v73, 4294901760
    %304 = vmatpush1.msra.mxu0 %v303
    %305 = vmatprep.subr.mxu0 0.0
    %v306 = vand.u32 %v74, 4294901760
    %307 = vmatpush1.msra.mxu0 %v306
    %308 = vmatprep.subr.mxu0 0.0
    %v309 = vand.u32 %v75, 4294901760
    %310 = vmatpush1.msra.mxu0 %v309
    %311 = vmatprep.subr.mxu0 0.0
    %v312 = vand.u32 %v76, 4294901760
    %313 = vmatpush1.msra.mxu0 %v312
    %314 = vmatprep.subr.mxu0 0.0
    %v315 = vand.u32 %v77, 4294901760
    %316 = vmatpush1.msra.mxu0 %v315
    %317 = vmatprep.subr.mxu0 0.0
    %v318 = vand.u32 %v78, 4294901760
    %319 = vmatpush1.msra.mxu0 %v318
    %320 = vmatprep.subr.mxu0 0.0
    %v321 = vand.u32 %v79, 4294901760
    %322 = vmatpush1.msra.mxu0 %v321
    %323 = vmatprep.subr.mxu0 0.0
    %v324 = vand.u32 %v80, 4294901760
    %325 = vmatpush1.msra.mxu0 %v324
    %326 = vmatprep.subr.mxu0 0.0
    %v327 = vand.u32 %v81, 4294901760
    %328 = vmatpush1.msra.mxu0 %v327
    %329 = vmatprep.subr.mxu0 0.0
    %v330 = vand.u32 %v82, 4294901760
    %331 = vmatpush1.msra.mxu0 %v330
    %332 = vmatprep.subr.mxu0 0.0
    %v333 = vand.u32 %v83, 4294901760
    %334 = vmatpush1.msra.mxu0 %v333
    %335 = vmatprep.subr.mxu0 0.0
    %v336 = vand.u32 %v84, 4294901760
    %337 = vmatpush1.msra.mxu0 %v336
    %338 = vmatprep.subr.mxu0 0.0
    %v339 = vand.u32 %v85, 4294901760
    %340 = vmatpush1.msra.mxu0 %v339
    %341 = vmatprep.subr.mxu0 0.0
    %v342 = vand.u32 %v86, 4294901760
    %343 = vmatpush1.msra.mxu0 %v342
    %344 = vmatprep.subr.mxu0 0.0
    %v345 = vand.u32 %v87, 4294901760
    %346 = vmatpush1.msra.mxu0 %v345
    %347 = vmatprep.subr.mxu0 0.0
    %v348 = vand.u32 %v88, 4294901760
    %349 = vmatpush1.msra.mxu0 %v348
    %350 = vmatprep.subr.mxu0 0.0
    %v351 = vand.u32 %v89, 4294901760
    %352 = vmatpush1.msra.mxu0 %v351
    %353 = vmatprep.subr.mxu0 0.0
    %v354 = vand.u32 %v90, 4294901760
    %355 = vmatpush1.msra.mxu0 %v354
    %356 = vmatprep.subr.mxu0 0.0
    %v357 = vand.u32 %v91, 4294901760
    %358 = vmatpush1.msra.mxu0 %v357
    %359 = vmatprep.subr.mxu0 0.0
    %v360 = vand.u32 %v92, 4294901760
    %361 = vmatpush1.msra.mxu0 %v360
    %362 = vmatprep.subr.mxu0 0.0
    %v363 = vand.u32 %v93, 4294901760
    %364 = vmatpush1.msra.mxu0 %v363
    %365 = vmatprep.subr.mxu0 0.0
    %v366 = vand.u32 %v94, 4294901760
    %367 = vmatpush1.msra.mxu0 %v366
    %368 = vmatprep.subr.mxu0 0.0
    %v369 = vand.u32 %v95, 4294901760
    %370 = vmatpush1.msra.mxu0 %v369
    %371 = vmatprep.subr.mxu0 0.0
    %v372 = vand.u32 %v96, 4294901760
    %373 = vmatpush1.msra.mxu0 %v372
    %374 = vmatprep.subr.mxu0 0.0
    %v375 = vand.u32 %v97, 4294901760
    %376 = vmatpush1.msra.mxu0 %v375
    %377 = vmatprep.subr.mxu0 0.0
    %v378 = vand.u32 %v98, 4294901760
    %379 = vmatpush1.msra.mxu0 %v378
    %380 = vmatprep.subr.mxu0 0.0
    %v381 = vand.u32 %v99, 4294901760
    %382 = vmatpush1.msra.mxu0 %v381
    %383 = vmatprep.subr.mxu0 0.0
    %v384 = vand.u32 %v100, 4294901760
    %385 = vmatpush1.msra.mxu0 %v384
    %386 = vmatprep.subr.mxu0 0.0
    %v387 = vand.u32 %v101, 4294901760
    %388 = vmatpush1.msra.mxu0 %v387
    %v389 = vand.u32 %v246, 4294901760
    %v390 = vsub.f32 %v246, %v389
    %v391 = vand.u32 %v390, 4294901760
    %v392 = vsub.f32 %v390, %v391
    %v393 = vand.u32 %v392, 4294901760
    %394 = vmatprep.mubr.f32.mxu0 %v393
    %v395 = vand.u32 %v245, 4294901760
    %v396 = vsub.f32 %v245, %v395
    %v397 = vand.u32 %v396, 4294901760
    %v398 = vsub.f32 %v396, %v397
    %v399 = vand.u32 %v398, 4294901760
    %400 = vmatmul.mubr.f32.gmra.mrb[0].mxu0 %v399
    %v401 = vpop.f32.mrb[0].mxu0
    %v402 = vadd.f32 %v203, %v401
    %v403 = vpop.f32.mrb[0].mxu0
    %404 = vdwg.mxu0
    %405 = vmatprep.subr.mxu0 0.0
    %v406 = vand.u32 %v70, 4294901760
    %v407 = vsub.f32 %v70, %v406
    %v408 = vand.u32 %v407, 4294901760
    %v409 = vsub.f32 %v407, %v408
    %v410 = vand.u32 %v409, 4294901760
    %411 = vmatpush1.msra.mxu0 %v410
    %412 = vmatprep.subr.mxu0 0.0
    %v413 = vand.u32 %v71, 4294901760
    %v414 = vsub.f32 %v71, %v413
    %v415 = vand.u32 %v414, 4294901760
    %v416 = vsub.f32 %v414, %v415
    %v417 = vand.u32 %v416, 4294901760
    %418 = vmatpush1.msra.mxu0 %v417
    %419 = vmatprep.subr.mxu0 0.0
    %v420 = vand.u32 %v72, 4294901760
    %v421 = vsub.f32 %v72, %v420
    %v422 = vand.u32 %v421, 4294901760
    %v423 = vsub.f32 %v421, %v422
    %v424 = vand.u32 %v423, 4294901760
    %425 = vmatpush1.msra.mxu0 %v424
    %426 = vmatprep.subr.mxu0 0.0
    %v427 = vand.u32 %v73, 4294901760
    %v428 = vsub.f32 %v73, %v427
    %v429 = vand.u32 %v428, 4294901760
    %v430 = vsub.f32 %v428, %v429
    %v431 = vand.u32 %v430, 4294901760
    %432 = vmatpush1.msra.mxu0 %v431
    %433 = vmatprep.subr.mxu0 0.0
    %v434 = vand.u32 %v74, 4294901760
    %v435 = vsub.f32 %v74, %v434
    %v436 = vand.u32 %v435, 4294901760
    %v437 = vsub.f32 %v435, %v436
    %v438 = vand.u32 %v437, 4294901760
    %439 = vmatpush1.msra.mxu0 %v438
    %440 = vmatprep.subr.mxu0 0.0
    %v441 = vand.u32 %v75, 4294901760
    %v442 = vsub.f32 %v75, %v441
    %v443 = vand.u32 %v442, 4294901760
    %v444 = vsub.f32 %v442, %v443
    %v445 = vand.u32 %v444, 4294901760
    %446 = vmatpush1.msra.mxu0 %v445
    %447 = vmatprep.subr.mxu0 0.0
    %v448 = vand.u32 %v76, 4294901760
    %v449 = vsub.f32 %v76, %v448
    %v450 = vand.u32 %v449, 4294901760
    %v451 = vsub.f32 %v449, %v450
    %v452 = vand.u32 %v451, 4294901760
    %453 = vmatpush1.msra.mxu0 %v452
    %454 = vmatprep.subr.mxu0 0.0
    %v455 = vand.u32 %v77, 4294901760
    %v456 = vsub.f32 %v77, %v455
    %v457 = vand.u32 %v456, 4294901760
    %v458 = vsub.f32 %v456, %v457
    %v459 = vand.u32 %v458, 4294901760
    %460 = vmatpush1.msra.mxu0 %v459
    %461 = vmatprep.subr.mxu0 0.0
    %v462 = vand.u32 %v78, 4294901760
    %v463 = vsub.f32 %v78, %v462
    %v464 = vand.u32 %v463, 4294901760
    %v465 = vsub.f32 %v463, %v464
    %v466 = vand.u32 %v465, 4294901760
    %467 = vmatpush1.msra.mxu0 %v466
    %468 = vmatprep.subr.mxu0 0.0
    %v469 = vand.u32 %v79, 4294901760
    %v470 = vsub.f32 %v79, %v469
    %v471 = vand.u32 %v470, 4294901760
    %v472 = vsub.f32 %v470, %v471
    %v473 = vand.u32 %v472, 4294901760
    %474 = vmatpush1.msra.mxu0 %v473
    %475 = vmatprep.subr.mxu0 0.0
    %v476 = vand.u32 %v80, 4294901760
    %v477 = vsub.f32 %v80, %v476
    %v478 = vand.u32 %v477, 4294901760
    %v479 = vsub.f32 %v477, %v478
    %v480 = vand.u32 %v479, 4294901760
    %481 = vmatpush1.msra.mxu0 %v480
    %482 = vmatprep.subr.mxu0 0.0
    %v483 = vand.u32 %v81, 4294901760
    %v484 = vsub.f32 %v81, %v483
    %v485 = vand.u32 %v484, 4294901760
    %v486 = vsub.f32 %v484, %v485
    %v487 = vand.u32 %v486, 4294901760
    %488 = vmatpush1.msra.mxu0 %v487
    %489 = vmatprep.subr.mxu0 0.0
    %v490 = vand.u32 %v82, 4294901760
    %v491 = vsub.f32 %v82, %v490
    %v492 = vand.u32 %v491, 4294901760
    %v493 = vsub.f32 %v491, %v492
    %v494 = vand.u32 %v493, 4294901760
    %495 = vmatpush1.msra.mxu0 %v494
    %496 = vmatprep.subr.mxu0 0.0
    %v497 = vand.u32 %v83, 4294901760
    %v498 = vsub.f32 %v83, %v497
    %v499 = vand.u32 %v498, 4294901760
    %v500 = vsub.f32 %v498, %v499
    %v501 = vand.u32 %v500, 4294901760
    %502 = vmatpush1.msra.mxu0 %v501
    %503 = vmatprep.subr.mxu0 0.0
    %v504 = vand.u32 %v84, 4294901760
    %v505 = vsub.f32 %v84, %v504
    %v506 = vand.u32 %v505, 4294901760
    %v507 = vsub.f32 %v505, %v506
    %v508 = vand.u32 %v507, 4294901760
    %509 = vmatpush1.msra.mxu0 %v508
    %510 = vmatprep.subr.mxu0 0.0
    %v511 = vand.u32 %v85, 4294901760
    %v512 = vsub.f32 %v85, %v511
    %v513 = vand.u32 %v512, 4294901760
    %v514 = vsub.f32 %v512, %v513
    %v515 = vand.u32 %v514, 4294901760
    %516 = vmatpush1.msra.mxu0 %v515
    %517 = vmatprep.subr.mxu0 0.0
    %v518 = vand.u32 %v86, 4294901760
    %v519 = vsub.f32 %v86, %v518
    %v520 = vand.u32 %v519, 4294901760
    %v521 = vsub.f32 %v519, %v520
    %v522 = vand.u32 %v521, 4294901760
    %523 = vmatpush1.msra.mxu0 %v522
    %524 = vmatprep.subr.mxu0 0.0
    %v525 = vand.u32 %v87, 4294901760
    %v526 = vsub.f32 %v87, %v525
    %v527 = vand.u32 %v526, 4294901760
    %v528 = vsub.f32 %v526, %v527
    %v529 = vand.u32 %v528, 4294901760
    %530 = vmatpush1.msra.mxu0 %v529
    %531 = vmatprep.subr.mxu0 0.0
    %v532 = vand.u32 %v88, 4294901760
    %v533 = vsub.f32 %v88, %v532
    %v534 = vand.u32 %v533, 4294901760
    %v535 = vsub.f32 %v533, %v534
    %v536 = vand.u32 %v535, 4294901760
    %537 = vmatpush1.msra.mxu0 %v536
    %538 = vmatprep.subr.mxu0 0.0
    %v539 = vand.u32 %v89, 4294901760
    %v540 = vsub.f32 %v89, %v539
    %v541 = vand.u32 %v540, 4294901760
    %v542 = vsub.f32 %v540, %v541
    %v543 = vand.u32 %v542, 4294901760
    %544 = vmatpush1.msra.mxu0 %v543
    %545 = vmatprep.subr.mxu0 0.0
    %v546 = vand.u32 %v90, 4294901760
    %v547 = vsub.f32 %v90, %v546
    %v548 = vand.u32 %v547, 4294901760
    %v549 = vsub.f32 %v547, %v548
    %v550 = vand.u32 %v549, 4294901760
    %551 = vmatpush1.msra.mxu0 %v550
    %552 = vmatprep.subr.mxu0 0.0
    %v553 = vand.u32 %v91, 4294901760
    %v554 = vsub.f32 %v91, %v553
    %v555 = vand.u32 %v554, 4294901760
    %v556 = vsub.f32 %v554, %v555
    %v557 = vand.u32 %v556, 4294901760
    %558 = vmatpush1.msra.mxu0 %v557
    %559 = vmatprep.subr.mxu0 0.0
    %v560 = vand.u32 %v92, 4294901760
    %v561 = vsub.f32 %v92, %v560
    %v562 = vand.u32 %v561, 4294901760
    %v563 = vsub.f32 %v561, %v562
    %v564 = vand.u32 %v563, 4294901760
    %565 = vmatpush1.msra.mxu0 %v564
    %566 = vmatprep.subr.mxu0 0.0
    %v567 = vand.u32 %v93, 4294901760
    %v568 = vsub.f32 %v93, %v567
    %v569 = vand.u32 %v568, 4294901760
    %v570 = vsub.f32 %v568, %v569
    %v571 = vand.u32 %v570, 4294901760
    %572 = vmatpush1.msra.mxu0 %v571
    %573 = vmatprep.subr.mxu0 0.0
    %v574 = vand.u32 %v94, 4294901760
    %v575 = vsub.f32 %v94, %v574
    %v576 = vand.u32 %v575, 4294901760
    %v577 = vsub.f32 %v575, %v576
    %v578 = vand.u32 %v577, 4294901760
    %579 = vmatpush1.msra.mxu0 %v578
    %580 = vmatprep.subr.mxu0 0.0
    %v581 = vand.u32 %v95, 4294901760
    %v582 = vsub.f32 %v95, %v581
    %v583 = vand.u32 %v582, 4294901760
    %v584 = vsub.f32 %v582, %v583
    %v585 = vand.u32 %v584, 4294901760
    %586 = vmatpush1.msra.mxu0 %v585
    %587 = vmatprep.subr.mxu0 0.0
    %v588 = vand.u32 %v96, 4294901760
    %v589 = vsub.f32 %v96, %v588
    %v590 = vand.u32 %v589, 4294901760
    %v591 = vsub.f32 %v589, %v590
    %v592 = vand.u32 %v591, 4294901760
    %593 = vmatpush1.msra.mxu0 %v592
    %594 = vmatprep.subr.mxu0 0.0
    %v595 = vand.u32 %v97, 4294901760
    %v596 = vsub.f32 %v97, %v595
    %v597 = vand.u32 %v596, 4294901760
    %v598 = vsub.f32 %v596, %v597
    %v599 = vand.u32 %v598, 4294901760
    %600 = vmatpush1.msra.mxu0 %v599
    %601 = vmatprep.subr.mxu0 0.0
    %v602 = vand.u32 %v98, 4294901760
    %v603 = vsub.f32 %v98, %v602
    %v604 = vand.u32 %v603, 4294901760
    %v605 = vsub.f32 %v603, %v604
    %v606 = vand.u32 %v605, 4294901760
    %607 = vmatpush1.msra.mxu0 %v606
    %608 = vmatprep.subr.mxu0 0.0
    %v609 = vand.u32 %v99, 4294901760
    %v610 = vsub.f32 %v99, %v609
    %v611 = vand.u32 %v610, 4294901760
    %v612 = vsub.f32 %v610, %v611
    %v613 = vand.u32 %v612, 4294901760
    %614 = vmatpush1.msra.mxu0 %v613
    %615 = vmatprep.subr.mxu0 0.0
    %v616 = vand.u32 %v100, 4294901760
    %v617 = vsub.f32 %v100, %v616
    %v618 = vand.u32 %v617, 4294901760
    %v619 = vsub.f32 %v617, %v618
    %v620 = vand.u32 %v619, 4294901760
    %621 = vmatpush1.msra.mxu0 %v620
    %622 = vmatprep.subr.mxu0 0.0
    %v623 = vand.u32 %v101, 4294901760
    %v624 = vsub.f32 %v101, %v623
    %v625 = vand.u32 %v624, 4294901760
    %v626 = vsub.f32 %v624, %v625
    %v627 = vand.u32 %v626, 4294901760
    %628 = vmatpush1.msra.mxu0 %v627
    %v629 = vand.u32 %v246, 4294901760
    %630 = vmatprep.mubr.f32.mxu0 %v629
    %v631 = vand.u32 %v245, 4294901760
    %632 = vmatmul.mubr.f32.gmra.mrb[0].mxu0 %v631
    %v633 = vpop.f32.mrb[0].mxu0
    %v634 = vadd.f32 %v402, %v633
    %v635 = vpop.f32.mrb[0].mxu0
    %636 = vdwg.mxu0
    %637 = vmatprep.subr.mxu0 0.0
    %v638 = vand.u32 %v70, 4294901760
    %v639 = vsub.f32 %v70, %v638
    %640 = vmatpush1.msra.mxu0 %v639
    %641 = vmatprep.subr.mxu0 0.0
    %v642 = vand.u32 %v71, 4294901760
    %v643 = vsub.f32 %v71, %v642
    %644 = vmatpush1.msra.mxu0 %v643
    %645 = vmatprep.subr.mxu0 0.0
    %v646 = vand.u32 %v72, 4294901760
    %v647 = vsub.f32 %v72, %v646
    %648 = vmatpush1.msra.mxu0 %v647
    %649 = vmatprep.subr.mxu0 0.0
    %v650 = vand.u32 %v73, 4294901760
    %v651 = vsub.f32 %v73, %v650
    %652 = vmatpush1.msra.mxu0 %v651
    %653 = vmatprep.subr.mxu0 0.0
    %v654 = vand.u32 %v74, 4294901760
    %v655 = vsub.f32 %v74, %v654
    %656 = vmatpush1.msra.mxu0 %v655
    %657 = vmatprep.subr.mxu0 0.0
    %v658 = vand.u32 %v75, 4294901760
    %v659 = vsub.f32 %v75, %v658
    %660 = vmatpush1.msra.mxu0 %v659
    %661 = vmatprep.subr.mxu0 0.0
    %v662 = vand.u32 %v76, 4294901760
    %v663 = vsub.f32 %v76, %v662
    %664 = vmatpush1.msra.mxu0 %v663
    %665 = vmatprep.subr.mxu0 0.0
    %v666 = vand.u32 %v77, 4294901760
    %v667 = vsub.f32 %v77, %v666
    %668 = vmatpush1.msra.mxu0 %v667
    %669 = vmatprep.subr.mxu0 0.0
    %v670 = vand.u32 %v78, 4294901760
    %v671 = vsub.f32 %v78, %v670
    %672 = vmatpush1.msra.mxu0 %v671
    %673 = vmatprep.subr.mxu0 0.0
    %v674 = vand.u32 %v79, 4294901760
    %v675 = vsub.f32 %v79, %v674
    %676 = vmatpush1.msra.mxu0 %v675
    %677 = vmatprep.subr.mxu0 0.0
    %v678 = vand.u32 %v80, 4294901760
    %v679 = vsub.f32 %v80, %v678
    %680 = vmatpush1.msra.mxu0 %v679
    %681 = vmatprep.subr.mxu0 0.0
    %v682 = vand.u32 %v81, 4294901760
    %v683 = vsub.f32 %v81, %v682
    %684 = vmatpush1.msra.mxu0 %v683
    %685 = vmatprep.subr.mxu0 0.0
    %v686 = vand.u32 %v82, 4294901760
    %v687 = vsub.f32 %v82, %v686
    %688 = vmatpush1.msra.mxu0 %v687
    %689 = vmatprep.subr.mxu0 0.0
    %v690 = vand.u32 %v83, 4294901760
    %v691 = vsub.f32 %v83, %v690
    %692 = vmatpush1.msra.mxu0 %v691
    %693 = vmatprep.subr.mxu0 0.0
    %v694 = vand.u32 %v84, 4294901760
    %v695 = vsub.f32 %v84, %v694
    %696 = vmatpush1.msra.mxu0 %v695
    %697 = vmatprep.subr.mxu0 0.0
    %v698 = vand.u32 %v85, 4294901760
    %v699 = vsub.f32 %v85, %v698
    %700 = vmatpush1.msra.mxu0 %v699
    %701 = vmatprep.subr.mxu0 0.0
    %v702 = vand.u32 %v86, 4294901760
    %v703 = vsub.f32 %v86, %v702
    %704 = vmatpush1.msra.mxu0 %v703
    %705 = vmatprep.subr.mxu0 0.0
    %v706 = vand.u32 %v87, 4294901760
    %v707 = vsub.f32 %v87, %v706
    %708 = vmatpush1.msra.mxu0 %v707
    %709 = vmatprep.subr.mxu0 0.0
    %v710 = vand.u32 %v88, 4294901760
    %v711 = vsub.f32 %v88, %v710
    %712 = vmatpush1.msra.mxu0 %v711
    %713 = vmatprep.subr.mxu0 0.0
    %v714 = vand.u32 %v89, 4294901760
    %v715 = vsub.f32 %v89, %v714
    %716 = vmatpush1.msra.mxu0 %v715
    %717 = vmatprep.subr.mxu0 0.0
    %v718 = vand.u32 %v90, 4294901760
    %v719 = vsub.f32 %v90, %v718
    %720 = vmatpush1.msra.mxu0 %v719
    %721 = vmatprep.subr.mxu0 0.0
    %v722 = vand.u32 %v91, 4294901760
    %v723 = vsub.f32 %v91, %v722
    %724 = vmatpush1.msra.mxu0 %v723
    %725 = vmatprep.subr.mxu0 0.0
    %v726 = vand.u32 %v92, 4294901760
    %v727 = vsub.f32 %v92, %v726
    %728 = vmatpush1.msra.mxu0 %v727
    %729 = vmatprep.subr.mxu0 0.0
    %v730 = vand.u32 %v93, 4294901760
    %v731 = vsub.f32 %v93, %v730
    %732 = vmatpush1.msra.mxu0 %v731
    %733 = vmatprep.subr.mxu0 0.0
    %v734 = vand.u32 %v94, 4294901760
    %v735 = vsub.f32 %v94, %v734
    %736 = vmatpush1.msra.mxu0 %v735
    %737 = vmatprep.subr.mxu0 0.0
    %v738 = vand.u32 %v95, 4294901760
    %v739 = vsub.f32 %v95, %v738
    %740 = vmatpush1.msra.mxu0 %v739
    %741 = vmatprep.subr.mxu0 0.0
    %v742 = vand.u32 %v96, 4294901760
    %v743 = vsub.f32 %v96, %v742
    %744 = vmatpush1.msra.mxu0 %v743
    %745 = vmatprep.subr.mxu0 0.0
    %v746 = vand.u32 %v97, 4294901760
    %v747 = vsub.f32 %v97, %v746
    %748 = vmatpush1.msra.mxu0 %v747
    %749 = vmatprep.subr.mxu0 0.0
    %v750 = vand.u32 %v98, 4294901760
    %v751 = vsub.f32 %v98, %v750
    %752 = vmatpush1.msra.mxu0 %v751
    %753 = vmatprep.subr.mxu0 0.0
    %v754 = vand.u32 %v99, 4294901760
    %v755 = vsub.f32 %v99, %v754
    %756 = vmatpush1.msra.mxu0 %v755
    %757 = vmatprep.subr.mxu0 0.0
    %v758 = vand.u32 %v100, 4294901760
    %v759 = vsub.f32 %v100, %v758
    %760 = vmatpush1.msra.mxu0 %v759
    %761 = vmatprep.subr.mxu0 0.0
    %v762 = vand.u32 %v101, 4294901760
    %v763 = vsub.f32 %v101, %v762
    %764 = vmatpush1.msra.mxu0 %v763
    %v765 = vand.u32 %v246, 4294901760
    %v766 = vsub.f32 %v246, %v765
    %767 = vmatprep.mubr.f32.mxu0 %v766
    %v768 = vand.u32 %v245, 4294901760
    %v769 = vsub.f32 %v245, %v768
    %770 = vmatmul.mubr.f32.gmra.mrb[0].mxu0 %v769
    %v771 = vpop.f32.mrb[0].mxu0
    %v772 = vadd.f32 %v634, %v771
    %v773 = vpop.f32.mrb[0].mxu0
    %774 = vdwg.mxu0
    %775 = vmatprep.subr.mxu0 0.0
    %v776 = vand.u32 %v70, 4294901760
    %777 = vmatpush1.msra.mxu0 %v776
    %778 = vmatprep.subr.mxu0 0.0
    %v779 = vand.u32 %v71, 4294901760
    %780 = vmatpush1.msra.mxu0 %v779
    %781 = vmatprep.subr.mxu0 0.0
    %v782 = vand.u32 %v72, 4294901760
    %783 = vmatpush1.msra.mxu0 %v782
    %784 = vmatprep.subr.mxu0 0.0
    %v785 = vand.u32 %v73, 4294901760
    %786 = vmatpush1.msra.mxu0 %v785
    %787 = vmatprep.subr.mxu0 0.0
    %v788 = vand.u32 %v74, 4294901760
    %789 = vmatpush1.msra.mxu0 %v788
    %790 = vmatprep.subr.mxu0 0.0
    %v791 = vand.u32 %v75, 4294901760
    %792 = vmatpush1.msra.mxu0 %v791
    %793 = vmatprep.subr.mxu0 0.0
    %v794 = vand.u32 %v76, 4294901760
    %795 = vmatpush1.msra.mxu0 %v794
    %796 = vmatprep.subr.mxu0 0.0
    %v797 = vand.u32 %v77, 4294901760
    %798 = vmatpush1.msra.mxu0 %v797
    %799 = vmatprep.subr.mxu0 0.0
    %v800 = vand.u32 %v78, 4294901760
    %801 = vmatpush1.msra.mxu0 %v800
    %802 = vmatprep.subr.mxu0 0.0
    %v803 = vand.u32 %v79, 4294901760
    %804 = vmatpush1.msra.mxu0 %v803
    %805 = vmatprep.subr.mxu0 0.0
    %v806 = vand.u32 %v80, 4294901760
    %807 = vmatpush1.msra.mxu0 %v806
    %808 = vmatprep.subr.mxu0 0.0
    %v809 = vand.u32 %v81, 4294901760
    %810 = vmatpush1.msra.mxu0 %v809
    %811 = vmatprep.subr.mxu0 0.0
    %v812 = vand.u32 %v82, 4294901760
    %813 = vmatpush1.msra.mxu0 %v812
    %814 = vmatprep.subr.mxu0 0.0
    %v815 = vand.u32 %v83, 4294901760
    %816 = vmatpush1.msra.mxu0 %v815
    %817 = vmatprep.subr.mxu0 0.0
    %v818 = vand.u32 %v84, 4294901760
    %819 = vmatpush1.msra.mxu0 %v818
    %820 = vmatprep.subr.mxu0 0.0
    %v821 = vand.u32 %v85, 4294901760
    %822 = vmatpush1.msra.mxu0 %v821
    %823 = vmatprep.subr.mxu0 0.0
    %v824 = vand.u32 %v86, 4294901760
    %825 = vmatpush1.msra.mxu0 %v824
    %826 = vmatprep.subr.mxu0 0.0
    %v827 = vand.u32 %v87, 4294901760
    %828 = vmatpush1.msra.mxu0 %v827
    %829 = vmatprep.subr.mxu0 0.0
    %v830 = vand.u32 %v88, 4294901760
    %831 = vmatpush1.msra.mxu0 %v830
    %832 = vmatprep.subr.mxu0 0.0
    %v833 = vand.u32 %v89, 4294901760
    %834 = vmatpush1.msra.mxu0 %v833
    %835 = vmatprep.subr.mxu0 0.0
    %v836 = vand.u32 %v90, 4294901760
    %837 = vmatpush1.msra.mxu0 %v836
    %838 = vmatprep.subr.mxu0 0.0
    %v839 = vand.u32 %v91, 4294901760
    %840 = vmatpush1.msra.mxu0 %v839
    %841 = vmatprep.subr.mxu0 0.0
    %v842 = vand.u32 %v92, 4294901760
    %843 = vmatpush1.msra.mxu0 %v842
    %844 = vmatprep.subr.mxu0 0.0
    %v845 = vand.u32 %v93, 4294901760
    %846 = vmatpush1.msra.mxu0 %v845
    %847 = vmatprep.subr.mxu0 0.0
    %v848 = vand.u32 %v94, 4294901760
    %849 = vmatpush1.msra.mxu0 %v848
    %850 = vmatprep.subr.mxu0 0.0
    %v851 = vand.u32 %v95, 4294901760
    %852 = vmatpush1.msra.mxu0 %v851
    %853 = vmatprep.subr.mxu0 0.0
    %v854 = vand.u32 %v96, 4294901760
    %855 = vmatpush1.msra.mxu0 %v854
    %856 = vmatprep.subr.mxu0 0.0
    %v857 = vand.u32 %v97, 4294901760
    %858 = vmatpush1.msra.mxu0 %v857
    %859 = vmatprep.subr.mxu0 0.0
    %v860 = vand.u32 %v98, 4294901760
    %861 = vmatpush1.msra.mxu0 %v860
    %862 = vmatprep.subr.mxu0 0.0
    %v863 = vand.u32 %v99, 4294901760
    %864 = vmatpush1.msra.mxu0 %v863
    %865 = vmatprep.subr.mxu0 0.0
    %v866 = vand.u32 %v100, 4294901760
    %867 = vmatpush1.msra.mxu0 %v866
    %868 = vmatprep.subr.mxu0 0.0
    %v869 = vand.u32 %v101, 4294901760
    %870 = vmatpush1.msra.mxu0 %v869
    %v871 = vand.u32 %v246, 4294901760
    %v872 = vsub.f32 %v246, %v871
    %v873 = vand.u32 %v872, 4294901760
    %874 = vmatprep.mubr.f32.mxu0 %v873
    %v875 = vand.u32 %v245, 4294901760
    %v876 = vsub.f32 %v245, %v875
    %v877 = vand.u32 %v876, 4294901760
    %878 = vmatmul.mubr.f32.gmra.mrb[0].mxu0 %v877
    %v879 = vpop.f32.mrb[0].mxu0
    %v880 = vadd.f32 %v772, %v879
    %v881 = vpop.f32.mrb[0].mxu0
    %882 = vdwg.mxu0
    %883 = vmatprep.subr.mxu0 0.0
    %v884 = vand.u32 %v70, 4294901760
    %v885 = vsub.f32 %v70, %v884
    %v886 = vand.u32 %v885, 4294901760
    %887 = vmatpush1.msra.mxu0 %v886
    %888 = vmatprep.subr.mxu0 0.0
    %v889 = vand.u32 %v71, 4294901760
    %v890 = vsub.f32 %v71, %v889
    %v891 = vand.u32 %v890, 4294901760
    %892 = vmatpush1.msra.mxu0 %v891
    %893 = vmatprep.subr.mxu0 0.0
    %v894 = vand.u32 %v72, 4294901760
    %v895 = vsub.f32 %v72, %v894
    %v896 = vand.u32 %v895, 4294901760
    %897 = vmatpush1.msra.mxu0 %v896
    %898 = vmatprep.subr.mxu0 0.0
    %v899 = vand.u32 %v73, 4294901760
    %v900 = vsub.f32 %v73, %v899
    %v901 = vand.u32 %v900, 4294901760
    %902 = vmatpush1.msra.mxu0 %v901
    %903 = vmatprep.subr.mxu0 0.0
    %v904 = vand.u32 %v74, 4294901760
    %v905 = vsub.f32 %v74, %v904
    %v906 = vand.u32 %v905, 4294901760
    %907 = vmatpush1.msra.mxu0 %v906
    %908 = vmatprep.subr.mxu0 0.0
    %v909 = vand.u32 %v75, 4294901760
    %v910 = vsub.f32 %v75, %v909
    %v911 = vand.u32 %v910, 4294901760
    %912 = vmatpush1.msra.mxu0 %v911
    %913 = vmatprep.subr.mxu0 0.0
    %v914 = vand.u32 %v76, 4294901760
    %v915 = vsub.f32 %v76, %v914
    %v916 = vand.u32 %v915, 4294901760
    %917 = vmatpush1.msra.mxu0 %v916
    %918 = vmatprep.subr.mxu0 0.0
    %v919 = vand.u32 %v77, 4294901760
    %v920 = vsub.f32 %v77, %v919
    %v921 = vand.u32 %v920, 4294901760
    %922 = vmatpush1.msra.mxu0 %v921
    %923 = vmatprep.subr.mxu0 0.0
    %v924 = vand.u32 %v78, 4294901760
    %v925 = vsub.f32 %v78, %v924
    %v926 = vand.u32 %v925, 4294901760
    %927 = vmatpush1.msra.mxu0 %v926
    %928 = vmatprep.subr.mxu0 0.0
    %v929 = vand.u32 %v79, 4294901760
    %v930 = vsub.f32 %v79, %v929
    %v931 = vand.u32 %v930, 4294901760
    %932 = vmatpush1.msra.mxu0 %v931
    %933 = vmatprep.subr.mxu0 0.0
    %v934 = vand.u32 %v80, 4294901760
    %v935 = vsub.f32 %v80, %v934
    %v936 = vand.u32 %v935, 4294901760
    %937 = vmatpush1.msra.mxu0 %v936
    %938 = vmatprep.subr.mxu0 0.0
    %v939 = vand.u32 %v81, 4294901760
    %v940 = vsub.f32 %v81, %v939
    %v941 = vand.u32 %v940, 4294901760
    %942 = vmatpush1.msra.mxu0 %v941
    %943 = vmatprep.subr.mxu0 0.0
    %v944 = vand.u32 %v82, 4294901760
    %v945 = vsub.f32 %v82, %v944
    %v946 = vand.u32 %v945, 4294901760
    %947 = vmatpush1.msra.mxu0 %v946
    %948 = vmatprep.subr.mxu0 0.0
    %v949 = vand.u32 %v83, 4294901760
    %v950 = vsub.f32 %v83, %v949
    %v951 = vand.u32 %v950, 4294901760
    %952 = vmatpush1.msra.mxu0 %v951
    %953 = vmatprep.subr.mxu0 0.0
    %v954 = vand.u32 %v84, 4294901760
    %v955 = vsub.f32 %v84, %v954
    %v956 = vand.u32 %v955, 4294901760
    %957 = vmatpush1.msra.mxu0 %v956
    %958 = vmatprep.subr.mxu0 0.0
    %v959 = vand.u32 %v85, 4294901760
    %v960 = vsub.f32 %v85, %v959
    %v961 = vand.u32 %v960, 4294901760
    %962 = vmatpush1.msra.mxu0 %v961
    %963 = vmatprep.subr.mxu0 0.0
    %v964 = vand.u32 %v86, 4294901760
    %v965 = vsub.f32 %v86, %v964
    %v966 = vand.u32 %v965, 4294901760
    %967 = vmatpush1.msra.mxu0 %v966
    %968 = vmatprep.subr.mxu0 0.0
    %v969 = vand.u32 %v87, 4294901760
    %v970 = vsub.f32 %v87, %v969
    %v971 = vand.u32 %v970, 4294901760
    %972 = vmatpush1.msra.mxu0 %v971
    %973 = vmatprep.subr.mxu0 0.0
    %v974 = vand.u32 %v88, 4294901760
    %v975 = vsub.f32 %v88, %v974
    %v976 = vand.u32 %v975, 4294901760
    %977 = vmatpush1.msra.mxu0 %v976
    %978 = vmatprep.subr.mxu0 0.0
    %v979 = vand.u32 %v89, 4294901760
    %v980 = vsub.f32 %v89, %v979
    %v981 = vand.u32 %v980, 4294901760
    %982 = vmatpush1.msra.mxu0 %v981
    %983 = vmatprep.subr.mxu0 0.0
    %v984 = vand.u32 %v90, 4294901760
    %v985 = vsub.f32 %v90, %v984
    %v986 = vand.u32 %v985, 4294901760
    %987 = vmatpush1.msra.mxu0 %v986
    %988 = vmatprep.subr.mxu0 0.0
    %v989 = vand.u32 %v91, 4294901760
    %v990 = vsub.f32 %v91, %v989
    %v991 = vand.u32 %v990, 4294901760
    %992 = vmatpush1.msra.mxu0 %v991
    %993 = vmatprep.subr.mxu0 0.0
    %v994 = vand.u32 %v92, 4294901760
    %v995 = vsub.f32 %v92, %v994
    %v996 = vand.u32 %v995, 4294901760
    %997 = vmatpush1.msra.mxu0 %v996
    %998 = vmatprep.subr.mxu0 0.0
    %v999 = vand.u32 %v93, 4294901760
    %v1000 = vsub.f32 %v93, %v999
    %v1001 = vand.u32 %v1000, 4294901760
    %1002 = vmatpush1.msra.mxu0 %v1001
    %1003 = vmatprep.subr.mxu0 0.0
    %v1004 = vand.u32 %v94, 4294901760
    %v1005 = vsub.f32 %v94, %v1004
    %v1006 = vand.u32 %v1005, 4294901760
    %1007 = vmatpush1.msra.mxu0 %v1006
    %1008 = vmatprep.subr.mxu0 0.0
    %v1009 = vand.u32 %v95, 4294901760
    %v1010 = vsub.f32 %v95, %v1009
    %v1011 = vand.u32 %v1010, 4294901760
    %1012 = vmatpush1.msra.mxu0 %v1011
    %1013 = vmatprep.subr.mxu0 0.0
    %v1014 = vand.u32 %v96, 4294901760
    %v1015 = vsub.f32 %v96, %v1014
    %v1016 = vand.u32 %v1015, 4294901760
    %1017 = vmatpush1.msra.mxu0 %v1016
    %1018 = vmatprep.subr.mxu0 0.0
    %v1019 = vand.u32 %v97, 4294901760
    %v1020 = vsub.f32 %v97, %v1019
    %v1021 = vand.u32 %v1020, 4294901760
    %1022 = vmatpush1.msra.mxu0 %v1021
    %1023 = vmatprep.subr.mxu0 0.0
    %v1024 = vand.u32 %v98, 4294901760
    %v1025 = vsub.f32 %v98, %v1024
    %v1026 = vand.u32 %v1025, 4294901760
    %1027 = vmatpush1.msra.mxu0 %v1026
    %1028 = vmatprep.subr.mxu0 0.0
    %v1029 = vand.u32 %v99, 4294901760
    %v1030 = vsub.f32 %v99, %v1029
    %v1031 = vand.u32 %v1030, 4294901760
    %1032 = vmatpush1.msra.mxu0 %v1031
    %1033 = vmatprep.subr.mxu0 0.0
    %v1034 = vand.u32 %v100, 4294901760
    %v1035 = vsub.f32 %v100, %v1034
    %v1036 = vand.u32 %v1035, 4294901760
    %1037 = vmatpush1.msra.mxu0 %v1036
    %1038 = vmatprep.subr.mxu0 0.0
    %v1039 = vand.u32 %v101, 4294901760
    %v1040 = vsub.f32 %v101, %v1039
    %v1041 = vand.u32 %v1040, 4294901760
    %1042 = vmatpush1.msra.mxu0 %v1041
    %v1043 = vand.u32 %v246, 4294901760
    %1044 = vmatprep.mubr.f32.mxu0 %v1043
    %v1045 = vand.u32 %v245, 4294901760
    %1046 = vmatmul.mubr.f32.gmra.mrb[0].mxu0 %v1045
    %v1047 = vpop.f32.mrb[0].mxu0
    %v1048 = vadd.f32 %v880, %v1047
    %v1049 = vpop.f32.mrb[0].mxu0
    %1050 = vdwg.mxu0
    %1051 = vmatprep.subr.mxu0 0.0
    %v1052 = vand.u32 %v70, 4294901760
    %1053 = vmatpush1.msra.mxu0 %v1052
    %1054 = vmatprep.subr.mxu0 0.0
    %v1055 = vand.u32 %v71, 4294901760
    %1056 = vmatpush1.msra.mxu0 %v1055
    %1057 = vmatprep.subr.mxu0 0.0
    %v1058 = vand.u32 %v72, 4294901760
    %1059 = vmatpush1.msra.mxu0 %v1058
    %1060 = vmatprep.subr.mxu0 0.0
    %v1061 = vand.u32 %v73, 4294901760
    %1062 = vmatpush1.msra.mxu0 %v1061
    %1063 = vmatprep.subr.mxu0 0.0
    %v1064 = vand.u32 %v74, 4294901760
    %1065 = vmatpush1.msra.mxu0 %v1064
    %1066 = vmatprep.subr.mxu0 0.0
    %v1067 = vand.u32 %v75, 4294901760
    %1068 = vmatpush1.msra.mxu0 %v1067
    %1069 = vmatprep.subr.mxu0 0.0
    %v1070 = vand.u32 %v76, 4294901760
    %1071 = vmatpush1.msra.mxu0 %v1070
    %1072 = vmatprep.subr.mxu0 0.0
    %v1073 = vand.u32 %v77, 4294901760
    %1074 = vmatpush1.msra.mxu0 %v1073
    %1075 = vmatprep.subr.mxu0 0.0
    %v1076 = vand.u32 %v78, 4294901760
    %1077 = vmatpush1.msra.mxu0 %v1076
    %1078 = vmatprep.subr.mxu0 0.0
    %v1079 = vand.u32 %v79, 4294901760
    %1080 = vmatpush1.msra.mxu0 %v1079
    %1081 = vmatprep.subr.mxu0 0.0
    %v1082 = vand.u32 %v80, 4294901760
    %1083 = vmatpush1.msra.mxu0 %v1082
    %1084 = vmatprep.subr.mxu0 0.0
    %v1085 = vand.u32 %v81, 4294901760
    %1086 = vmatpush1.msra.mxu0 %v1085
    %1087 = vmatprep.subr.mxu0 0.0
    %v1088 = vand.u32 %v82, 4294901760
    %1089 = vmatpush1.msra.mxu0 %v1088
    %1090 = vmatprep.subr.mxu0 0.0
    %v1091 = vand.u32 %v83, 4294901760
    %1092 = vmatpush1.msra.mxu0 %v1091
    %1093 = vmatprep.subr.mxu0 0.0
    %v1094 = vand.u32 %v84, 4294901760
    %1095 = vmatpush1.msra.mxu0 %v1094
    %1096 = vmatprep.subr.mxu0 0.0
    %v1097 = vand.u32 %v85, 4294901760
    %1098 = vmatpush1.msra.mxu0 %v1097
    %1099 = vmatprep.subr.mxu0 0.0
    %v1100 = vand.u32 %v86, 4294901760
    %1101 = vmatpush1.msra.mxu0 %v1100
    %1102 = vmatprep.subr.mxu0 0.0
    %v1103 = vand.u32 %v87, 4294901760
    %1104 = vmatpush1.msra.mxu0 %v1103
    %1105 = vmatprep.subr.mxu0 0.0
    %v1106 = vand.u32 %v88, 4294901760
    %1107 = vmatpush1.msra.mxu0 %v1106
    %1108 = vmatprep.subr.mxu0 0.0
    %v1109 = vand.u32 %v89, 4294901760
    %1110 = vmatpush1.msra.mxu0 %v1109
    %1111 = vmatprep.subr.mxu0 0.0
    %v1112 = vand.u32 %v90, 4294901760
    %1113 = vmatpush1.msra.mxu0 %v1112
    %1114 = vmatprep.subr.mxu0 0.0
    %v1115 = vand.u32 %v91, 4294901760
    %1116 = vmatpush1.msra.mxu0 %v1115
    %1117 = vmatprep.subr.mxu0 0.0
    %v1118 = vand.u32 %v92, 4294901760
    %1119 = vmatpush1.msra.mxu0 %v1118
    %1120 = vmatprep.subr.mxu0 0.0
    %v1121 = vand.u32 %v93, 4294901760
    %1122 = vmatpush1.msra.mxu0 %v1121
    %1123 = vmatprep.subr.mxu0 0.0
    %v1124 = vand.u32 %v94, 4294901760
    %1125 = vmatpush1.msra.mxu0 %v1124
    %1126 = vmatprep.subr.mxu0 0.0
    %v1127 = vand.u32 %v95, 4294901760
    %1128 = vmatpush1.msra.mxu0 %v1127
    %1129 = vmatprep.subr.mxu0 0.0
    %v1130 = vand.u32 %v96, 4294901760
    %1131 = vmatpush1.msra.mxu0 %v1130
    %1132 = vmatprep.subr.mxu0 0.0
    %v1133 = vand.u32 %v97, 4294901760
    %1134 = vmatpush1.msra.mxu0 %v1133
    %1135 = vmatprep.subr.mxu0 0.0
    %v1136 = vand.u32 %v98, 4294901760
    %1137 = vmatpush1.msra.mxu0 %v1136
    %1138 = vmatprep.subr.mxu0 0.0
    %v1139 = vand.u32 %v99, 4294901760
    %1140 = vmatpush1.msra.mxu0 %v1139
    %1141 = vmatprep.subr.mxu0 0.0
    %v1142 = vand.u32 %v100, 4294901760
    %1143 = vmatpush1.msra.mxu0 %v1142
    %1144 = vmatprep.subr.mxu0 0.0
    %v1145 = vand.u32 %v101, 4294901760
    %1146 = vmatpush1.msra.mxu0 %v1145
    %v1147 = vand.u32 %v246, 4294901760
    %1148 = vmatprep.mubr.f32.mxu0 %v1147
    %v1149 = vand.u32 %v245, 4294901760
    %1150 = vmatmul.mubr.f32.gmra.mrb[0].mxu0 %v1149
    %v1151 = vpop.f32.mrb[0].mxu0
    %v1152 = vadd.f32 %v1048, %v1151
    %v1153 = vpop.f32.mrb[0].mxu0
    %1154 = vdwg.mxu0
    %1155 = vmatprep.subr.mxu0 0.0
    %v1156 = vand.u32 %v102, 4294901760
    %1157 = vmatpush1.msra.mxu0 %v1156
    %1158 = vmatprep.subr.mxu0 0.0
    %v1159 = vand.u32 %v103, 4294901760
    %1160 = vmatpush1.msra.mxu0 %v1159
    %1161 = vmatprep.subr.mxu0 0.0
    %v1162 = vand.u32 %v104, 4294901760
    %1163 = vmatpush1.msra.mxu0 %v1162
    %1164 = vmatprep.subr.mxu0 0.0
    %v1165 = vand.u32 %v105, 4294901760
    %1166 = vmatpush1.msra.mxu0 %v1165
    %1167 = vmatprep.subr.mxu0 0.0
    %v1168 = vand.u32 %v106, 4294901760
    %1169 = vmatpush1.msra.mxu0 %v1168
    %1170 = vmatprep.subr.mxu0 0.0
    %v1171 = vand.u32 %v107, 4294901760
    %1172 = vmatpush1.msra.mxu0 %v1171
    %1173 = vmatprep.subr.mxu0 0.0
    %v1174 = vand.u32 %v108, 4294901760
    %1175 = vmatpush1.msra.mxu0 %v1174
    %1176 = vmatprep.subr.mxu0 0.0
    %v1177 = vand.u32 %v109, 4294901760
    %1178 = vmatpush1.msra.mxu0 %v1177
    %1179 = vmatprep.subr.mxu0 0.0
    %v1180 = vand.u32 %v110, 4294901760
    %1181 = vmatpush1.msra.mxu0 %v1180
    %1182 = vmatprep.subr.mxu0 0.0
    %v1183 = vand.u32 %v111, 4294901760
    %1184 = vmatpush1.msra.mxu0 %v1183
    %1185 = vmatprep.subr.mxu0 0.0
    %v1186 = vand.u32 %v112, 4294901760
    %1187 = vmatpush1.msra.mxu0 %v1186
    %1188 = vmatprep.subr.mxu0 0.0
    %v1189 = vand.u32 %v113, 4294901760
    %1190 = vmatpush1.msra.mxu0 %v1189
    %1191 = vmatprep.subr.mxu0 0.0
    %v1192 = vand.u32 %v114, 4294901760
    %1193 = vmatpush1.msra.mxu0 %v1192
    %1194 = vmatprep.subr.mxu0 0.0
    %v1195 = vand.u32 %v115, 4294901760
    %1196 = vmatpush1.msra.mxu0 %v1195
    %1197 = vmatprep.subr.mxu0 0.0
    %v1198 = vand.u32 %v116, 4294901760
    %1199 = vmatpush1.msra.mxu0 %v1198
    %1200 = vmatprep.subr.mxu0 0.0
    %v1201 = vand.u32 %v117, 4294901760
    %1202 = vmatpush1.msra.mxu0 %v1201
    %1203 = vmatprep.subr.mxu0 0.0
    %v1204 = vand.u32 %v118, 4294901760
    %1205 = vmatpush1.msra.mxu0 %v1204
    %1206 = vmatprep.subr.mxu0 0.0
    %v1207 = vand.u32 %v119, 4294901760
    %1208 = vmatpush1.msra.mxu0 %v1207
    %1209 = vmatprep.subr.mxu0 0.0
    %v1210 = vand.u32 %v120, 4294901760
    %1211 = vmatpush1.msra.mxu0 %v1210
    %1212 = vmatprep.subr.mxu0 0.0
    %v1213 = vand.u32 %v121, 4294901760
    %1214 = vmatpush1.msra.mxu0 %v1213
    %1215 = vmatprep.subr.mxu0 0.0
    %v1216 = vand.u32 %v122, 4294901760
    %1217 = vmatpush1.msra.mxu0 %v1216
    %1218 = vmatprep.subr.mxu0 0.0
    %v1219 = vand.u32 %v123, 4294901760
    %1220 = vmatpush1.msra.mxu0 %v1219
    %1221 = vmatprep.subr.mxu0 0.0
    %v1222 = vand.u32 %v124, 4294901760
    %1223 = vmatpush1.msra.mxu0 %v1222
    %1224 = vmatprep.subr.mxu0 0.0
    %v1225 = vand.u32 %v125, 4294901760
    %1226 = vmatpush1.msra.mxu0 %v1225
    %1227 = vmatprep.subr.mxu0 0.0
    %v1228 = vand.u32 %v126, 4294901760
    %1229 = vmatpush1.msra.mxu0 %v1228
    %1230 = vmatprep.subr.mxu0 0.0
    %v1231 = vand.u32 %v127, 4294901760
    %1232 = vmatpush1.msra.mxu0 %v1231
    %1233 = vmatprep.subr.mxu0 0.0
    %v1234 = vand.u32 %v128, 4294901760
    %1235 = vmatpush1.msra.mxu0 %v1234
    %1236 = vmatprep.subr.mxu0 0.0
    %v1237 = vand.u32 %v129, 4294901760
    %1238 = vmatpush1.msra.mxu0 %v1237
    %1239 = vmatprep.subr.mxu0 0.0
    %v1240 = vand.u32 %v130, 4294901760
    %1241 = vmatpush1.msra.mxu0 %v1240
    %1242 = vmatprep.subr.mxu0 0.0
    %v1243 = vand.u32 %v131, 4294901760
    %1244 = vmatpush1.msra.mxu0 %v1243
    %1245 = vmatprep.subr.mxu0 0.0
    %v1246 = vand.u32 %v132, 4294901760
    %1247 = vmatpush1.msra.mxu0 %v1246
    %1248 = vmatprep.subr.mxu0 0.0
    %v1249 = vand.u32 %v133, 4294901760
    %1250 = vmatpush1.msra.mxu0 %v1249
    %v1251 = vand.u32 %v248, 4294901760
    %v1252 = vsub.f32 %v248, %v1251
    %v1253 = vand.u32 %v1252, 4294901760
    %v1254 = vsub.f32 %v1252, %v1253
    %v1255 = vand.u32 %v1254, 4294901760
    %1256 = vmatprep.mubr.f32.mxu0 %v1255
    %v1257 = vand.u32 %v247, 4294901760
    %v1258 = vsub.f32 %v247, %v1257
    %v1259 = vand.u32 %v1258, 4294901760
    %v1260 = vsub.f32 %v1258, %v1259
    %v1261 = vand.u32 %v1260, 4294901760
    %1262 = vmatmul.mubr.f32.gmra.mrb[0].mxu0 %v1261
    %v1263 = vpop.f32.mrb[0].mxu0
    %v1264 = vadd.f32 %v1152, %v1263
    %v1265 = vpop.f32.mrb[0].mxu0
    %1266 = vdwg.mxu0
    %1267 = vmatprep.subr.mxu0 0.0
    %v1268 = vand.u32 %v102, 4294901760
    %v1269 = vsub.f32 %v102, %v1268
    %v1270 = vand.u32 %v1269, 4294901760
    %v1271 = vsub.f32 %v1269, %v1270
    %v1272 = vand.u32 %v1271, 4294901760
    %1273 = vmatpush1.msra.mxu0 %v1272
    %1274 = vmatprep.subr.mxu0 0.0
    %v1275 = vand.u32 %v103, 4294901760
    %v1276 = vsub.f32 %v103, %v1275
    %v1277 = vand.u32 %v1276, 4294901760
    %v1278 = vsub.f32 %v1276, %v1277
    %v1279 = vand.u32 %v1278, 4294901760
    %1280 = vmatpush1.msra.mxu0 %v1279
    %1281 = vmatprep.subr.mxu0 0.0
    %v1282 = vand.u32 %v104, 4294901760
    %v1283 = vsub.f32 %v104, %v1282
    %v1284 = vand.u32 %v1283, 4294901760
    %v1285 = vsub.f32 %v1283, %v1284
    %v1286 = vand.u32 %v1285, 4294901760
    %1287 = vmatpush1.msra.mxu0 %v1286
    %1288 = vmatprep.subr.mxu0 0.0
    %v1289 = vand.u32 %v105, 4294901760
    %v1290 = vsub.f32 %v105, %v1289
    %v1291 = vand.u32 %v1290, 4294901760
    %v1292 = vsub.f32 %v1290, %v1291
    %v1293 = vand.u32 %v1292, 4294901760
    %1294 = vmatpush1.msra.mxu0 %v1293
    %1295 = vmatprep.subr.mxu0 0.0
    %v1296 = vand.u32 %v106, 4294901760
    %v1297 = vsub.f32 %v106, %v1296
    %v1298 = vand.u32 %v1297, 4294901760
    %v1299 = vsub.f32 %v1297, %v1298
    %v1300 = vand.u32 %v1299, 4294901760
    %1301 = vmatpush1.msra.mxu0 %v1300
    %1302 = vmatprep.subr.mxu0 0.0
    %v1303 = vand.u32 %v107, 4294901760
    %v1304 = vsub.f32 %v107, %v1303
    %v1305 = vand.u32 %v1304, 4294901760
    %v1306 = vsub.f32 %v1304, %v1305
    %v1307 = vand.u32 %v1306, 4294901760
    %1308 = vmatpush1.msra.mxu0 %v1307
    %1309 = vmatprep.subr.mxu0 0.0
    %v1310 = vand.u32 %v108, 4294901760
    %v1311 = vsub.f32 %v108, %v1310
    %v1312 = vand.u32 %v1311, 4294901760
    %v1313 = vsub.f32 %v1311, %v1312
    %v1314 = vand.u32 %v1313, 4294901760
    %1315 = vmatpush1.msra.mxu0 %v1314
    %1316 = vmatprep.subr.mxu0 0.0
    %v1317 = vand.u32 %v109, 4294901760
    %v1318 = vsub.f32 %v109, %v1317
    %v1319 = vand.u32 %v1318, 4294901760
    %v1320 = vsub.f32 %v1318, %v1319
    %v1321 = vand.u32 %v1320, 4294901760
    %1322 = vmatpush1.msra.mxu0 %v1321
    %1323 = vmatprep.subr.mxu0 0.0
    %v1324 = vand.u32 %v110, 4294901760
    %v1325 = vsub.f32 %v110, %v1324
    %v1326 = vand.u32 %v1325, 4294901760
    %v1327 = vsub.f32 %v1325, %v1326
    %v1328 = vand.u32 %v1327, 4294901760
    %1329 = vmatpush1.msra.mxu0 %v1328
    %1330 = vmatprep.subr.mxu0 0.0
    %v1331 = vand.u32 %v111, 4294901760
    %v1332 = vsub.f32 %v111, %v1331
    %v1333 = vand.u32 %v1332, 4294901760
    %v1334 = vsub.f32 %v1332, %v1333
    %v1335 = vand.u32 %v1334, 4294901760
    %1336 = vmatpush1.msra.mxu0 %v1335
    %1337 = vmatprep.subr.mxu0 0.0
    %v1338 = vand.u32 %v112, 4294901760
    %v1339 = vsub.f32 %v112, %v1338
    %v1340 = vand.u32 %v1339, 4294901760
    %v1341 = vsub.f32 %v1339, %v1340
    %v1342 = vand.u32 %v1341, 4294901760
    %1343 = vmatpush1.msra.mxu0 %v1342
    %1344 = vmatprep.subr.mxu0 0.0
    %v1345 = vand.u32 %v113, 4294901760
    %v1346 = vsub.f32 %v113, %v1345
    %v1347 = vand.u32 %v1346, 4294901760
    %v1348 = vsub.f32 %v1346, %v1347
    %v1349 = vand.u32 %v1348, 4294901760
    %1350 = vmatpush1.msra.mxu0 %v1349
    %1351 = vmatprep.subr.mxu0 0.0
    %v1352 = vand.u32 %v114, 4294901760
    %v1353 = vsub.f32 %v114, %v1352
    %v1354 = vand.u32 %v1353, 4294901760
    %v1355 = vsub.f32 %v1353, %v1354
    %v1356 = vand.u32 %v1355, 4294901760
    %1357 = vmatpush1.msra.mxu0 %v1356
    %1358 = vmatprep.subr.mxu0 0.0
    %v1359 = vand.u32 %v115, 4294901760
    %v1360 = vsub.f32 %v115, %v1359
    %v1361 = vand.u32 %v1360, 4294901760
    %v1362 = vsub.f32 %v1360, %v1361
    %v1363 = vand.u32 %v1362, 4294901760
    %1364 = vmatpush1.msra.mxu0 %v1363
    %1365 = vmatprep.subr.mxu0 0.0
    %v1366 = vand.u32 %v116, 4294901760
    %v1367 = vsub.f32 %v116, %v1366
    %v1368 = vand.u32 %v1367, 4294901760
    %v1369 = vsub.f32 %v1367, %v1368
    %v1370 = vand.u32 %v1369, 4294901760
    %1371 = vmatpush1.msra.mxu0 %v1370
    %1372 = vmatprep.subr.mxu0 0.0
    %v1373 = vand.u32 %v117, 4294901760
    %v1374 = vsub.f32 %v117, %v1373
    %v1375 = vand.u32 %v1374, 4294901760
    %v1376 = vsub.f32 %v1374, %v1375
    %v1377 = vand.u32 %v1376, 4294901760
    %1378 = vmatpush1.msra.mxu0 %v1377
    %1379 = vmatprep.subr.mxu0 0.0
    %v1380 = vand.u32 %v118, 4294901760
    %v1381 = vsub.f32 %v118, %v1380
    %v1382 = vand.u32 %v1381, 4294901760
    %v1383 = vsub.f32 %v1381, %v1382
    %v1384 = vand.u32 %v1383, 4294901760
    %1385 = vmatpush1.msra.mxu0 %v1384
    %1386 = vmatprep.subr.mxu0 0.0
    %v1387 = vand.u32 %v119, 4294901760
    %v1388 = vsub.f32 %v119, %v1387
    %v1389 = vand.u32 %v1388, 4294901760
    %v1390 = vsub.f32 %v1388, %v1389
    %v1391 = vand.u32 %v1390, 4294901760
    %1392 = vmatpush1.msra.mxu0 %v1391
    %1393 = vmatprep.subr.mxu0 0.0
    %v1394 = vand.u32 %v120, 4294901760
    %v1395 = vsub.f32 %v120, %v1394
    %v1396 = vand.u32 %v1395, 4294901760
    %v1397 = vsub.f32 %v1395, %v1396
    %v1398 = vand.u32 %v1397, 4294901760
    %1399 = vmatpush1.msra.mxu0 %v1398
    %1400 = vmatprep.subr.mxu0 0.0
    %v1401 = vand.u32 %v121, 4294901760
    %v1402 = vsub.f32 %v121, %v1401
    %v1403 = vand.u32 %v1402, 4294901760
    %v1404 = vsub.f32 %v1402, %v1403
    %v1405 = vand.u32 %v1404, 4294901760
    %1406 = vmatpush1.msra.mxu0 %v1405
    %1407 = vmatprep.subr.mxu0 0.0
    %v1408 = vand.u32 %v122, 4294901760
    %v1409 = vsub.f32 %v122, %v1408
    %v1410 = vand.u32 %v1409, 4294901760
    %v1411 = vsub.f32 %v1409, %v1410
    %v1412 = vand.u32 %v1411, 4294901760
    %1413 = vmatpush1.msra.mxu0 %v1412
    %1414 = vmatprep.subr.mxu0 0.0
    %v1415 = vand.u32 %v123, 4294901760
    %v1416 = vsub.f32 %v123, %v1415
    %v1417 = vand.u32 %v1416, 4294901760
    %v1418 = vsub.f32 %v1416, %v1417
    %v1419 = vand.u32 %v1418, 4294901760
    %1420 = vmatpush1.msra.mxu0 %v1419
    %1421 = vmatprep.subr.mxu0 0.0
    %v1422 = vand.u32 %v124, 4294901760
    %v1423 = vsub.f32 %v124, %v1422
    %v1424 = vand.u32 %v1423, 4294901760
    %v1425 = vsub.f32 %v1423, %v1424
    %v1426 = vand.u32 %v1425, 4294901760
    %1427 = vmatpush1.msra.mxu0 %v1426
    %1428 = vmatprep.subr.mxu0 0.0
    %v1429 = vand.u32 %v125, 4294901760
    %v1430 = vsub.f32 %v125, %v1429
    %v1431 = vand.u32 %v1430, 4294901760
    %v1432 = vsub.f32 %v1430, %v1431
    %v1433 = vand.u32 %v1432, 4294901760
    %1434 = vmatpush1.msra.mxu0 %v1433
    %1435 = vmatprep.subr.mxu0 0.0
    %v1436 = vand.u32 %v126, 4294901760
    %v1437 = vsub.f32 %v126, %v1436
    %v1438 = vand.u32 %v1437, 4294901760
    %v1439 = vsub.f32 %v1437, %v1438
    %v1440 = vand.u32 %v1439, 4294901760
    %1441 = vmatpush1.msra.mxu0 %v1440
    %1442 = vmatprep.subr.mxu0 0.0
    %v1443 = vand.u32 %v127, 4294901760
    %v1444 = vsub.f32 %v127, %v1443
    %v1445 = vand.u32 %v1444, 4294901760
    %v1446 = vsub.f32 %v1444, %v1445
    %v1447 = vand.u32 %v1446, 4294901760
    %1448 = vmatpush1.msra.mxu0 %v1447
    %1449 = vmatprep.subr.mxu0 0.0
    %v1450 = vand.u32 %v128, 4294901760
    %v1451 = vsub.f32 %v128, %v1450
    %v1452 = vand.u32 %v1451, 4294901760
    %v1453 = vsub.f32 %v1451, %v1452
    %v1454 = vand.u32 %v1453, 4294901760
    %1455 = vmatpush1.msra.mxu0 %v1454
    %1456 = vmatprep.subr.mxu0 0.0
    %v1457 = vand.u32 %v129, 4294901760
    %v1458 = vsub.f32 %v129, %v1457
    %v1459 = vand.u32 %v1458, 4294901760
    %v1460 = vsub.f32 %v1458, %v1459
    %v1461 = vand.u32 %v1460, 4294901760
    %1462 = vmatpush1.msra.mxu0 %v1461
    %1463 = vmatprep.subr.mxu0 0.0
    %v1464 = vand.u32 %v130, 4294901760
    %v1465 = vsub.f32 %v130, %v1464
    %v1466 = vand.u32 %v1465, 4294901760
    %v1467 = vsub.f32 %v1465, %v1466
    %v1468 = vand.u32 %v1467, 4294901760
    %1469 = vmatpush1.msra.mxu0 %v1468
    %1470 = vmatprep.subr.mxu0 0.0
    %v1471 = vand.u32 %v131, 4294901760
    %v1472 = vsub.f32 %v131, %v1471
    %v1473 = vand.u32 %v1472, 4294901760
    %v1474 = vsub.f32 %v1472, %v1473
    %v1475 = vand.u32 %v1474, 4294901760
    %1476 = vmatpush1.msra.mxu0 %v1475
    %1477 = vmatprep.subr.mxu0 0.0
    %v1478 = vand.u32 %v132, 4294901760
    %v1479 = vsub.f32 %v132, %v1478
    %v1480 = vand.u32 %v1479, 4294901760
    %v1481 = vsub.f32 %v1479, %v1480
    %v1482 = vand.u32 %v1481, 4294901760
    %1483 = vmatpush1.msra.mxu0 %v1482
    %1484 = vmatprep.subr.mxu0 0.0
    %v1485 = vand.u32 %v133, 4294901760
    %v1486 = vsub.f32 %v133, %v1485
    %v1487 = vand.u32 %v1486, 4294901760
    %v1488 = vsub.f32 %v1486, %v1487
    %v1489 = vand.u32 %v1488, 4294901760
    %1490 = vmatpush1.msra.mxu0 %v1489
    %v1491 = vand.u32 %v248, 4294901760
    %1492 = vmatprep.mubr.f32.mxu0 %v1491
    %v1493 = vand.u32 %v247, 4294901760
    %1494 = vmatmul.mubr.f32.gmra.mrb[0].mxu0 %v1493
    %v1495 = vpop.f32.mrb[0].mxu0
    %v1496 = vadd.f32 %v1264, %v1495
    %v1497 = vpop.f32.mrb[0].mxu0
    %1498 = vdwg.mxu0
    %1499 = vmatprep.subr.mxu0 0.0
    %v1500 = vand.u32 %v102, 4294901760
    %v1501 = vsub.f32 %v102, %v1500
    %1502 = vmatpush1.msra.mxu0 %v1501
    %1503 = vmatprep.subr.mxu0 0.0
    %v1504 = vand.u32 %v103, 4294901760
    %v1505 = vsub.f32 %v103, %v1504
    %1506 = vmatpush1.msra.mxu0 %v1505
    %1507 = vmatprep.subr.mxu0 0.0
    %v1508 = vand.u32 %v104, 4294901760
    %v1509 = vsub.f32 %v104, %v1508
    %1510 = vmatpush1.msra.mxu0 %v1509
    %1511 = vmatprep.subr.mxu0 0.0
    %v1512 = vand.u32 %v105, 4294901760
    %v1513 = vsub.f32 %v105, %v1512
    %1514 = vmatpush1.msra.mxu0 %v1513
    %1515 = vmatprep.subr.mxu0 0.0
    %v1516 = vand.u32 %v106, 4294901760
    %v1517 = vsub.f32 %v106, %v1516
    %1518 = vmatpush1.msra.mxu0 %v1517
    %1519 = vmatprep.subr.mxu0 0.0
    %v1520 = vand.u32 %v107, 4294901760
    %v1521 = vsub.f32 %v107, %v1520
    %1522 = vmatpush1.msra.mxu0 %v1521
    %1523 = vmatprep.subr.mxu0 0.0
    %v1524 = vand.u32 %v108, 4294901760
    %v1525 = vsub.f32 %v108, %v1524
    %1526 = vmatpush1.msra.mxu0 %v1525
    %1527 = vmatprep.subr.mxu0 0.0
    %v1528 = vand.u32 %v109, 4294901760
    %v1529 = vsub.f32 %v109, %v1528
    %1530 = vmatpush1.msra.mxu0 %v1529
    %1531 = vmatprep.subr.mxu0 0.0
    %v1532 = vand.u32 %v110, 4294901760
    %v1533 = vsub.f32 %v110, %v1532
    %1534 = vmatpush1.msra.mxu0 %v1533
    %1535 = vmatprep.subr.mxu0 0.0
    %v1536 = vand.u32 %v111, 4294901760
    %v1537 = vsub.f32 %v111, %v1536
    %1538 = vmatpush1.msra.mxu0 %v1537
    %1539 = vmatprep.subr.mxu0 0.0
    %v1540 = vand.u32 %v112, 4294901760
    %v1541 = vsub.f32 %v112, %v1540
    %1542 = vmatpush1.msra.mxu0 %v1541
    %1543 = vmatprep.subr.mxu0 0.0
    %v1544 = vand.u32 %v113, 4294901760
    %v1545 = vsub.f32 %v113, %v1544
    %1546 = vmatpush1.msra.mxu0 %v1545
    %1547 = vmatprep.subr.mxu0 0.0
    %v1548 = vand.u32 %v114, 4294901760
    %v1549 = vsub.f32 %v114, %v1548
    %1550 = vmatpush1.msra.mxu0 %v1549
    %1551 = vmatprep.subr.mxu0 0.0
    %v1552 = vand.u32 %v115, 4294901760
    %v1553 = vsub.f32 %v115, %v1552
    %1554 = vmatpush1.msra.mxu0 %v1553
    %1555 = vmatprep.subr.mxu0 0.0
    %v1556 = vand.u32 %v116, 4294901760
    %v1557 = vsub.f32 %v116, %v1556
    %1558 = vmatpush1.msra.mxu0 %v1557
    %1559 = vmatprep.subr.mxu0 0.0
    %v1560 = vand.u32 %v117, 4294901760
    %v1561 = vsub.f32 %v117, %v1560
    %1562 = vmatpush1.msra.mxu0 %v1561
    %1563 = vmatprep.subr.mxu0 0.0
    %v1564 = vand.u32 %v118, 4294901760
    %v1565 = vsub.f32 %v118, %v1564
    %1566 = vmatpush1.msra.mxu0 %v1565
    %1567 = vmatprep.subr.mxu0 0.0
    %v1568 = vand.u32 %v119, 4294901760
    %v1569 = vsub.f32 %v119, %v1568
    %1570 = vmatpush1.msra.mxu0 %v1569
    %1571 = vmatprep.subr.mxu0 0.0
    %v1572 = vand.u32 %v120, 4294901760
    %v1573 = vsub.f32 %v120, %v1572
    %1574 = vmatpush1.msra.mxu0 %v1573
    %1575 = vmatprep.subr.mxu0 0.0
    %v1576 = vand.u32 %v121, 4294901760
    %v1577 = vsub.f32 %v121, %v1576
    %1578 = vmatpush1.msra.mxu0 %v1577
    %1579 = vmatprep.subr.mxu0 0.0
    %v1580 = vand.u32 %v122, 4294901760
    %v1581 = vsub.f32 %v122, %v1580
    %1582 = vmatpush1.msra.mxu0 %v1581
    %1583 = vmatprep.subr.mxu0 0.0
    %v1584 = vand.u32 %v123, 4294901760
    %v1585 = vsub.f32 %v123, %v1584
    %1586 = vmatpush1.msra.mxu0 %v1585
    %1587 = vmatprep.subr.mxu0 0.0
    %v1588 = vand.u32 %v124, 4294901760
    %v1589 = vsub.f32 %v124, %v1588
    %1590 = vmatpush1.msra.mxu0 %v1589
    %1591 = vmatprep.subr.mxu0 0.0
    %v1592 = vand.u32 %v125, 4294901760
    %v1593 = vsub.f32 %v125, %v1592
    %1594 = vmatpush1.msra.mxu0 %v1593
    %1595 = vmatprep.subr.mxu0 0.0
    %v1596 = vand.u32 %v126, 4294901760
    %v1597 = vsub.f32 %v126, %v1596
    %1598 = vmatpush1.msra.mxu0 %v1597
    %1599 = vmatprep.subr.mxu0 0.0
    %v1600 = vand.u32 %v127, 4294901760
    %v1601 = vsub.f32 %v127, %v1600
    %1602 = vmatpush1.msra.mxu0 %v1601
    %1603 = vmatprep.subr.mxu0 0.0
    %v1604 = vand.u32 %v128, 4294901760
    %v1605 = vsub.f32 %v128, %v1604
    %1606 = vmatpush1.msra.mxu0 %v1605
    %1607 = vmatprep.subr.mxu0 0.0
    %v1608 = vand.u32 %v129, 4294901760
    %v1609 = vsub.f32 %v129, %v1608
    %1610 = vmatpush1.msra.mxu0 %v1609
    %1611 = vmatprep.subr.mxu0 0.0
    %v1612 = vand.u32 %v130, 4294901760
    %v1613 = vsub.f32 %v130, %v1612
    %1614 = vmatpush1.msra.mxu0 %v1613
    %1615 = vmatprep.subr.mxu0 0.0
    %v1616 = vand.u32 %v131, 4294901760
    %v1617 = vsub.f32 %v131, %v1616
    %1618 = vmatpush1.msra.mxu0 %v1617
    %1619 = vmatprep.subr.mxu0 0.0
    %v1620 = vand.u32 %v132, 4294901760
    %v1621 = vsub.f32 %v132, %v1620
    %1622 = vmatpush1.msra.mxu0 %v1621
    %1623 = vmatprep.subr.mxu0 0.0
    %v1624 = vand.u32 %v133, 4294901760
    %v1625 = vsub.f32 %v133, %v1624
    %1626 = vmatpush1.msra.mxu0 %v1625
    %v1627 = vand.u32 %v248, 4294901760
    %v1628 = vsub.f32 %v248, %v1627
    %1629 = vmatprep.mubr.f32.mxu0 %v1628
    %v1630 = vand.u32 %v247, 4294901760
    %v1631 = vsub.f32 %v247, %v1630
    %1632 = vmatmul.mubr.f32.gmra.mrb[0].mxu0 %v1631
    %v1633 = vpop.f32.mrb[0].mxu0
    %v1634 = vadd.f32 %v1496, %v1633
    %v1635 = vpop.f32.mrb[0].mxu0
    %1636 = vdwg.mxu0
    %1637 = vmatprep.subr.mxu0 0.0
    %v1638 = vand.u32 %v102, 4294901760
    %1639 = vmatpush1.msra.mxu0 %v1638
    %1640 = vmatprep.subr.mxu0 0.0
    %v1641 = vand.u32 %v103, 4294901760
    %1642 = vmatpush1.msra.mxu0 %v1641
    %1643 = vmatprep.subr.mxu0 0.0
    %v1644 = vand.u32 %v104, 4294901760
    %1645 = vmatpush1.msra.mxu0 %v1644
    %1646 = vmatprep.subr.mxu0 0.0
    %v1647 = vand.u32 %v105, 4294901760
    %1648 = vmatpush1.msra.mxu0 %v1647
    %1649 = vmatprep.subr.mxu0 0.0
    %v1650 = vand.u32 %v106, 4294901760
    %1651 = vmatpush1.msra.mxu0 %v1650
    %1652 = vmatprep.subr.mxu0 0.0
    %v1653 = vand.u32 %v107, 4294901760
    %1654 = vmatpush1.msra.mxu0 %v1653
    %1655 = vmatprep.subr.mxu0 0.0
    %v1656 = vand.u32 %v108, 4294901760
    %1657 = vmatpush1.msra.mxu0 %v1656
    %1658 = vmatprep.subr.mxu0 0.0
    %v1659 = vand.u32 %v109, 4294901760
    %1660 = vmatpush1.msra.mxu0 %v1659
    %1661 = vmatprep.subr.mxu0 0.0
    %v1662 = vand.u32 %v110, 4294901760
    %1663 = vmatpush1.msra.mxu0 %v1662
    %1664 = vmatprep.subr.mxu0 0.0
    %v1665 = vand.u32 %v111, 4294901760
    %1666 = vmatpush1.msra.mxu0 %v1665
    %1667 = vmatprep.subr.mxu0 0.0
    %v1668 = vand.u32 %v112, 4294901760
    %1669 = vmatpush1.msra.mxu0 %v1668
    %1670 = vmatprep.subr.mxu0 0.0
    %v1671 = vand.u32 %v113, 4294901760
    %1672 = vmatpush1.msra.mxu0 %v1671
    %1673 = vmatprep.subr.mxu0 0.0
    %v1674 = vand.u32 %v114, 4294901760
    %1675 = vmatpush1.msra.mxu0 %v1674
    %1676 = vmatprep.subr.mxu0 0.0
    %v1677 = vand.u32 %v115, 4294901760
    %1678 = vmatpush1.msra.mxu0 %v1677
    %1679 = vmatprep.subr.mxu0 0.0
    %v1680 = vand.u32 %v116, 4294901760
    %1681 = vmatpush1.msra.mxu0 %v1680
    %1682 = vmatprep.subr.mxu0 0.0
    %v1683 = vand.u32 %v117, 4294901760
    %1684 = vmatpush1.msra.mxu0 %v1683
    %1685 = vmatprep.subr.mxu0 0.0
    %v1686 = vand.u32 %v118, 4294901760
    %1687 = vmatpush1.msra.mxu0 %v1686
    %1688 = vmatprep.subr.mxu0 0.0
    %v1689 = vand.u32 %v119, 4294901760
    %1690 = vmatpush1.msra.mxu0 %v1689
    %1691 = vmatprep.subr.mxu0 0.0
    %v1692 = vand.u32 %v120, 4294901760
    %1693 = vmatpush1.msra.mxu0 %v1692
    %1694 = vmatprep.subr.mxu0 0.0
    %v1695 = vand.u32 %v121, 4294901760
    %1696 = vmatpush1.msra.mxu0 %v1695
    %1697 = vmatprep.subr.mxu0 0.0
    %v1698 = vand.u32 %v122, 4294901760
    %1699 = vmatpush1.msra.mxu0 %v1698
    %1700 = vmatprep.subr.mxu0 0.0
    %v1701 = vand.u32 %v123, 4294901760
    %1702 = vmatpush1.msra.mxu0 %v1701
    %1703 = vmatprep.subr.mxu0 0.0
    %v1704 = vand.u32 %v124, 4294901760
    %1705 = vmatpush1.msra.mxu0 %v1704
    %1706 = vmatprep.subr.mxu0 0.0
    %v1707 = vand.u32 %v125, 4294901760
    %1708 = vmatpush1.msra.mxu0 %v1707
    %1709 = vmatprep.subr.mxu0 0.0
    %v1710 = vand.u32 %v126, 4294901760
    %1711 = vmatpush1.msra.mxu0 %v1710
    %1712 = vmatprep.subr.mxu0 0.0
    %v1713 = vand.u32 %v127, 4294901760
    %1714 = vmatpush1.msra.mxu0 %v1713
    %1715 = vmatprep.subr.mxu0 0.0
    %v1716 = vand.u32 %v128, 4294901760
    %1717 = vmatpush1.msra.mxu0 %v1716
    %1718 = vmatprep.subr.mxu0 0.0
    %v1719 = vand.u32 %v129, 4294901760
    %1720 = vmatpush1.msra.mxu0 %v1719
    %1721 = vmatprep.subr.mxu0 0.0
    %v1722 = vand.u32 %v130, 4294901760
    %1723 = vmatpush1.msra.mxu0 %v1722
    %1724 = vmatprep.subr.mxu0 0.0
    %v1725 = vand.u32 %v131, 4294901760
    %1726 = vmatpush1.msra.mxu0 %v1725
    %1727 = vmatprep.subr.mxu0 0.0
    %v1728 = vand.u32 %v132, 4294901760
    %1729 = vmatpush1.msra.mxu0 %v1728
    %1730 = vmatprep.subr.mxu0 0.0
    %v1731 = vand.u32 %v133, 4294901760
    %1732 = vmatpush1.msra.mxu0 %v1731
    %v1733 = vand.u32 %v248, 4294901760
    %v1734 = vsub.f32 %v248, %v1733
    %v1735 = vand.u32 %v1734, 4294901760
    %1736 = vmatprep.mubr.f32.mxu0 %v1735
    %v1737 = vand.u32 %v247, 4294901760
    %v1738 = vsub.f32 %v247, %v1737
    %v1739 = vand.u32 %v1738, 4294901760
    %1740 = vmatmul.mubr.f32.gmra.mrb[0].mxu0 %v1739
    %v1741 = vpop.f32.mrb[0].mxu0
    %v1742 = vadd.f32 %v1634, %v1741
    %v1743 = vpop.f32.mrb[0].mxu0
    %1744 = vdwg.mxu0
    %1745 = vmatprep.subr.mxu0 0.0
    %v1746 = vand.u32 %v102, 4294901760
    %v1747 = vsub.f32 %v102, %v1746
    %v1748 = vand.u32 %v1747, 4294901760
    %1749 = vmatpush1.msra.mxu0 %v1748
    %1750 = vmatprep.subr.mxu0 0.0
    %v1751 = vand.u32 %v103, 4294901760
    %v1752 = vsub.f32 %v103, %v1751
    %v1753 = vand.u32 %v1752, 4294901760
    %1754 = vmatpush1.msra.mxu0 %v1753
    %1755 = vmatprep.subr.mxu0 0.0
    %v1756 = vand.u32 %v104, 4294901760
    %v1757 = vsub.f32 %v104, %v1756
    %v1758 = vand.u32 %v1757, 4294901760
    %1759 = vmatpush1.msra.mxu0 %v1758
    %1760 = vmatprep.subr.mxu0 0.0
    %v1761 = vand.u32 %v105, 4294901760
    %v1762 = vsub.f32 %v105, %v1761
    %v1763 = vand.u32 %v1762, 4294901760
    %1764 = vmatpush1.msra.mxu0 %v1763
    %1765 = vmatprep.subr.mxu0 0.0
    %v1766 = vand.u32 %v106, 4294901760
    %v1767 = vsub.f32 %v106, %v1766
    %v1768 = vand.u32 %v1767, 4294901760
    %1769 = vmatpush1.msra.mxu0 %v1768
    %1770 = vmatprep.subr.mxu0 0.0
    %v1771 = vand.u32 %v107, 4294901760
    %v1772 = vsub.f32 %v107, %v1771
    %v1773 = vand.u32 %v1772, 4294901760
    %1774 = vmatpush1.msra.mxu0 %v1773
    %1775 = vmatprep.subr.mxu0 0.0
    %v1776 = vand.u32 %v108, 4294901760
    %v1777 = vsub.f32 %v108, %v1776
    %v1778 = vand.u32 %v1777, 4294901760
    %1779 = vmatpush1.msra.mxu0 %v1778
    %1780 = vmatprep.subr.mxu0 0.0
    %v1781 = vand.u32 %v109, 4294901760
    %v1782 = vsub.f32 %v109, %v1781
    %v1783 = vand.u32 %v1782, 4294901760
    %1784 = vmatpush1.msra.mxu0 %v1783
    %1785 = vmatprep.subr.mxu0 0.0
    %v1786 = vand.u32 %v110, 4294901760
    %v1787 = vsub.f32 %v110, %v1786
    %v1788 = vand.u32 %v1787, 4294901760
    %1789 = vmatpush1.msra.mxu0 %v1788
    %1790 = vmatprep.subr.mxu0 0.0
    %v1791 = vand.u32 %v111, 4294901760
    %v1792 = vsub.f32 %v111, %v1791
    %v1793 = vand.u32 %v1792, 4294901760
    %1794 = vmatpush1.msra.mxu0 %v1793
    %1795 = vmatprep.subr.mxu0 0.0
    %v1796 = vand.u32 %v112, 4294901760
    %v1797 = vsub.f32 %v112, %v1796
    %v1798 = vand.u32 %v1797, 4294901760
    %1799 = vmatpush1.msra.mxu0 %v1798
    %1800 = vmatprep.subr.mxu0 0.0
    %v1801 = vand.u32 %v113, 4294901760
    %v1802 = vsub.f32 %v113, %v1801
    %v1803 = vand.u32 %v1802, 4294901760
    %1804 = vmatpush1.msra.mxu0 %v1803
    %1805 = vmatprep.subr.mxu0 0.0
    %v1806 = vand.u32 %v114, 4294901760
    %v1807 = vsub.f32 %v114, %v1806
    %v1808 = vand.u32 %v1807, 4294901760
    %1809 = vmatpush1.msra.mxu0 %v1808
    %1810 = vmatprep.subr.mxu0 0.0
    %v1811 = vand.u32 %v115, 4294901760
    %v1812 = vsub.f32 %v115, %v1811
    %v1813 = vand.u32 %v1812, 4294901760
    %1814 = vmatpush1.msra.mxu0 %v1813
    %1815 = vmatprep.subr.mxu0 0.0
    %v1816 = vand.u32 %v116, 4294901760
    %v1817 = vsub.f32 %v116, %v1816
    %v1818 = vand.u32 %v1817, 4294901760
    %1819 = vmatpush1.msra.mxu0 %v1818
    %1820 = vmatprep.subr.mxu0 0.0
    %v1821 = vand.u32 %v117, 4294901760
    %v1822 = vsub.f32 %v117, %v1821
    %v1823 = vand.u32 %v1822, 4294901760
    %1824 = vmatpush1.msra.mxu0 %v1823
    %1825 = vmatprep.subr.mxu0 0.0
    %v1826 = vand.u32 %v118, 4294901760
    %v1827 = vsub.f32 %v118, %v1826
    %v1828 = vand.u32 %v1827, 4294901760
    %1829 = vmatpush1.msra.mxu0 %v1828
    %1830 = vmatprep.subr.mxu0 0.0
    %v1831 = vand.u32 %v119, 4294901760
    %v1832 = vsub.f32 %v119, %v1831
    %v1833 = vand.u32 %v1832, 4294901760
    %1834 = vmatpush1.msra.mxu0 %v1833
    %1835 = vmatprep.subr.mxu0 0.0
    %v1836 = vand.u32 %v120, 4294901760
    %v1837 = vsub.f32 %v120, %v1836
    %v1838 = vand.u32 %v1837, 4294901760
    %1839 = vmatpush1.msra.mxu0 %v1838
    %1840 = vmatprep.subr.mxu0 0.0
    %v1841 = vand.u32 %v121, 4294901760
    %v1842 = vsub.f32 %v121, %v1841
    %v1843 = vand.u32 %v1842, 4294901760
    %1844 = vmatpush1.msra.mxu0 %v1843
    %1845 = vmatprep.subr.mxu0 0.0
    %v1846 = vand.u32 %v122, 4294901760
    %v1847 = vsub.f32 %v122, %v1846
    %v1848 = vand.u32 %v1847, 4294901760
    %1849 = vmatpush1.msra.mxu0 %v1848
    %1850 = vmatprep.subr.mxu0 0.0
    %v1851 = vand.u32 %v123, 4294901760
    %v1852 = vsub.f32 %v123, %v1851
    %v1853 = vand.u32 %v1852, 4294901760
    %1854 = vmatpush1.msra.mxu0 %v1853
    %1855 = vmatprep.subr.mxu0 0.0
    %v1856 = vand.u32 %v124, 4294901760
    %v1857 = vsub.f32 %v124, %v1856
    %v1858 = vand.u32 %v1857, 4294901760
    %1859 = vmatpush1.msra.mxu0 %v1858
    %1860 = vmatprep.subr.mxu0 0.0
    %v1861 = vand.u32 %v125, 4294901760
    %v1862 = vsub.f32 %v125, %v1861
    %v1863 = vand.u32 %v1862, 4294901760
    %1864 = vmatpush1.msra.mxu0 %v1863
    %1865 = vmatprep.subr.mxu0 0.0
    %v1866 = vand.u32 %v126, 4294901760
    %v1867 = vsub.f32 %v126, %v1866
    %v1868 = vand.u32 %v1867, 4294901760
    %1869 = vmatpush1.msra.mxu0 %v1868
    %1870 = vmatprep.subr.mxu0 0.0
    %v1871 = vand.u32 %v127, 4294901760
    %v1872 = vsub.f32 %v127, %v1871
    %v1873 = vand.u32 %v1872, 4294901760
    %1874 = vmatpush1.msra.mxu0 %v1873
    %1875 = vmatprep.subr.mxu0 0.0
    %v1876 = vand.u32 %v128, 4294901760
    %v1877 = vsub.f32 %v128, %v1876
    %v1878 = vand.u32 %v1877, 4294901760
    %1879 = vmatpush1.msra.mxu0 %v1878
    %1880 = vmatprep.subr.mxu0 0.0
    %v1881 = vand.u32 %v129, 4294901760
    %v1882 = vsub.f32 %v129, %v1881
    %v1883 = vand.u32 %v1882, 4294901760
    %1884 = vmatpush1.msra.mxu0 %v1883
    %1885 = vmatprep.subr.mxu0 0.0
    %v1886 = vand.u32 %v130, 4294901760
    %v1887 = vsub.f32 %v130, %v1886
    %v1888 = vand.u32 %v1887, 4294901760
    %1889 = vmatpush1.msra.mxu0 %v1888
    %1890 = vmatprep.subr.mxu0 0.0
    %v1891 = vand.u32 %v131, 4294901760
    %v1892 = vsub.f32 %v131, %v1891
    %v1893 = vand.u32 %v1892, 4294901760
    %1894 = vmatpush1.msra.mxu0 %v1893
    %1895 = vmatprep.subr.mxu0 0.0
    %v1896 = vand.u32 %v132, 4294901760
    %v1897 = vsub.f32 %v132, %v1896
    %v1898 = vand.u32 %v1897, 4294901760
    %1899 = vmatpush1.msra.mxu0 %v1898
    %1900 = vmatprep.subr.mxu0 0.0
    %v1901 = vand.u32 %v133, 4294901760
    %v1902 = vsub.f32 %v133, %v1901
    %v1903 = vand.u32 %v1902, 4294901760
    %1904 = vmatpush1.msra.mxu0 %v1903
    %v1905 = vand.u32 %v248, 4294901760
    %1906 = vmatprep.mubr.f32.mxu0 %v1905
    %v1907 = vand.u32 %v247, 4294901760
    %1908 = vmatmul.mubr.f32.gmra.mrb[0].mxu0 %v1907
    %v1909 = vpop.f32.mrb[0].mxu0
    %v1910 = vadd.f32 %v1742, %v1909
    %v1911 = vpop.f32.mrb[0].mxu0
    %1912 = vdwg.mxu0
    %1913 = vmatprep.subr.mxu0 0.0
    %v1914 = vand.u32 %v102, 4294901760
    %1915 = vmatpush1.msra.mxu0 %v1914
    %1916 = vmatprep.subr.mxu0 0.0
    %v1917 = vand.u32 %v103, 4294901760
    %1918 = vmatpush1.msra.mxu0 %v1917
    %1919 = vmatprep.subr.mxu0 0.0
    %v1920 = vand.u32 %v104, 4294901760
    %1921 = vmatpush1.msra.mxu0 %v1920
    %1922 = vmatprep.subr.mxu0 0.0
    %v1923 = vand.u32 %v105, 4294901760
    %1924 = vmatpush1.msra.mxu0 %v1923
    %1925 = vmatprep.subr.mxu0 0.0
    %v1926 = vand.u32 %v106, 4294901760
    %1927 = vmatpush1.msra.mxu0 %v1926
    %1928 = vmatprep.subr.mxu0 0.0
    %v1929 = vand.u32 %v107, 4294901760
    %1930 = vmatpush1.msra.mxu0 %v1929
    %1931 = vmatprep.subr.mxu0 0.0
    %v1932 = vand.u32 %v108, 4294901760
    %1933 = vmatpush1.msra.mxu0 %v1932
    %1934 = vmatprep.subr.mxu0 0.0
    %v1935 = vand.u32 %v109, 4294901760
    %1936 = vmatpush1.msra.mxu0 %v1935
    %1937 = vmatprep.subr.mxu0 0.0
    %v1938 = vand.u32 %v110, 4294901760
    %1939 = vmatpush1.msra.mxu0 %v1938
    %1940 = vmatprep.subr.mxu0 0.0
    %v1941 = vand.u32 %v111, 4294901760
    %1942 = vmatpush1.msra.mxu0 %v1941
    %1943 = vmatprep.subr.mxu0 0.0
    %v1944 = vand.u32 %v112, 4294901760
    %1945 = vmatpush1.msra.mxu0 %v1944
    %1946 = vmatprep.subr.mxu0 0.0
    %v1947 = vand.u32 %v113, 4294901760
    %1948 = vmatpush1.msra.mxu0 %v1947
    %1949 = vmatprep.subr.mxu0 0.0
    %v1950 = vand.u32 %v114, 4294901760
    %1951 = vmatpush1.msra.mxu0 %v1950
    %1952 = vmatprep.subr.mxu0 0.0
    %v1953 = vand.u32 %v115, 4294901760
    %1954 = vmatpush1.msra.mxu0 %v1953
    %1955 = vmatprep.subr.mxu0 0.0
    %v1956 = vand.u32 %v116, 4294901760
    %1957 = vmatpush1.msra.mxu0 %v1956
    %1958 = vmatprep.subr.mxu0 0.0
    %v1959 = vand.u32 %v117, 4294901760
    %1960 = vmatpush1.msra.mxu0 %v1959
    %1961 = vmatprep.subr.mxu0 0.0
    %v1962 = vand.u32 %v118, 4294901760
    %1963 = vmatpush1.msra.mxu0 %v1962
    %1964 = vmatprep.subr.mxu0 0.0
    %v1965 = vand.u32 %v119, 4294901760
    %1966 = vmatpush1.msra.mxu0 %v1965
    %1967 = vmatprep.subr.mxu0 0.0
    %v1968 = vand.u32 %v120, 4294901760
    %1969 = vmatpush1.msra.mxu0 %v1968
    %1970 = vmatprep.subr.mxu0 0.0
    %v1971 = vand.u32 %v121, 4294901760
    %1972 = vmatpush1.msra.mxu0 %v1971
    %1973 = vmatprep.subr.mxu0 0.0
    %v1974 = vand.u32 %v122, 4294901760
    %1975 = vmatpush1.msra.mxu0 %v1974
    %1976 = vmatprep.subr.mxu0 0.0
    %v1977 = vand.u32 %v123, 4294901760
    %1978 = vmatpush1.msra.mxu0 %v1977
    %1979 = vmatprep.subr.mxu0 0.0
    %v1980 = vand.u32 %v124, 4294901760
    %1981 = vmatpush1.msra.mxu0 %v1980
    %1982 = vmatprep.subr.mxu0 0.0
    %v1983 = vand.u32 %v125, 4294901760
    %1984 = vmatpush1.msra.mxu0 %v1983
    %1985 = vmatprep.subr.mxu0 0.0
    %v1986 = vand.u32 %v126, 4294901760
    %1987 = vmatpush1.msra.mxu0 %v1986
    %1988 = vmatprep.subr.mxu0 0.0
    %v1989 = vand.u32 %v127, 4294901760
    %1990 = vmatpush1.msra.mxu0 %v1989
    %1991 = vmatprep.subr.mxu0 0.0
    %v1992 = vand.u32 %v128, 4294901760
    %1993 = vmatpush1.msra.mxu0 %v1992
    %1994 = vmatprep.subr.mxu0 0.0
    %v1995 = vand.u32 %v129, 4294901760
    %1996 = vmatpush1.msra.mxu0 %v1995
    %1997 = vmatprep.subr.mxu0 0.0
    %v1998 = vand.u32 %v130, 4294901760
    %1999 = vmatpush1.msra.mxu0 %v1998
    %2000 = vmatprep.subr.mxu0 0.0
    %v2001 = vand.u32 %v131, 4294901760
    %2002 = vmatpush1.msra.mxu0 %v2001
    %2003 = vmatprep.subr.mxu0 0.0
    %v2004 = vand.u32 %v132, 4294901760
    %2005 = vmatpush1.msra.mxu0 %v2004
    %2006 = vmatprep.subr.mxu0 0.0
    %v2007 = vand.u32 %v133, 4294901760
    %2008 = vmatpush1.msra.mxu0 %v2007
    %v2009 = vand.u32 %v248, 4294901760
    %2010 = vmatprep.mubr.f32.mxu0 %v2009
    %v2011 = vand.u32 %v247, 4294901760
    %2012 = vmatmul.mubr.f32.gmra.mrb[0].mxu0 %v2011
    %v2013 = vpop.f32.mrb[0].mxu0
    %v2014 = vadd.f32 %v1910, %v2013
    %v2015 = vpop.f32.mrb[0].mxu0
    %2016 = vdwg.mxu0
    %2017 = vmatprep.subr.mxu0 0.0
    %v2018 = vand.u32 %v134, 4294901760
    %2019 = vmatpush1.msra.mxu0 %v2018
    %2020 = vmatprep.subr.mxu0 0.0
    %v2021 = vand.u32 %v135, 4294901760
    %2022 = vmatpush1.msra.mxu0 %v2021
    %2023 = vmatprep.subr.mxu0 0.0
    %v2024 = vand.u32 %v136, 4294901760
    %2025 = vmatpush1.msra.mxu0 %v2024
    %2026 = vmatprep.subr.mxu0 0.0
    %v2027 = vand.u32 %v137, 4294901760
    %2028 = vmatpush1.msra.mxu0 %v2027
    %2029 = vmatprep.subr.mxu0 0.0
    %v2030 = vand.u32 %v138, 4294901760
    %2031 = vmatpush1.msra.mxu0 %v2030
    %2032 = vmatprep.subr.mxu0 0.0
    %v2033 = vand.u32 %v139, 4294901760
    %2034 = vmatpush1.msra.mxu0 %v2033
    %2035 = vmatprep.subr.mxu0 0.0
    %v2036 = vand.u32 %v140, 4294901760
    %2037 = vmatpush1.msra.mxu0 %v2036
    %2038 = vmatprep.subr.mxu0 0.0
    %v2039 = vand.u32 %v141, 4294901760
    %2040 = vmatpush1.msra.mxu0 %v2039
    %2041 = vmatprep.subr.mxu0 0.0
    %v2042 = vand.u32 %v142, 4294901760
    %2043 = vmatpush1.msra.mxu0 %v2042
    %2044 = vmatprep.subr.mxu0 0.0
    %v2045 = vand.u32 %v143, 4294901760
    %2046 = vmatpush1.msra.mxu0 %v2045
    %2047 = vmatprep.subr.mxu0 0.0
    %v2048 = vand.u32 %v144, 4294901760
    %2049 = vmatpush1.msra.mxu0 %v2048
    %2050 = vmatprep.subr.mxu0 0.0
    %v2051 = vand.u32 %v145, 4294901760
    %2052 = vmatpush1.msra.mxu0 %v2051
    %2053 = vmatprep.subr.mxu0 0.0
    %v2054 = vand.u32 %v146, 4294901760
    %2055 = vmatpush1.msra.mxu0 %v2054
    %2056 = vmatprep.subr.mxu0 0.0
    %v2057 = vand.u32 %v147, 4294901760
    %2058 = vmatpush1.msra.mxu0 %v2057
    %2059 = vmatprep.subr.mxu0 0.0
    %v2060 = vand.u32 %v148, 4294901760
    %2061 = vmatpush1.msra.mxu0 %v2060
    %2062 = vmatprep.subr.mxu0 0.0
    %v2063 = vand.u32 %v149, 4294901760
    %2064 = vmatpush1.msra.mxu0 %v2063
    %2065 = vmatprep.subr.mxu0 0.0
    %v2066 = vand.u32 %v150, 4294901760
    %2067 = vmatpush1.msra.mxu0 %v2066
    %2068 = vmatprep.subr.mxu0 0.0
    %v2069 = vand.u32 %v151, 4294901760
    %2070 = vmatpush1.msra.mxu0 %v2069
    %2071 = vmatprep.subr.mxu0 0.0
    %v2072 = vand.u32 %v152, 4294901760
    %2073 = vmatpush1.msra.mxu0 %v2072
    %2074 = vmatprep.subr.mxu0 0.0
    %v2075 = vand.u32 %v153, 4294901760
    %2076 = vmatpush1.msra.mxu0 %v2075
    %2077 = vmatprep.subr.mxu0 0.0
    %v2078 = vand.u32 %v154, 4294901760
    %2079 = vmatpush1.msra.mxu0 %v2078
    %2080 = vmatprep.subr.mxu0 0.0
    %v2081 = vand.u32 %v155, 4294901760
    %2082 = vmatpush1.msra.mxu0 %v2081
    %2083 = vmatprep.subr.mxu0 0.0
    %v2084 = vand.u32 %v156, 4294901760
    %2085 = vmatpush1.msra.mxu0 %v2084
    %2086 = vmatprep.subr.mxu0 0.0
    %v2087 = vand.u32 %v157, 4294901760
    %2088 = vmatpush1.msra.mxu0 %v2087
    %2089 = vmatprep.subr.mxu0 0.0
    %v2090 = vand.u32 %v158, 4294901760
    %2091 = vmatpush1.msra.mxu0 %v2090
    %2092 = vmatprep.subr.mxu0 0.0
    %v2093 = vand.u32 %v159, 4294901760
    %2094 = vmatpush1.msra.mxu0 %v2093
    %2095 = vmatprep.subr.mxu0 0.0
    %v2096 = vand.u32 %v160, 4294901760
    %2097 = vmatpush1.msra.mxu0 %v2096
    %2098 = vmatprep.subr.mxu0 0.0
    %v2099 = vand.u32 %v161, 4294901760
    %2100 = vmatpush1.msra.mxu0 %v2099
    %2101 = vmatprep.subr.mxu0 0.0
    %v2102 = vand.u32 %v162, 4294901760
    %2103 = vmatpush1.msra.mxu0 %v2102
    %2104 = vmatprep.subr.mxu0 0.0
    %v2105 = vand.u32 %v163, 4294901760
    %2106 = vmatpush1.msra.mxu0 %v2105
    %2107 = vmatprep.subr.mxu0 0.0
    %v2108 = vand.u32 %v164, 4294901760
    %2109 = vmatpush1.msra.mxu0 %v2108
    %2110 = vmatprep.subr.mxu0 0.0
    %v2111 = vand.u32 %v165, 4294901760
    %2112 = vmatpush1.msra.mxu0 %v2111
    %v2113 = vand.u32 %v282, 4294901760
    %v2114 = vsub.f32 %v282, %v2113
    %v2115 = vand.u32 %v2114, 4294901760
    %v2116 = vsub.f32 %v2114, %v2115
    %v2117 = vand.u32 %v2116, 4294901760
    %2118 = vmatprep.mubr.f32.mxu0 %v2117
    %v2119 = vand.u32 %v281, 4294901760
    %v2120 = vsub.f32 %v281, %v2119
    %v2121 = vand.u32 %v2120, 4294901760
    %v2122 = vsub.f32 %v2120, %v2121
    %v2123 = vand.u32 %v2122, 4294901760
    %2124 = vmatmul.mubr.f32.gmra.mrb[0].mxu0 %v2123
    %v2125 = vpop.f32.mrb[0].mxu0
    %v2126 = vadd.f32 %v2014, %v2125
    %v2127 = vpop.f32.mrb[0].mxu0
    %2128 = vdwg.mxu0
    %2129 = vmatprep.subr.mxu0 0.0
    %v2130 = vand.u32 %v134, 4294901760
    %v2131 = vsub.f32 %v134, %v2130
    %v2132 = vand.u32 %v2131, 4294901760
    %v2133 = vsub.f32 %v2131, %v2132
    %v2134 = vand.u32 %v2133, 4294901760
    %2135 = vmatpush1.msra.mxu0 %v2134
    %2136 = vmatprep.subr.mxu0 0.0
    %v2137 = vand.u32 %v135, 4294901760
    %v2138 = vsub.f32 %v135, %v2137
    %v2139 = vand.u32 %v2138, 4294901760
    %v2140 = vsub.f32 %v2138, %v2139
    %v2141 = vand.u32 %v2140, 4294901760
    %2142 = vmatpush1.msra.mxu0 %v2141
    %2143 = vmatprep.subr.mxu0 0.0
    %v2144 = vand.u32 %v136, 4294901760
    %v2145 = vsub.f32 %v136, %v2144
    %v2146 = vand.u32 %v2145, 4294901760
    %v2147 = vsub.f32 %v2145, %v2146
    %v2148 = vand.u32 %v2147, 4294901760
    %2149 = vmatpush1.msra.mxu0 %v2148
    %2150 = vmatprep.subr.mxu0 0.0
    %v2151 = vand.u32 %v137, 4294901760
    %v2152 = vsub.f32 %v137, %v2151
    %v2153 = vand.u32 %v2152, 4294901760
    %v2154 = vsub.f32 %v2152, %v2153
    %v2155 = vand.u32 %v2154, 4294901760
    %2156 = vmatpush1.msra.mxu0 %v2155
    %2157 = vmatprep.subr.mxu0 0.0
    %v2158 = vand.u32 %v138, 4294901760
    %v2159 = vsub.f32 %v138, %v2158
    %v2160 = vand.u32 %v2159, 4294901760
    %v2161 = vsub.f32 %v2159, %v2160
    %v2162 = vand.u32 %v2161, 4294901760
    %2163 = vmatpush1.msra.mxu0 %v2162
    %2164 = vmatprep.subr.mxu0 0.0
    %v2165 = vand.u32 %v139, 4294901760
    %v2166 = vsub.f32 %v139, %v2165
    %v2167 = vand.u32 %v2166, 4294901760
    %v2168 = vsub.f32 %v2166, %v2167
    %v2169 = vand.u32 %v2168, 4294901760
    %2170 = vmatpush1.msra.mxu0 %v2169
    %2171 = vmatprep.subr.mxu0 0.0
    %v2172 = vand.u32 %v140, 4294901760
    %v2173 = vsub.f32 %v140, %v2172
    %v2174 = vand.u32 %v2173, 4294901760
    %v2175 = vsub.f32 %v2173, %v2174
    %v2176 = vand.u32 %v2175, 4294901760
    %2177 = vmatpush1.msra.mxu0 %v2176
    %2178 = vmatprep.subr.mxu0 0.0
    %v2179 = vand.u32 %v141, 4294901760
    %v2180 = vsub.f32 %v141, %v2179
    %v2181 = vand.u32 %v2180, 4294901760
    %v2182 = vsub.f32 %v2180, %v2181
    %v2183 = vand.u32 %v2182, 4294901760
    %2184 = vmatpush1.msra.mxu0 %v2183
    %2185 = vmatprep.subr.mxu0 0.0
    %v2186 = vand.u32 %v142, 4294901760
    %v2187 = vsub.f32 %v142, %v2186
    %v2188 = vand.u32 %v2187, 4294901760
    %v2189 = vsub.f32 %v2187, %v2188
    %v2190 = vand.u32 %v2189, 4294901760
    %2191 = vmatpush1.msra.mxu0 %v2190
    %2192 = vmatprep.subr.mxu0 0.0
    %v2193 = vand.u32 %v143, 4294901760
    %v2194 = vsub.f32 %v143, %v2193
    %v2195 = vand.u32 %v2194, 4294901760
    %v2196 = vsub.f32 %v2194, %v2195
    %v2197 = vand.u32 %v2196, 4294901760
    %2198 = vmatpush1.msra.mxu0 %v2197
    %2199 = vmatprep.subr.mxu0 0.0
    %v2200 = vand.u32 %v144, 4294901760
    %v2201 = vsub.f32 %v144, %v2200
    %v2202 = vand.u32 %v2201, 4294901760
    %v2203 = vsub.f32 %v2201, %v2202
    %v2204 = vand.u32 %v2203, 4294901760
    %2205 = vmatpush1.msra.mxu0 %v2204
    %2206 = vmatprep.subr.mxu0 0.0
    %v2207 = vand.u32 %v145, 4294901760
    %v2208 = vsub.f32 %v145, %v2207
    %v2209 = vand.u32 %v2208, 4294901760
    %v2210 = vsub.f32 %v2208, %v2209
    %v2211 = vand.u32 %v2210, 4294901760
    %2212 = vmatpush1.msra.mxu0 %v2211
    %2213 = vmatprep.subr.mxu0 0.0
    %v2214 = vand.u32 %v146, 4294901760
    %v2215 = vsub.f32 %v146, %v2214
    %v2216 = vand.u32 %v2215, 4294901760
    %v2217 = vsub.f32 %v2215, %v2216
    %v2218 = vand.u32 %v2217, 4294901760
    %2219 = vmatpush1.msra.mxu0 %v2218
    %2220 = vmatprep.subr.mxu0 0.0
    %v2221 = vand.u32 %v147, 4294901760
    %v2222 = vsub.f32 %v147, %v2221
    %v2223 = vand.u32 %v2222, 4294901760
    %v2224 = vsub.f32 %v2222, %v2223
    %v2225 = vand.u32 %v2224, 4294901760
    %2226 = vmatpush1.msra.mxu0 %v2225
    %2227 = vmatprep.subr.mxu0 0.0
    %v2228 = vand.u32 %v148, 4294901760
    %v2229 = vsub.f32 %v148, %v2228
    %v2230 = vand.u32 %v2229, 4294901760
    %v2231 = vsub.f32 %v2229, %v2230
    %v2232 = vand.u32 %v2231, 4294901760
    %2233 = vmatpush1.msra.mxu0 %v2232
    %2234 = vmatprep.subr.mxu0 0.0
    %v2235 = vand.u32 %v149, 4294901760
    %v2236 = vsub.f32 %v149, %v2235
    %v2237 = vand.u32 %v2236, 4294901760
    %v2238 = vsub.f32 %v2236, %v2237
    %v2239 = vand.u32 %v2238, 4294901760
    %2240 = vmatpush1.msra.mxu0 %v2239
    %2241 = vmatprep.subr.mxu0 0.0
    %v2242 = vand.u32 %v150, 4294901760
    %v2243 = vsub.f32 %v150, %v2242
    %v2244 = vand.u32 %v2243, 4294901760
    %v2245 = vsub.f32 %v2243, %v2244
    %v2246 = vand.u32 %v2245, 4294901760
    %2247 = vmatpush1.msra.mxu0 %v2246
    %2248 = vmatprep.subr.mxu0 0.0
    %v2249 = vand.u32 %v151, 4294901760
    %v2250 = vsub.f32 %v151, %v2249
    %v2251 = vand.u32 %v2250, 4294901760
    %v2252 = vsub.f32 %v2250, %v2251
    %v2253 = vand.u32 %v2252, 4294901760
    %2254 = vmatpush1.msra.mxu0 %v2253
    %2255 = vmatprep.subr.mxu0 0.0
    %v2256 = vand.u32 %v152, 4294901760
    %v2257 = vsub.f32 %v152, %v2256
    %v2258 = vand.u32 %v2257, 4294901760
    %v2259 = vsub.f32 %v2257, %v2258
    %v2260 = vand.u32 %v2259, 4294901760
    %2261 = vmatpush1.msra.mxu0 %v2260
    %2262 = vmatprep.subr.mxu0 0.0
    %v2263 = vand.u32 %v153, 4294901760
    %v2264 = vsub.f32 %v153, %v2263
    %v2265 = vand.u32 %v2264, 4294901760
    %v2266 = vsub.f32 %v2264, %v2265
    %v2267 = vand.u32 %v2266, 4294901760
    %2268 = vmatpush1.msra.mxu0 %v2267
    %2269 = vmatprep.subr.mxu0 0.0
    %v2270 = vand.u32 %v154, 4294901760
    %v2271 = vsub.f32 %v154, %v2270
    %v2272 = vand.u32 %v2271, 4294901760
    %v2273 = vsub.f32 %v2271, %v2272
    %v2274 = vand.u32 %v2273, 4294901760
    %2275 = vmatpush1.msra.mxu0 %v2274
    %2276 = vmatprep.subr.mxu0 0.0
    %v2277 = vand.u32 %v155, 4294901760
    %v2278 = vsub.f32 %v155, %v2277
    %v2279 = vand.u32 %v2278, 4294901760
    %v2280 = vsub.f32 %v2278, %v2279
    %v2281 = vand.u32 %v2280, 4294901760
    %2282 = vmatpush1.msra.mxu0 %v2281
    %2283 = vmatprep.subr.mxu0 0.0
    %v2284 = vand.u32 %v156, 4294901760
    %v2285 = vsub.f32 %v156, %v2284
    %v2286 = vand.u32 %v2285, 4294901760
    %v2287 = vsub.f32 %v2285, %v2286
    %v2288 = vand.u32 %v2287, 4294901760
    %2289 = vmatpush1.msra.mxu0 %v2288
    %2290 = vmatprep.subr.mxu0 0.0
    %v2291 = vand.u32 %v157, 4294901760
    %v2292 = vsub.f32 %v157, %v2291
    %v2293 = vand.u32 %v2292, 4294901760
    %v2294 = vsub.f32 %v2292, %v2293
    %v2295 = vand.u32 %v2294, 4294901760
    %2296 = vmatpush1.msra.mxu0 %v2295
    %2297 = vmatprep.subr.mxu0 0.0
    %v2298 = vand.u32 %v158, 4294901760
    %v2299 = vsub.f32 %v158, %v2298
    %v2300 = vand.u32 %v2299, 4294901760
    %v2301 = vsub.f32 %v2299, %v2300
    %v2302 = vand.u32 %v2301, 4294901760
    %2303 = vmatpush1.msra.mxu0 %v2302
    %2304 = vmatprep.subr.mxu0 0.0
    %v2305 = vand.u32 %v159, 4294901760
    %v2306 = vsub.f32 %v159, %v2305
    %v2307 = vand.u32 %v2306, 4294901760
    %v2308 = vsub.f32 %v2306, %v2307
    %v2309 = vand.u32 %v2308, 4294901760
    %2310 = vmatpush1.msra.mxu0 %v2309
    %2311 = vmatprep.subr.mxu0 0.0
    %v2312 = vand.u32 %v160, 4294901760
    %v2313 = vsub.f32 %v160, %v2312
    %v2314 = vand.u32 %v2313, 4294901760
    %v2315 = vsub.f32 %v2313, %v2314
    %v2316 = vand.u32 %v2315, 4294901760
    %2317 = vmatpush1.msra.mxu0 %v2316
    %2318 = vmatprep.subr.mxu0 0.0
    %v2319 = vand.u32 %v161, 4294901760
    %v2320 = vsub.f32 %v161, %v2319
    %v2321 = vand.u32 %v2320, 4294901760
    %v2322 = vsub.f32 %v2320, %v2321
    %v2323 = vand.u32 %v2322, 4294901760
    %2324 = vmatpush1.msra.mxu0 %v2323
    %2325 = vmatprep.subr.mxu0 0.0
    %v2326 = vand.u32 %v162, 4294901760
    %v2327 = vsub.f32 %v162, %v2326
    %v2328 = vand.u32 %v2327, 4294901760
    %v2329 = vsub.f32 %v2327, %v2328
    %v2330 = vand.u32 %v2329, 4294901760
    %2331 = vmatpush1.msra.mxu0 %v2330
    %2332 = vmatprep.subr.mxu0 0.0
    %v2333 = vand.u32 %v163, 4294901760
    %v2334 = vsub.f32 %v163, %v2333
    %v2335 = vand.u32 %v2334, 4294901760
    %v2336 = vsub.f32 %v2334, %v2335
    %v2337 = vand.u32 %v2336, 4294901760
    %2338 = vmatpush1.msra.mxu0 %v2337
    %2339 = vmatprep.subr.mxu0 0.0
    %v2340 = vand.u32 %v164, 4294901760
    %v2341 = vsub.f32 %v164, %v2340
    %v2342 = vand.u32 %v2341, 4294901760
    %v2343 = vsub.f32 %v2341, %v2342
    %v2344 = vand.u32 %v2343, 4294901760
    %2345 = vmatpush1.msra.mxu0 %v2344
    %2346 = vmatprep.subr.mxu0 0.0
    %v2347 = vand.u32 %v165, 4294901760
    %v2348 = vsub.f32 %v165, %v2347
    %v2349 = vand.u32 %v2348, 4294901760
    %v2350 = vsub.f32 %v2348, %v2349
    %v2351 = vand.u32 %v2350, 4294901760
    %2352 = vmatpush1.msra.mxu0 %v2351
    %v2353 = vand.u32 %v282, 4294901760
    %2354 = vmatprep.mubr.f32.mxu0 %v2353
    %v2355 = vand.u32 %v281, 4294901760
    %2356 = vmatmul.mubr.f32.gmra.mrb[0].mxu0 %v2355
    %v2357 = vpop.f32.mrb[0].mxu0
    %v2358 = vadd.f32 %v2126, %v2357
    %v2359 = vpop.f32.mrb[0].mxu0
    %2360 = vdwg.mxu0
    %2361 = vmatprep.subr.mxu0 0.0
    %v2362 = vand.u32 %v134, 4294901760
    %v2363 = vsub.f32 %v134, %v2362
    %2364 = vmatpush1.msra.mxu0 %v2363
    %2365 = vmatprep.subr.mxu0 0.0
    %v2366 = vand.u32 %v135, 4294901760
    %v2367 = vsub.f32 %v135, %v2366
    %2368 = vmatpush1.msra.mxu0 %v2367
    %2369 = vmatprep.subr.mxu0 0.0
    %v2370 = vand.u32 %v136, 4294901760
    %v2371 = vsub.f32 %v136, %v2370
    %2372 = vmatpush1.msra.mxu0 %v2371
    %2373 = vmatprep.subr.mxu0 0.0
    %v2374 = vand.u32 %v137, 4294901760
    %v2375 = vsub.f32 %v137, %v2374
    %2376 = vmatpush1.msra.mxu0 %v2375
    %2377 = vmatprep.subr.mxu0 0.0
    %v2378 = vand.u32 %v138, 4294901760
    %v2379 = vsub.f32 %v138, %v2378
    %2380 = vmatpush1.msra.mxu0 %v2379
    %2381 = vmatprep.subr.mxu0 0.0
    %v2382 = vand.u32 %v139, 4294901760
    %v2383 = vsub.f32 %v139, %v2382
    %2384 = vmatpush1.msra.mxu0 %v2383
    %2385 = vmatprep.subr.mxu0 0.0
    %v2386 = vand.u32 %v140, 4294901760
    %v2387 = vsub.f32 %v140, %v2386
    %2388 = vmatpush1.msra.mxu0 %v2387
    %2389 = vmatprep.subr.mxu0 0.0
    %v2390 = vand.u32 %v141, 4294901760
    %v2391 = vsub.f32 %v141, %v2390
    %2392 = vmatpush1.msra.mxu0 %v2391
    %2393 = vmatprep.subr.mxu0 0.0
    %v2394 = vand.u32 %v142, 4294901760
    %v2395 = vsub.f32 %v142, %v2394
    %2396 = vmatpush1.msra.mxu0 %v2395
    %2397 = vmatprep.subr.mxu0 0.0
    %v2398 = vand.u32 %v143, 4294901760
    %v2399 = vsub.f32 %v143, %v2398
    %2400 = vmatpush1.msra.mxu0 %v2399
    %2401 = vmatprep.subr.mxu0 0.0
    %v2402 = vand.u32 %v144, 4294901760
    %v2403 = vsub.f32 %v144, %v2402
    %2404 = vmatpush1.msra.mxu0 %v2403
    %2405 = vmatprep.subr.mxu0 0.0
    %v2406 = vand.u32 %v145, 4294901760
    %v2407 = vsub.f32 %v145, %v2406
    %2408 = vmatpush1.msra.mxu0 %v2407
    %2409 = vmatprep.subr.mxu0 0.0
    %v2410 = vand.u32 %v146, 4294901760
    %v2411 = vsub.f32 %v146, %v2410
    %2412 = vmatpush1.msra.mxu0 %v2411
    %2413 = vmatprep.subr.mxu0 0.0
    %v2414 = vand.u32 %v147, 4294901760
    %v2415 = vsub.f32 %v147, %v2414
    %2416 = vmatpush1.msra.mxu0 %v2415
    %2417 = vmatprep.subr.mxu0 0.0
    %v2418 = vand.u32 %v148, 4294901760
    %v2419 = vsub.f32 %v148, %v2418
    %2420 = vmatpush1.msra.mxu0 %v2419
    %2421 = vmatprep.subr.mxu0 0.0
    %v2422 = vand.u32 %v149, 4294901760
    %v2423 = vsub.f32 %v149, %v2422
    %2424 = vmatpush1.msra.mxu0 %v2423
    %2425 = vmatprep.subr.mxu0 0.0
    %v2426 = vand.u32 %v150, 4294901760
    %v2427 = vsub.f32 %v150, %v2426
    %2428 = vmatpush1.msra.mxu0 %v2427
    %2429 = vmatprep.subr.mxu0 0.0
    %v2430 = vand.u32 %v151, 4294901760
    %v2431 = vsub.f32 %v151, %v2430
    %2432 = vmatpush1.msra.mxu0 %v2431
    %2433 = vmatprep.subr.mxu0 0.0
    %v2434 = vand.u32 %v152, 4294901760
    %v2435 = vsub.f32 %v152, %v2434
    %2436 = vmatpush1.msra.mxu0 %v2435
    %2437 = vmatprep.subr.mxu0 0.0
    %v2438 = vand.u32 %v153, 4294901760
    %v2439 = vsub.f32 %v153, %v2438
    %2440 = vmatpush1.msra.mxu0 %v2439
    %2441 = vmatprep.subr.mxu0 0.0
    %v2442 = vand.u32 %v154, 4294901760
    %v2443 = vsub.f32 %v154, %v2442
    %2444 = vmatpush1.msra.mxu0 %v2443
    %2445 = vmatprep.subr.mxu0 0.0
    %v2446 = vand.u32 %v155, 4294901760
    %v2447 = vsub.f32 %v155, %v2446
    %2448 = vmatpush1.msra.mxu0 %v2447
    %2449 = vmatprep.subr.mxu0 0.0
    %v2450 = vand.u32 %v156, 4294901760
    %v2451 = vsub.f32 %v156, %v2450
    %2452 = vmatpush1.msra.mxu0 %v2451
    %2453 = vmatprep.subr.mxu0 0.0
    %v2454 = vand.u32 %v157, 4294901760
    %v2455 = vsub.f32 %v157, %v2454
    %2456 = vmatpush1.msra.mxu0 %v2455
    %2457 = vmatprep.subr.mxu0 0.0
    %v2458 = vand.u32 %v158, 4294901760
    %v2459 = vsub.f32 %v158, %v2458
    %2460 = vmatpush1.msra.mxu0 %v2459
    %2461 = vmatprep.subr.mxu0 0.0
    %v2462 = vand.u32 %v159, 4294901760
    %v2463 = vsub.f32 %v159, %v2462
    %2464 = vmatpush1.msra.mxu0 %v2463
    %2465 = vmatprep.subr.mxu0 0.0
    %v2466 = vand.u32 %v160, 4294901760
    %v2467 = vsub.f32 %v160, %v2466
    %2468 = vmatpush1.msra.mxu0 %v2467
    %2469 = vmatprep.subr.mxu0 0.0
    %v2470 = vand.u32 %v161, 4294901760
    %v2471 = vsub.f32 %v161, %v2470
    %2472 = vmatpush1.msra.mxu0 %v2471
    %2473 = vmatprep.subr.mxu0 0.0
    %v2474 = vand.u32 %v162, 4294901760
    %v2475 = vsub.f32 %v162, %v2474
    %2476 = vmatpush1.msra.mxu0 %v2475
    %2477 = vmatprep.subr.mxu0 0.0
    %v2478 = vand.u32 %v163, 4294901760
    %v2479 = vsub.f32 %v163, %v2478
    %2480 = vmatpush1.msra.mxu0 %v2479
    %2481 = vmatprep.subr.mxu0 0.0
    %v2482 = vand.u32 %v164, 4294901760
    %v2483 = vsub.f32 %v164, %v2482
    %2484 = vmatpush1.msra.mxu0 %v2483
    %2485 = vmatprep.subr.mxu0 0.0
    %v2486 = vand.u32 %v165, 4294901760
    %v2487 = vsub.f32 %v165, %v2486
    %2488 = vmatpush1.msra.mxu0 %v2487
    %v2489 = vand.u32 %v282, 4294901760
    %v2490 = vsub.f32 %v282, %v2489
    %2491 = vmatprep.mubr.f32.mxu0 %v2490
    %v2492 = vand.u32 %v281, 4294901760
    %v2493 = vsub.f32 %v281, %v2492
    %2494 = vmatmul.mubr.f32.gmra.mrb[0].mxu0 %v2493
    %v2495 = vpop.f32.mrb[0].mxu0
    %v2496 = vadd.f32 %v2358, %v2495
    %v2497 = vpop.f32.mrb[0].mxu0
    %2498 = vdwg.mxu0
    %2499 = vmatprep.subr.mxu0 0.0
    %v2500 = vand.u32 %v134, 4294901760
    %2501 = vmatpush1.msra.mxu0 %v2500
    %2502 = vmatprep.subr.mxu0 0.0
    %v2503 = vand.u32 %v135, 4294901760
    %2504 = vmatpush1.msra.mxu0 %v2503
    %2505 = vmatprep.subr.mxu0 0.0
    %v2506 = vand.u32 %v136, 4294901760
    %2507 = vmatpush1.msra.mxu0 %v2506
    %2508 = vmatprep.subr.mxu0 0.0
    %v2509 = vand.u32 %v137, 4294901760
    %2510 = vmatpush1.msra.mxu0 %v2509
    %2511 = vmatprep.subr.mxu0 0.0
    %v2512 = vand.u32 %v138, 4294901760
    %2513 = vmatpush1.msra.mxu0 %v2512
    %2514 = vmatprep.subr.mxu0 0.0
    %v2515 = vand.u32 %v139, 4294901760
    %2516 = vmatpush1.msra.mxu0 %v2515
    %2517 = vmatprep.subr.mxu0 0.0
    %v2518 = vand.u32 %v140, 4294901760
    %2519 = vmatpush1.msra.mxu0 %v2518
    %2520 = vmatprep.subr.mxu0 0.0
    %v2521 = vand.u32 %v141, 4294901760
    %2522 = vmatpush1.msra.mxu0 %v2521
    %2523 = vmatprep.subr.mxu0 0.0
    %v2524 = vand.u32 %v142, 4294901760
    %2525 = vmatpush1.msra.mxu0 %v2524
    %2526 = vmatprep.subr.mxu0 0.0
    %v2527 = vand.u32 %v143, 4294901760
    %2528 = vmatpush1.msra.mxu0 %v2527
    %2529 = vmatprep.subr.mxu0 0.0
    %v2530 = vand.u32 %v144, 4294901760
    %2531 = vmatpush1.msra.mxu0 %v2530
    %2532 = vmatprep.subr.mxu0 0.0
    %v2533 = vand.u32 %v145, 4294901760
    %2534 = vmatpush1.msra.mxu0 %v2533
    %2535 = vmatprep.subr.mxu0 0.0
    %v2536 = vand.u32 %v146, 4294901760
    %2537 = vmatpush1.msra.mxu0 %v2536
    %2538 = vmatprep.subr.mxu0 0.0
    %v2539 = vand.u32 %v147, 4294901760
    %2540 = vmatpush1.msra.mxu0 %v2539
    %2541 = vmatprep.subr.mxu0 0.0
    %v2542 = vand.u32 %v148, 4294901760
    %2543 = vmatpush1.msra.mxu0 %v2542
    %2544 = vmatprep.subr.mxu0 0.0
    %v2545 = vand.u32 %v149, 4294901760
    %2546 = vmatpush1.msra.mxu0 %v2545
    %2547 = vmatprep.subr.mxu0 0.0
    %v2548 = vand.u32 %v150, 4294901760
    %2549 = vmatpush1.msra.mxu0 %v2548
    %2550 = vmatprep.subr.mxu0 0.0
    %v2551 = vand.u32 %v151, 4294901760
    %2552 = vmatpush1.msra.mxu0 %v2551
    %2553 = vmatprep.subr.mxu0 0.0
    %v2554 = vand.u32 %v152, 4294901760
    %2555 = vmatpush1.msra.mxu0 %v2554
    %2556 = vmatprep.subr.mxu0 0.0
    %v2557 = vand.u32 %v153, 4294901760
    %2558 = vmatpush1.msra.mxu0 %v2557
    %2559 = vmatprep.subr.mxu0 0.0
    %v2560 = vand.u32 %v154, 4294901760
    %2561 = vmatpush1.msra.mxu0 %v2560
    %2562 = vmatprep.subr.mxu0 0.0
    %v2563 = vand.u32 %v155, 4294901760
    %2564 = vmatpush1.msra.mxu0 %v2563
    %2565 = vmatprep.subr.mxu0 0.0
    %v2566 = vand.u32 %v156, 4294901760
    %2567 = vmatpush1.msra.mxu0 %v2566
    %2568 = vmatprep.subr.mxu0 0.0
    %v2569 = vand.u32 %v157, 4294901760
    %2570 = vmatpush1.msra.mxu0 %v2569
    %2571 = vmatprep.subr.mxu0 0.0
    %v2572 = vand.u32 %v158, 4294901760
    %2573 = vmatpush1.msra.mxu0 %v2572
    %2574 = vmatprep.subr.mxu0 0.0
    %v2575 = vand.u32 %v159, 4294901760
    %2576 = vmatpush1.msra.mxu0 %v2575
    %2577 = vmatprep.subr.mxu0 0.0
    %v2578 = vand.u32 %v160, 4294901760
    %2579 = vmatpush1.msra.mxu0 %v2578
    %2580 = vmatprep.subr.mxu0 0.0
    %v2581 = vand.u32 %v161, 4294901760
    %2582 = vmatpush1.msra.mxu0 %v2581
    %2583 = vmatprep.subr.mxu0 0.0
    %v2584 = vand.u32 %v162, 4294901760
    %2585 = vmatpush1.msra.mxu0 %v2584
    %2586 = vmatprep.subr.mxu0 0.0
    %v2587 = vand.u32 %v163, 4294901760
    %2588 = vmatpush1.msra.mxu0 %v2587
    %2589 = vmatprep.subr.mxu0 0.0
    %v2590 = vand.u32 %v164, 4294901760
    %2591 = vmatpush1.msra.mxu0 %v2590
    %2592 = vmatprep.subr.mxu0 0.0
    %v2593 = vand.u32 %v165, 4294901760
    %2594 = vmatpush1.msra.mxu0 %v2593
    %v2595 = vand.u32 %v282, 4294901760
    %v2596 = vsub.f32 %v282, %v2595
    %v2597 = vand.u32 %v2596, 4294901760
    %2598 = vmatprep.mubr.f32.mxu0 %v2597
    %v2599 = vand.u32 %v281, 4294901760
    %v2600 = vsub.f32 %v281, %v2599
    %v2601 = vand.u32 %v2600, 4294901760
    %2602 = vmatmul.mubr.f32.gmra.mrb[0].mxu0 %v2601
    %v2603 = vpop.f32.mrb[0].mxu0
    %v2604 = vadd.f32 %v2496, %v2603
    %v2605 = vpop.f32.mrb[0].mxu0
    %2606 = vdwg.mxu0
    %2607 = vmatprep.subr.mxu0 0.0
    %v2608 = vand.u32 %v134, 4294901760
    %v2609 = vsub.f32 %v134, %v2608
    %v2610 = vand.u32 %v2609, 4294901760
    %2611 = vmatpush1.msra.mxu0 %v2610
    %2612 = vmatprep.subr.mxu0 0.0
    %v2613 = vand.u32 %v135, 4294901760
    %v2614 = vsub.f32 %v135, %v2613
    %v2615 = vand.u32 %v2614, 4294901760
    %2616 = vmatpush1.msra.mxu0 %v2615
    %2617 = vmatprep.subr.mxu0 0.0
    %v2618 = vand.u32 %v136, 4294901760
    %v2619 = vsub.f32 %v136, %v2618
    %v2620 = vand.u32 %v2619, 4294901760
    %2621 = vmatpush1.msra.mxu0 %v2620
    %2622 = vmatprep.subr.mxu0 0.0
    %v2623 = vand.u32 %v137, 4294901760
    %v2624 = vsub.f32 %v137, %v2623
    %v2625 = vand.u32 %v2624, 4294901760
    %2626 = vmatpush1.msra.mxu0 %v2625
    %2627 = vmatprep.subr.mxu0 0.0
    %v2628 = vand.u32 %v138, 4294901760
    %v2629 = vsub.f32 %v138, %v2628
    %v2630 = vand.u32 %v2629, 4294901760
    %2631 = vmatpush1.msra.mxu0 %v2630
    %2632 = vmatprep.subr.mxu0 0.0
    %v2633 = vand.u32 %v139, 4294901760
    %v2634 = vsub.f32 %v139, %v2633
    %v2635 = vand.u32 %v2634, 4294901760
    %2636 = vmatpush1.msra.mxu0 %v2635
    %2637 = vmatprep.subr.mxu0 0.0
    %v2638 = vand.u32 %v140, 4294901760
    %v2639 = vsub.f32 %v140, %v2638
    %v2640 = vand.u32 %v2639, 4294901760
    %2641 = vmatpush1.msra.mxu0 %v2640
    %2642 = vmatprep.subr.mxu0 0.0
    %v2643 = vand.u32 %v141, 4294901760
    %v2644 = vsub.f32 %v141, %v2643
    %v2645 = vand.u32 %v2644, 4294901760
    %2646 = vmatpush1.msra.mxu0 %v2645
    %2647 = vmatprep.subr.mxu0 0.0
    %v2648 = vand.u32 %v142, 4294901760
    %v2649 = vsub.f32 %v142, %v2648
    %v2650 = vand.u32 %v2649, 4294901760
    %2651 = vmatpush1.msra.mxu0 %v2650
    %2652 = vmatprep.subr.mxu0 0.0
    %v2653 = vand.u32 %v143, 4294901760
    %v2654 = vsub.f32 %v143, %v2653
    %v2655 = vand.u32 %v2654, 4294901760
    %2656 = vmatpush1.msra.mxu0 %v2655
    %2657 = vmatprep.subr.mxu0 0.0
    %v2658 = vand.u32 %v144, 4294901760
    %v2659 = vsub.f32 %v144, %v2658
    %v2660 = vand.u32 %v2659, 4294901760
    %2661 = vmatpush1.msra.mxu0 %v2660
    %2662 = vmatprep.subr.mxu0 0.0
    %v2663 = vand.u32 %v145, 4294901760
    %v2664 = vsub.f32 %v145, %v2663
    %v2665 = vand.u32 %v2664, 4294901760
    %2666 = vmatpush1.msra.mxu0 %v2665
    %2667 = vmatprep.subr.mxu0 0.0
    %v2668 = vand.u32 %v146, 4294901760
    %v2669 = vsub.f32 %v146, %v2668
    %v2670 = vand.u32 %v2669, 4294901760
    %2671 = vmatpush1.msra.mxu0 %v2670
    %2672 = vmatprep.subr.mxu0 0.0
    %v2673 = vand.u32 %v147, 4294901760
    %v2674 = vsub.f32 %v147, %v2673
    %v2675 = vand.u32 %v2674, 4294901760
    %2676 = vmatpush1.msra.mxu0 %v2675
    %2677 = vmatprep.subr.mxu0 0.0
    %v2678 = vand.u32 %v148, 4294901760
    %v2679 = vsub.f32 %v148, %v2678
    %v2680 = vand.u32 %v2679, 4294901760
    %2681 = vmatpush1.msra.mxu0 %v2680
    %2682 = vmatprep.subr.mxu0 0.0
    %v2683 = vand.u32 %v149, 4294901760
    %v2684 = vsub.f32 %v149, %v2683
    %v2685 = vand.u32 %v2684, 4294901760
    %2686 = vmatpush1.msra.mxu0 %v2685
    %2687 = vmatprep.subr.mxu0 0.0
    %v2688 = vand.u32 %v150, 4294901760
    %v2689 = vsub.f32 %v150, %v2688
    %v2690 = vand.u32 %v2689, 4294901760
    %2691 = vmatpush1.msra.mxu0 %v2690
    %2692 = vmatprep.subr.mxu0 0.0
    %v2693 = vand.u32 %v151, 4294901760
    %v2694 = vsub.f32 %v151, %v2693
    %v2695 = vand.u32 %v2694, 4294901760
    %2696 = vmatpush1.msra.mxu0 %v2695
    %2697 = vmatprep.subr.mxu0 0.0
    %v2698 = vand.u32 %v152, 4294901760
    %v2699 = vsub.f32 %v152, %v2698
    %v2700 = vand.u32 %v2699, 4294901760
    %2701 = vmatpush1.msra.mxu0 %v2700
    %2702 = vmatprep.subr.mxu0 0.0
    %v2703 = vand.u32 %v153, 4294901760
    %v2704 = vsub.f32 %v153, %v2703
    %v2705 = vand.u32 %v2704, 4294901760
    %2706 = vmatpush1.msra.mxu0 %v2705
    %2707 = vmatprep.subr.mxu0 0.0
    %v2708 = vand.u32 %v154, 4294901760
    %v2709 = vsub.f32 %v154, %v2708
    %v2710 = vand.u32 %v2709, 4294901760
    %2711 = vmatpush1.msra.mxu0 %v2710
    %2712 = vmatprep.subr.mxu0 0.0
    %v2713 = vand.u32 %v155, 4294901760
    %v2714 = vsub.f32 %v155, %v2713
    %v2715 = vand.u32 %v2714, 4294901760
    %2716 = vmatpush1.msra.mxu0 %v2715
    %2717 = vmatprep.subr.mxu0 0.0
    %v2718 = vand.u32 %v156, 4294901760
    %v2719 = vsub.f32 %v156, %v2718
    %v2720 = vand.u32 %v2719, 4294901760
    %2721 = vmatpush1.msra.mxu0 %v2720
    %2722 = vmatprep.subr.mxu0 0.0
    %v2723 = vand.u32 %v157, 4294901760
    %v2724 = vsub.f32 %v157, %v2723
    %v2725 = vand.u32 %v2724, 4294901760
    %2726 = vmatpush1.msra.mxu0 %v2725
    %2727 = vmatprep.subr.mxu0 0.0
    %v2728 = vand.u32 %v158, 4294901760
    %v2729 = vsub.f32 %v158, %v2728
    %v2730 = vand.u32 %v2729, 4294901760
    %2731 = vmatpush1.msra.mxu0 %v2730
    %2732 = vmatprep.subr.mxu0 0.0
    %v2733 = vand.u32 %v159, 4294901760
    %v2734 = vsub.f32 %v159, %v2733
    %v2735 = vand.u32 %v2734, 4294901760
    %2736 = vmatpush1.msra.mxu0 %v2735
    %2737 = vmatprep.subr.mxu0 0.0
    %v2738 = vand.u32 %v160, 4294901760
    %v2739 = vsub.f32 %v160, %v2738
    %v2740 = vand.u32 %v2739, 4294901760
    %2741 = vmatpush1.msra.mxu0 %v2740
    %2742 = vmatprep.subr.mxu0 0.0
    %v2743 = vand.u32 %v161, 4294901760
    %v2744 = vsub.f32 %v161, %v2743
    %v2745 = vand.u32 %v2744, 4294901760
    %2746 = vmatpush1.msra.mxu0 %v2745
    %2747 = vmatprep.subr.mxu0 0.0
    %v2748 = vand.u32 %v162, 4294901760
    %v2749 = vsub.f32 %v162, %v2748
    %v2750 = vand.u32 %v2749, 4294901760
    %2751 = vmatpush1.msra.mxu0 %v2750
    %2752 = vmatprep.subr.mxu0 0.0
    %v2753 = vand.u32 %v163, 4294901760
    %v2754 = vsub.f32 %v163, %v2753
    %v2755 = vand.u32 %v2754, 4294901760
    %2756 = vmatpush1.msra.mxu0 %v2755
    %2757 = vmatprep.subr.mxu0 0.0
    %v2758 = vand.u32 %v164, 4294901760
    %v2759 = vsub.f32 %v164, %v2758
    %v2760 = vand.u32 %v2759, 4294901760
    %2761 = vmatpush1.msra.mxu0 %v2760
    %2762 = vmatprep.subr.mxu0 0.0
    %v2763 = vand.u32 %v165, 4294901760
    %v2764 = vsub.f32 %v165, %v2763
    %v2765 = vand.u32 %v2764, 4294901760
    %2766 = vmatpush1.msra.mxu0 %v2765
    %v2767 = vand.u32 %v282, 4294901760
    %2768 = vmatprep.mubr.f32.mxu0 %v2767
    %v2769 = vand.u32 %v281, 4294901760
    %2770 = vmatmul.mubr.f32.gmra.mrb[0].mxu0 %v2769
    %v2771 = vpop.f32.mrb[0].mxu0
    %v2772 = vadd.f32 %v2604, %v2771
    %v2773 = vpop.f32.mrb[0].mxu0
    %2774 = vdwg.mxu0
    %2775 = vmatprep.subr.mxu0 0.0
    %v2776 = vand.u32 %v134, 4294901760
    %2777 = vmatpush1.msra.mxu0 %v2776
    %2778 = vmatprep.subr.mxu0 0.0
    %v2779 = vand.u32 %v135, 4294901760
    %2780 = vmatpush1.msra.mxu0 %v2779
    %2781 = vmatprep.subr.mxu0 0.0
    %v2782 = vand.u32 %v136, 4294901760
    %2783 = vmatpush1.msra.mxu0 %v2782
    %2784 = vmatprep.subr.mxu0 0.0
    %v2785 = vand.u32 %v137, 4294901760
    %2786 = vmatpush1.msra.mxu0 %v2785
    %2787 = vmatprep.subr.mxu0 0.0
    %v2788 = vand.u32 %v138, 4294901760
    %2789 = vmatpush1.msra.mxu0 %v2788
    %2790 = vmatprep.subr.mxu0 0.0
    %v2791 = vand.u32 %v139, 4294901760
    %2792 = vmatpush1.msra.mxu0 %v2791
    %2793 = vmatprep.subr.mxu0 0.0
    %v2794 = vand.u32 %v140, 4294901760
    %2795 = vmatpush1.msra.mxu0 %v2794
    %2796 = vmatprep.subr.mxu0 0.0
    %v2797 = vand.u32 %v141, 4294901760
    %2798 = vmatpush1.msra.mxu0 %v2797
    %2799 = vmatprep.subr.mxu0 0.0
    %v2800 = vand.u32 %v142, 4294901760
    %2801 = vmatpush1.msra.mxu0 %v2800
    %2802 = vmatprep.subr.mxu0 0.0
    %v2803 = vand.u32 %v143, 4294901760
    %2804 = vmatpush1.msra.mxu0 %v2803
    %2805 = vmatprep.subr.mxu0 0.0
    %v2806 = vand.u32 %v144, 4294901760
    %2807 = vmatpush1.msra.mxu0 %v2806
    %2808 = vmatprep.subr.mxu0 0.0
    %v2809 = vand.u32 %v145, 4294901760
    %2810 = vmatpush1.msra.mxu0 %v2809
    %2811 = vmatprep.subr.mxu0 0.0
    %v2812 = vand.u32 %v146, 4294901760
    %2813 = vmatpush1.msra.mxu0 %v2812
    %2814 = vmatprep.subr.mxu0 0.0
    %v2815 = vand.u32 %v147, 4294901760
    %2816 = vmatpush1.msra.mxu0 %v2815
    %2817 = vmatprep.subr.mxu0 0.0
    %v2818 = vand.u32 %v148, 4294901760
    %2819 = vmatpush1.msra.mxu0 %v2818
    %2820 = vmatprep.subr.mxu0 0.0
    %v2821 = vand.u32 %v149, 4294901760
    %2822 = vmatpush1.msra.mxu0 %v2821
    %2823 = vmatprep.subr.mxu0 0.0
    %v2824 = vand.u32 %v150, 4294901760
    %2825 = vmatpush1.msra.mxu0 %v2824
    %2826 = vmatprep.subr.mxu0 0.0
    %v2827 = vand.u32 %v151, 4294901760
    %2828 = vmatpush1.msra.mxu0 %v2827
    %2829 = vmatprep.subr.mxu0 0.0
    %v2830 = vand.u32 %v152, 4294901760
    %2831 = vmatpush1.msra.mxu0 %v2830
    %2832 = vmatprep.subr.mxu0 0.0
    %v2833 = vand.u32 %v153, 4294901760
    %2834 = vmatpush1.msra.mxu0 %v2833
    %2835 = vmatprep.subr.mxu0 0.0
    %v2836 = vand.u32 %v154, 4294901760
    %2837 = vmatpush1.msra.mxu0 %v2836
    %2838 = vmatprep.subr.mxu0 0.0
    %v2839 = vand.u32 %v155, 4294901760
    %2840 = vmatpush1.msra.mxu0 %v2839
    %2841 = vmatprep.subr.mxu0 0.0
    %v2842 = vand.u32 %v156, 4294901760
    %2843 = vmatpush1.msra.mxu0 %v2842
    %2844 = vmatprep.subr.mxu0 0.0
    %v2845 = vand.u32 %v157, 4294901760
    %2846 = vmatpush1.msra.mxu0 %v2845
    %2847 = vmatprep.subr.mxu0 0.0
    %v2848 = vand.u32 %v158, 4294901760
    %2849 = vmatpush1.msra.mxu0 %v2848
    %2850 = vmatprep.subr.mxu0 0.0
    %v2851 = vand.u32 %v159, 4294901760
    %2852 = vmatpush1.msra.mxu0 %v2851
    %2853 = vmatprep.subr.mxu0 0.0
    %v2854 = vand.u32 %v160, 4294901760
    %2855 = vmatpush1.msra.mxu0 %v2854
    %2856 = vmatprep.subr.mxu0 0.0
    %v2857 = vand.u32 %v161, 4294901760
    %2858 = vmatpush1.msra.mxu0 %v2857
    %2859 = vmatprep.subr.mxu0 0.0
    %v2860 = vand.u32 %v162, 4294901760
    %2861 = vmatpush1.msra.mxu0 %v2860
    %2862 = vmatprep.subr.mxu0 0.0
    %v2863 = vand.u32 %v163, 4294901760
    %2864 = vmatpush1.msra.mxu0 %v2863
    %2865 = vmatprep.subr.mxu0 0.0
    %v2866 = vand.u32 %v164, 4294901760
    %2867 = vmatpush1.msra.mxu0 %v2866
    %2868 = vmatprep.subr.mxu0 0.0
    %v2869 = vand.u32 %v165, 4294901760
    %2870 = vmatpush1.msra.mxu0 %v2869
    %v2871 = vand.u32 %v282, 4294901760
    %2872 = vmatprep.mubr.f32.mxu0 %v2871
    %v2873 = vand.u32 %v281, 4294901760
    %2874 = vmatmul.mubr.f32.gmra.mrb[0].mxu0 %v2873
    %v2875 = vpop.f32.mrb[0].mxu0
    %v2876 = vadd.f32 %v2772, %v2875
    %v2877 = vpop.f32.mrb[0].mxu0
    %2878 = vdwg.mxu0
    %2879 = vmatprep.subr.mxu0 0.0
    %v2880 = vand.u32 %v166, 4294901760
    %2881 = vmatpush1.msra.mxu0 %v2880
    %2882 = vmatprep.subr.mxu0 0.0
    %v2883 = vand.u32 %v167, 4294901760
    %2884 = vmatpush1.msra.mxu0 %v2883
    %2885 = vmatprep.subr.mxu0 0.0
    %v2886 = vand.u32 %v168, 4294901760
    %2887 = vmatpush1.msra.mxu0 %v2886
    %2888 = vmatprep.subr.mxu0 0.0
    %v2889 = vand.u32 %v169, 4294901760
    %2890 = vmatpush1.msra.mxu0 %v2889
    %2891 = vmatprep.subr.mxu0 0.0
    %v2892 = vand.u32 %v170, 4294901760
    %2893 = vmatpush1.msra.mxu0 %v2892
    %2894 = vmatprep.subr.mxu0 0.0
    %v2895 = vand.u32 %v171, 4294901760
    %2896 = vmatpush1.msra.mxu0 %v2895
    %2897 = vmatprep.subr.mxu0 0.0
    %v2898 = vand.u32 %v172, 4294901760
    %2899 = vmatpush1.msra.mxu0 %v2898
    %2900 = vmatprep.subr.mxu0 0.0
    %v2901 = vand.u32 %v173, 4294901760
    %2902 = vmatpush1.msra.mxu0 %v2901
    %2903 = vmatprep.subr.mxu0 0.0
    %v2904 = vand.u32 %v174, 4294901760
    %2905 = vmatpush1.msra.mxu0 %v2904
    %2906 = vmatprep.subr.mxu0 0.0
    %v2907 = vand.u32 %v175, 4294901760
    %2908 = vmatpush1.msra.mxu0 %v2907
    %2909 = vmatprep.subr.mxu0 0.0
    %v2910 = vand.u32 %v176, 4294901760
    %2911 = vmatpush1.msra.mxu0 %v2910
    %2912 = vmatprep.subr.mxu0 0.0
    %v2913 = vand.u32 %v177, 4294901760
    %2914 = vmatpush1.msra.mxu0 %v2913
    %2915 = vmatprep.subr.mxu0 0.0
    %v2916 = vand.u32 %v178, 4294901760
    %2917 = vmatpush1.msra.mxu0 %v2916
    %2918 = vmatprep.subr.mxu0 0.0
    %v2919 = vand.u32 %v179, 4294901760
    %2920 = vmatpush1.msra.mxu0 %v2919
    %2921 = vmatprep.subr.mxu0 0.0
    %v2922 = vand.u32 %v180, 4294901760
    %2923 = vmatpush1.msra.mxu0 %v2922
    %2924 = vmatprep.subr.mxu0 0.0
    %v2925 = vand.u32 %v181, 4294901760
    %2926 = vmatpush1.msra.mxu0 %v2925
    %2927 = vmatprep.subr.mxu0 0.0
    %v2928 = vand.u32 %v182, 4294901760
    %2929 = vmatpush1.msra.mxu0 %v2928
    %2930 = vmatprep.subr.mxu0 0.0
    %v2931 = vand.u32 %v183, 4294901760
    %2932 = vmatpush1.msra.mxu0 %v2931
    %2933 = vmatprep.subr.mxu0 0.0
    %v2934 = vand.u32 %v184, 4294901760
    %2935 = vmatpush1.msra.mxu0 %v2934
    %2936 = vmatprep.subr.mxu0 0.0
    %v2937 = vand.u32 %v185, 4294901760
    %2938 = vmatpush1.msra.mxu0 %v2937
    %2939 = vmatprep.subr.mxu0 0.0
    %v2940 = vand.u32 %v186, 4294901760
    %2941 = vmatpush1.msra.mxu0 %v2940
    %2942 = vmatprep.subr.mxu0 0.0
    %v2943 = vand.u32 %v187, 4294901760
    %2944 = vmatpush1.msra.mxu0 %v2943
    %2945 = vmatprep.subr.mxu0 0.0
    %v2946 = vand.u32 %v188, 4294901760
    %2947 = vmatpush1.msra.mxu0 %v2946
    %2948 = vmatprep.subr.mxu0 0.0
    %v2949 = vand.u32 %v189, 4294901760
    %2950 = vmatpush1.msra.mxu0 %v2949
    %2951 = vmatprep.subr.mxu0 0.0
    %v2952 = vand.u32 %v190, 4294901760
    %2953 = vmatpush1.msra.mxu0 %v2952
    %2954 = vmatprep.subr.mxu0 0.0
    %v2955 = vand.u32 %v191, 4294901760
    %2956 = vmatpush1.msra.mxu0 %v2955
    %2957 = vmatprep.subr.mxu0 0.0
    %v2958 = vand.u32 %v192, 4294901760
    %2959 = vmatpush1.msra.mxu0 %v2958
    %2960 = vmatprep.subr.mxu0 0.0
    %v2961 = vand.u32 %v193, 4294901760
    %2962 = vmatpush1.msra.mxu0 %v2961
    %2963 = vmatprep.subr.mxu0 0.0
    %v2964 = vand.u32 %v194, 4294901760
    %2965 = vmatpush1.msra.mxu0 %v2964
    %2966 = vmatprep.subr.mxu0 0.0
    %v2967 = vand.u32 %v195, 4294901760
    %2968 = vmatpush1.msra.mxu0 %v2967
    %2969 = vmatprep.subr.mxu0 0.0
    %v2970 = vand.u32 %v196, 4294901760
    %2971 = vmatpush1.msra.mxu0 %v2970
    %2972 = vmatprep.subr.mxu0 0.0
    %v2973 = vand.u32 %v197, 4294901760
    %2974 = vmatpush1.msra.mxu0 %v2973
    %v2975 = vand.u32 %v284, 4294901760
    %v2976 = vsub.f32 %v284, %v2975
    %v2977 = vand.u32 %v2976, 4294901760
    %v2978 = vsub.f32 %v2976, %v2977
    %v2979 = vand.u32 %v2978, 4294901760
    %2980 = vmatprep.mubr.f32.mxu0 %v2979
    %v2981 = vand.u32 %v283, 4294901760
    %v2982 = vsub.f32 %v283, %v2981
    %v2983 = vand.u32 %v2982, 4294901760
    %v2984 = vsub.f32 %v2982, %v2983
    %v2985 = vand.u32 %v2984, 4294901760
    %2986 = vmatmul.mubr.f32.gmra.mrb[0].mxu0 %v2985
    %v2987 = vpop.f32.mrb[0].mxu0
    %v2988 = vadd.f32 %v2876, %v2987
    %v2989 = vpop.f32.mrb[0].mxu0
    %2990 = vdwg.mxu0
    %2991 = vmatprep.subr.mxu0 0.0
    %v2992 = vand.u32 %v166, 4294901760
    %v2993 = vsub.f32 %v166, %v2992
    %v2994 = vand.u32 %v2993, 4294901760
    %v2995 = vsub.f32 %v2993, %v2994
    %v2996 = vand.u32 %v2995, 4294901760
    %2997 = vmatpush1.msra.mxu0 %v2996
    %2998 = vmatprep.subr.mxu0 0.0
    %v2999 = vand.u32 %v167, 4294901760
    %v3000 = vsub.f32 %v167, %v2999
    %v3001 = vand.u32 %v3000, 4294901760
    %v3002 = vsub.f32 %v3000, %v3001
    %v3003 = vand.u32 %v3002, 4294901760
    %3004 = vmatpush1.msra.mxu0 %v3003
    %3005 = vmatprep.subr.mxu0 0.0
    %v3006 = vand.u32 %v168, 4294901760
    %v3007 = vsub.f32 %v168, %v3006
    %v3008 = vand.u32 %v3007, 4294901760
    %v3009 = vsub.f32 %v3007, %v3008
    %v3010 = vand.u32 %v3009, 4294901760
    %3011 = vmatpush1.msra.mxu0 %v3010
    %3012 = vmatprep.subr.mxu0 0.0
    %v3013 = vand.u32 %v169, 4294901760
    %v3014 = vsub.f32 %v169, %v3013
    %v3015 = vand.u32 %v3014, 4294901760
    %v3016 = vsub.f32 %v3014, %v3015
    %v3017 = vand.u32 %v3016, 4294901760
    %3018 = vmatpush1.msra.mxu0 %v3017
    %3019 = vmatprep.subr.mxu0 0.0
    %v3020 = vand.u32 %v170, 4294901760
    %v3021 = vsub.f32 %v170, %v3020
    %v3022 = vand.u32 %v3021, 4294901760
    %v3023 = vsub.f32 %v3021, %v3022
    %v3024 = vand.u32 %v3023, 4294901760
    %3025 = vmatpush1.msra.mxu0 %v3024
    %3026 = vmatprep.subr.mxu0 0.0
    %v3027 = vand.u32 %v171, 4294901760
    %v3028 = vsub.f32 %v171, %v3027
    %v3029 = vand.u32 %v3028, 4294901760
    %v3030 = vsub.f32 %v3028, %v3029
    %v3031 = vand.u32 %v3030, 4294901760
    %3032 = vmatpush1.msra.mxu0 %v3031
    %3033 = vmatprep.subr.mxu0 0.0
    %v3034 = vand.u32 %v172, 4294901760
    %v3035 = vsub.f32 %v172, %v3034
    %v3036 = vand.u32 %v3035, 4294901760
    %v3037 = vsub.f32 %v3035, %v3036
    %v3038 = vand.u32 %v3037, 4294901760
    %3039 = vmatpush1.msra.mxu0 %v3038
    %3040 = vmatprep.subr.mxu0 0.0
    %v3041 = vand.u32 %v173, 4294901760
    %v3042 = vsub.f32 %v173, %v3041
    %v3043 = vand.u32 %v3042, 4294901760
    %v3044 = vsub.f32 %v3042, %v3043
    %v3045 = vand.u32 %v3044, 4294901760
    %3046 = vmatpush1.msra.mxu0 %v3045
    %3047 = vmatprep.subr.mxu0 0.0
    %v3048 = vand.u32 %v174, 4294901760
    %v3049 = vsub.f32 %v174, %v3048
    %v3050 = vand.u32 %v3049, 4294901760
    %v3051 = vsub.f32 %v3049, %v3050
    %v3052 = vand.u32 %v3051, 4294901760
    %3053 = vmatpush1.msra.mxu0 %v3052
    %3054 = vmatprep.subr.mxu0 0.0
    %v3055 = vand.u32 %v175, 4294901760
    %v3056 = vsub.f32 %v175, %v3055
    %v3057 = vand.u32 %v3056, 4294901760
    %v3058 = vsub.f32 %v3056, %v3057
    %v3059 = vand.u32 %v3058, 4294901760
    %3060 = vmatpush1.msra.mxu0 %v3059
    %3061 = vmatprep.subr.mxu0 0.0
    %v3062 = vand.u32 %v176, 4294901760
    %v3063 = vsub.f32 %v176, %v3062
    %v3064 = vand.u32 %v3063, 4294901760
    %v3065 = vsub.f32 %v3063, %v3064
    %v3066 = vand.u32 %v3065, 4294901760
    %3067 = vmatpush1.msra.mxu0 %v3066
    %3068 = vmatprep.subr.mxu0 0.0
    %v3069 = vand.u32 %v177, 4294901760
    %v3070 = vsub.f32 %v177, %v3069
    %v3071 = vand.u32 %v3070, 4294901760
    %v3072 = vsub.f32 %v3070, %v3071
    %v3073 = vand.u32 %v3072, 4294901760
    %3074 = vmatpush1.msra.mxu0 %v3073
    %3075 = vmatprep.subr.mxu0 0.0
    %v3076 = vand.u32 %v178, 4294901760
    %v3077 = vsub.f32 %v178, %v3076
    %v3078 = vand.u32 %v3077, 4294901760
    %v3079 = vsub.f32 %v3077, %v3078
    %v3080 = vand.u32 %v3079, 4294901760
    %3081 = vmatpush1.msra.mxu0 %v3080
    %3082 = vmatprep.subr.mxu0 0.0
    %v3083 = vand.u32 %v179, 4294901760
    %v3084 = vsub.f32 %v179, %v3083
    %v3085 = vand.u32 %v3084, 4294901760
    %v3086 = vsub.f32 %v3084, %v3085
    %v3087 = vand.u32 %v3086, 4294901760
    %3088 = vmatpush1.msra.mxu0 %v3087
    %3089 = vmatprep.subr.mxu0 0.0
    %v3090 = vand.u32 %v180, 4294901760
    %v3091 = vsub.f32 %v180, %v3090
    %v3092 = vand.u32 %v3091, 4294901760
    %v3093 = vsub.f32 %v3091, %v3092
    %v3094 = vand.u32 %v3093, 4294901760
    %3095 = vmatpush1.msra.mxu0 %v3094
    %3096 = vmatprep.subr.mxu0 0.0
    %v3097 = vand.u32 %v181, 4294901760
    %v3098 = vsub.f32 %v181, %v3097
    %v3099 = vand.u32 %v3098, 4294901760
    %v3100 = vsub.f32 %v3098, %v3099
    %v3101 = vand.u32 %v3100, 4294901760
    %3102 = vmatpush1.msra.mxu0 %v3101
    %3103 = vmatprep.subr.mxu0 0.0
    %v3104 = vand.u32 %v182, 4294901760
    %v3105 = vsub.f32 %v182, %v3104
    %v3106 = vand.u32 %v3105, 4294901760
    %v3107 = vsub.f32 %v3105, %v3106
    %v3108 = vand.u32 %v3107, 4294901760
    %3109 = vmatpush1.msra.mxu0 %v3108
    %3110 = vmatprep.subr.mxu0 0.0
    %v3111 = vand.u32 %v183, 4294901760
    %v3112 = vsub.f32 %v183, %v3111
    %v3113 = vand.u32 %v3112, 4294901760
    %v3114 = vsub.f32 %v3112, %v3113
    %v3115 = vand.u32 %v3114, 4294901760
    %3116 = vmatpush1.msra.mxu0 %v3115
    %3117 = vmatprep.subr.mxu0 0.0
    %v3118 = vand.u32 %v184, 4294901760
    %v3119 = vsub.f32 %v184, %v3118
    %v3120 = vand.u32 %v3119, 4294901760
    %v3121 = vsub.f32 %v3119, %v3120
    %v3122 = vand.u32 %v3121, 4294901760
    %3123 = vmatpush1.msra.mxu0 %v3122
    %3124 = vmatprep.subr.mxu0 0.0
    %v3125 = vand.u32 %v185, 4294901760
    %v3126 = vsub.f32 %v185, %v3125
    %v3127 = vand.u32 %v3126, 4294901760
    %v3128 = vsub.f32 %v3126, %v3127
    %v3129 = vand.u32 %v3128, 4294901760
    %3130 = vmatpush1.msra.mxu0 %v3129
    %3131 = vmatprep.subr.mxu0 0.0
    %v3132 = vand.u32 %v186, 4294901760
    %v3133 = vsub.f32 %v186, %v3132
    %v3134 = vand.u32 %v3133, 4294901760
    %v3135 = vsub.f32 %v3133, %v3134
    %v3136 = vand.u32 %v3135, 4294901760
    %3137 = vmatpush1.msra.mxu0 %v3136
    %3138 = vmatprep.subr.mxu0 0.0
    %v3139 = vand.u32 %v187, 4294901760
    %v3140 = vsub.f32 %v187, %v3139
    %v3141 = vand.u32 %v3140, 4294901760
    %v3142 = vsub.f32 %v3140, %v3141
    %v3143 = vand.u32 %v3142, 4294901760
    %3144 = vmatpush1.msra.mxu0 %v3143
    %3145 = vmatprep.subr.mxu0 0.0
    %v3146 = vand.u32 %v188, 4294901760
    %v3147 = vsub.f32 %v188, %v3146
    %v3148 = vand.u32 %v3147, 4294901760
    %v3149 = vsub.f32 %v3147, %v3148
    %v3150 = vand.u32 %v3149, 4294901760
    %3151 = vmatpush1.msra.mxu0 %v3150
    %3152 = vmatprep.subr.mxu0 0.0
    %v3153 = vand.u32 %v189, 4294901760
    %v3154 = vsub.f32 %v189, %v3153
    %v3155 = vand.u32 %v3154, 4294901760
    %v3156 = vsub.f32 %v3154, %v3155
    %v3157 = vand.u32 %v3156, 4294901760
    %3158 = vmatpush1.msra.mxu0 %v3157
    %3159 = vmatprep.subr.mxu0 0.0
    %v3160 = vand.u32 %v190, 4294901760
    %v3161 = vsub.f32 %v190, %v3160
    %v3162 = vand.u32 %v3161, 4294901760
    %v3163 = vsub.f32 %v3161, %v3162
    %v3164 = vand.u32 %v3163, 4294901760
    %3165 = vmatpush1.msra.mxu0 %v3164
    %3166 = vmatprep.subr.mxu0 0.0
    %v3167 = vand.u32 %v191, 4294901760
    %v3168 = vsub.f32 %v191, %v3167
    %v3169 = vand.u32 %v3168, 4294901760
    %v3170 = vsub.f32 %v3168, %v3169
    %v3171 = vand.u32 %v3170, 4294901760
    %3172 = vmatpush1.msra.mxu0 %v3171
    %3173 = vmatprep.subr.mxu0 0.0
    %v3174 = vand.u32 %v192, 4294901760
    %v3175 = vsub.f32 %v192, %v3174
    %v3176 = vand.u32 %v3175, 4294901760
    %v3177 = vsub.f32 %v3175, %v3176
    %v3178 = vand.u32 %v3177, 4294901760
    %3179 = vmatpush1.msra.mxu0 %v3178
    %3180 = vmatprep.subr.mxu0 0.0
    %v3181 = vand.u32 %v193, 4294901760
    %v3182 = vsub.f32 %v193, %v3181
    %v3183 = vand.u32 %v3182, 4294901760
    %v3184 = vsub.f32 %v3182, %v3183
    %v3185 = vand.u32 %v3184, 4294901760
    %3186 = vmatpush1.msra.mxu0 %v3185
    %3187 = vmatprep.subr.mxu0 0.0
    %v3188 = vand.u32 %v194, 4294901760
    %v3189 = vsub.f32 %v194, %v3188
    %v3190 = vand.u32 %v3189, 4294901760
    %v3191 = vsub.f32 %v3189, %v3190
    %v3192 = vand.u32 %v3191, 4294901760
    %3193 = vmatpush1.msra.mxu0 %v3192
    %3194 = vmatprep.subr.mxu0 0.0
    %v3195 = vand.u32 %v195, 4294901760
    %v3196 = vsub.f32 %v195, %v3195
    %v3197 = vand.u32 %v3196, 4294901760
    %v3198 = vsub.f32 %v3196, %v3197
    %v3199 = vand.u32 %v3198, 4294901760
    %3200 = vmatpush1.msra.mxu0 %v3199
    %3201 = vmatprep.subr.mxu0 0.0
    %v3202 = vand.u32 %v196, 4294901760
    %v3203 = vsub.f32 %v196, %v3202
    %v3204 = vand.u32 %v3203, 4294901760
    %v3205 = vsub.f32 %v3203, %v3204
    %v3206 = vand.u32 %v3205, 4294901760
    %3207 = vmatpush1.msra.mxu0 %v3206
    %3208 = vmatprep.subr.mxu0 0.0
    %v3209 = vand.u32 %v197, 4294901760
    %v3210 = vsub.f32 %v197, %v3209
    %v3211 = vand.u32 %v3210, 4294901760
    %v3212 = vsub.f32 %v3210, %v3211
    %v3213 = vand.u32 %v3212, 4294901760
    %3214 = vmatpush1.msra.mxu0 %v3213
    %v3215 = vand.u32 %v284, 4294901760
    %3216 = vmatprep.mubr.f32.mxu0 %v3215
    %v3217 = vand.u32 %v283, 4294901760
    %3218 = vmatmul.mubr.f32.gmra.mrb[0].mxu0 %v3217
    %v3219 = vpop.f32.mrb[0].mxu0
    %v3220 = vadd.f32 %v2988, %v3219
    %v3221 = vpop.f32.mrb[0].mxu0
    %3222 = vdwg.mxu0
    %3223 = vmatprep.subr.mxu0 0.0
    %v3224 = vand.u32 %v166, 4294901760
    %v3225 = vsub.f32 %v166, %v3224
    %3226 = vmatpush1.msra.mxu0 %v3225
    %3227 = vmatprep.subr.mxu0 0.0
    %v3228 = vand.u32 %v167, 4294901760
    %v3229 = vsub.f32 %v167, %v3228
    %3230 = vmatpush1.msra.mxu0 %v3229
    %3231 = vmatprep.subr.mxu0 0.0
    %v3232 = vand.u32 %v168, 4294901760
    %v3233 = vsub.f32 %v168, %v3232
    %3234 = vmatpush1.msra.mxu0 %v3233
    %3235 = vmatprep.subr.mxu0 0.0
    %v3236 = vand.u32 %v169, 4294901760
    %v3237 = vsub.f32 %v169, %v3236
    %3238 = vmatpush1.msra.mxu0 %v3237
    %3239 = vmatprep.subr.mxu0 0.0
    %v3240 = vand.u32 %v170, 4294901760
    %v3241 = vsub.f32 %v170, %v3240
    %3242 = vmatpush1.msra.mxu0 %v3241
    %3243 = vmatprep.subr.mxu0 0.0
    %v3244 = vand.u32 %v171, 4294901760
    %v3245 = vsub.f32 %v171, %v3244
    %3246 = vmatpush1.msra.mxu0 %v3245
    %3247 = vmatprep.subr.mxu0 0.0
    %v3248 = vand.u32 %v172, 4294901760
    %v3249 = vsub.f32 %v172, %v3248
    %3250 = vmatpush1.msra.mxu0 %v3249
    %3251 = vmatprep.subr.mxu0 0.0
    %v3252 = vand.u32 %v173, 4294901760
    %v3253 = vsub.f32 %v173, %v3252
    %3254 = vmatpush1.msra.mxu0 %v3253
    %3255 = vmatprep.subr.mxu0 0.0
    %v3256 = vand.u32 %v174, 4294901760
    %v3257 = vsub.f32 %v174, %v3256
    %3258 = vmatpush1.msra.mxu0 %v3257
    %3259 = vmatprep.subr.mxu0 0.0
    %v3260 = vand.u32 %v175, 4294901760
    %v3261 = vsub.f32 %v175, %v3260
    %3262 = vmatpush1.msra.mxu0 %v3261
    %3263 = vmatprep.subr.mxu0 0.0
    %v3264 = vand.u32 %v176, 4294901760
    %v3265 = vsub.f32 %v176, %v3264
    %3266 = vmatpush1.msra.mxu0 %v3265
    %3267 = vmatprep.subr.mxu0 0.0
    %v3268 = vand.u32 %v177, 4294901760
    %v3269 = vsub.f32 %v177, %v3268
    %3270 = vmatpush1.msra.mxu0 %v3269
    %3271 = vmatprep.subr.mxu0 0.0
    %v3272 = vand.u32 %v178, 4294901760
    %v3273 = vsub.f32 %v178, %v3272
    %3274 = vmatpush1.msra.mxu0 %v3273
    %3275 = vmatprep.subr.mxu0 0.0
    %v3276 = vand.u32 %v179, 4294901760
    %v3277 = vsub.f32 %v179, %v3276
    %3278 = vmatpush1.msra.mxu0 %v3277
    %3279 = vmatprep.subr.mxu0 0.0
    %v3280 = vand.u32 %v180, 4294901760
    %v3281 = vsub.f32 %v180, %v3280
    %3282 = vmatpush1.msra.mxu0 %v3281
    %3283 = vmatprep.subr.mxu0 0.0
    %v3284 = vand.u32 %v181, 4294901760
    %v3285 = vsub.f32 %v181, %v3284
    %3286 = vmatpush1.msra.mxu0 %v3285
    %3287 = vmatprep.subr.mxu0 0.0
    %v3288 = vand.u32 %v182, 4294901760
    %v3289 = vsub.f32 %v182, %v3288
    %3290 = vmatpush1.msra.mxu0 %v3289
    %3291 = vmatprep.subr.mxu0 0.0
    %v3292 = vand.u32 %v183, 4294901760
    %v3293 = vsub.f32 %v183, %v3292
    %3294 = vmatpush1.msra.mxu0 %v3293
    %3295 = vmatprep.subr.mxu0 0.0
    %v3296 = vand.u32 %v184, 4294901760
    %v3297 = vsub.f32 %v184, %v3296
    %3298 = vmatpush1.msra.mxu0 %v3297
    %3299 = vmatprep.subr.mxu0 0.0
    %v3300 = vand.u32 %v185, 4294901760
    %v3301 = vsub.f32 %v185, %v3300
    %3302 = vmatpush1.msra.mxu0 %v3301
    %3303 = vmatprep.subr.mxu0 0.0
    %v3304 = vand.u32 %v186, 4294901760
    %v3305 = vsub.f32 %v186, %v3304
    %3306 = vmatpush1.msra.mxu0 %v3305
    %3307 = vmatprep.subr.mxu0 0.0
    %v3308 = vand.u32 %v187, 4294901760
    %v3309 = vsub.f32 %v187, %v3308
    %3310 = vmatpush1.msra.mxu0 %v3309
    %3311 = vmatprep.subr.mxu0 0.0
    %v3312 = vand.u32 %v188, 4294901760
    %v3313 = vsub.f32 %v188, %v3312
    %3314 = vmatpush1.msra.mxu0 %v3313
    %3315 = vmatprep.subr.mxu0 0.0
    %v3316 = vand.u32 %v189, 4294901760
    %v3317 = vsub.f32 %v189, %v3316
    %3318 = vmatpush1.msra.mxu0 %v3317
    %3319 = vmatprep.subr.mxu0 0.0
    %v3320 = vand.u32 %v190, 4294901760
    %v3321 = vsub.f32 %v190, %v3320
    %3322 = vmatpush1.msra.mxu0 %v3321
    %3323 = vmatprep.subr.mxu0 0.0
    %v3324 = vand.u32 %v191, 4294901760
    %v3325 = vsub.f32 %v191, %v3324
    %3326 = vmatpush1.msra.mxu0 %v3325
    %3327 = vmatprep.subr.mxu0 0.0
    %v3328 = vand.u32 %v192, 4294901760
    %v3329 = vsub.f32 %v192, %v3328
    %3330 = vmatpush1.msra.mxu0 %v3329
    %3331 = vmatprep.subr.mxu0 0.0
    %v3332 = vand.u32 %v193, 4294901760
    %v3333 = vsub.f32 %v193, %v3332
    %3334 = vmatpush1.msra.mxu0 %v3333
    %3335 = vmatprep.subr.mxu0 0.0
    %v3336 = vand.u32 %v194, 4294901760
    %v3337 = vsub.f32 %v194, %v3336
    %3338 = vmatpush1.msra.mxu0 %v3337
    %3339 = vmatprep.subr.mxu0 0.0
    %v3340 = vand.u32 %v195, 4294901760
    %v3341 = vsub.f32 %v195, %v3340
    %3342 = vmatpush1.msra.mxu0 %v3341
    %3343 = vmatprep.subr.mxu0 0.0
    %v3344 = vand.u32 %v196, 4294901760
    %v3345 = vsub.f32 %v196, %v3344
    %3346 = vmatpush1.msra.mxu0 %v3345
    %3347 = vmatprep.subr.mxu0 0.0
    %v3348 = vand.u32 %v197, 4294901760
    %v3349 = vsub.f32 %v197, %v3348
    %3350 = vmatpush1.msra.mxu0 %v3349
    %v3351 = vand.u32 %v284, 4294901760
    %v3352 = vsub.f32 %v284, %v3351
    %3353 = vmatprep.mubr.f32.mxu0 %v3352
    %v3354 = vand.u32 %v283, 4294901760
    %v3355 = vsub.f32 %v283, %v3354
    %3356 = vmatmul.mubr.f32.gmra.mrb[0].mxu0 %v3355
    %v3357 = vpop.f32.mrb[0].mxu0
    %v3358 = vadd.f32 %v3220, %v3357
    %v3359 = vpop.f32.mrb[0].mxu0
    %3360 = vdwg.mxu0
    %3361 = vmatprep.subr.mxu0 0.0
    %v3362 = vand.u32 %v166, 4294901760
    %3363 = vmatpush1.msra.mxu0 %v3362
    %3364 = vmatprep.subr.mxu0 0.0
    %v3365 = vand.u32 %v167, 4294901760
    %3366 = vmatpush1.msra.mxu0 %v3365
    %3367 = vmatprep.subr.mxu0 0.0
    %v3368 = vand.u32 %v168, 4294901760
    %3369 = vmatpush1.msra.mxu0 %v3368
    %3370 = vmatprep.subr.mxu0 0.0
    %v3371 = vand.u32 %v169, 4294901760
    %3372 = vmatpush1.msra.mxu0 %v3371
    %3373 = vmatprep.subr.mxu0 0.0
    %v3374 = vand.u32 %v170, 4294901760
    %3375 = vmatpush1.msra.mxu0 %v3374
    %3376 = vmatprep.subr.mxu0 0.0
    %v3377 = vand.u32 %v171, 4294901760
    %3378 = vmatpush1.msra.mxu0 %v3377
    %3379 = vmatprep.subr.mxu0 0.0
    %v3380 = vand.u32 %v172, 4294901760
    %3381 = vmatpush1.msra.mxu0 %v3380
    %3382 = vmatprep.subr.mxu0 0.0
    %v3383 = vand.u32 %v173, 4294901760
    %3384 = vmatpush1.msra.mxu0 %v3383
    %3385 = vmatprep.subr.mxu0 0.0
    %v3386 = vand.u32 %v174, 4294901760
    %3387 = vmatpush1.msra.mxu0 %v3386
    %3388 = vmatprep.subr.mxu0 0.0
    %v3389 = vand.u32 %v175, 4294901760
    %3390 = vmatpush1.msra.mxu0 %v3389
    %3391 = vmatprep.subr.mxu0 0.0
    %v3392 = vand.u32 %v176, 4294901760
    %3393 = vmatpush1.msra.mxu0 %v3392
    %3394 = vmatprep.subr.mxu0 0.0
    %v3395 = vand.u32 %v177, 4294901760
    %3396 = vmatpush1.msra.mxu0 %v3395
    %3397 = vmatprep.subr.mxu0 0.0
    %v3398 = vand.u32 %v178, 4294901760
    %3399 = vmatpush1.msra.mxu0 %v3398
    %3400 = vmatprep.subr.mxu0 0.0
    %v3401 = vand.u32 %v179, 4294901760
    %3402 = vmatpush1.msra.mxu0 %v3401
    %3403 = vmatprep.subr.mxu0 0.0
    %v3404 = vand.u32 %v180, 4294901760
    %3405 = vmatpush1.msra.mxu0 %v3404
    %3406 = vmatprep.subr.mxu0 0.0
    %v3407 = vand.u32 %v181, 4294901760
    %3408 = vmatpush1.msra.mxu0 %v3407
    %3409 = vmatprep.subr.mxu0 0.0
    %v3410 = vand.u32 %v182, 4294901760
    %3411 = vmatpush1.msra.mxu0 %v3410
    %3412 = vmatprep.subr.mxu0 0.0
    %v3413 = vand.u32 %v183, 4294901760
    %3414 = vmatpush1.msra.mxu0 %v3413
    %3415 = vmatprep.subr.mxu0 0.0
    %v3416 = vand.u32 %v184, 4294901760
    %3417 = vmatpush1.msra.mxu0 %v3416
    %3418 = vmatprep.subr.mxu0 0.0
    %v3419 = vand.u32 %v185, 4294901760
    %3420 = vmatpush1.msra.mxu0 %v3419
    %3421 = vmatprep.subr.mxu0 0.0
    %v3422 = vand.u32 %v186, 4294901760
    %3423 = vmatpush1.msra.mxu0 %v3422
    %3424 = vmatprep.subr.mxu0 0.0
    %v3425 = vand.u32 %v187, 4294901760
    %3426 = vmatpush1.msra.mxu0 %v3425
    %3427 = vmatprep.subr.mxu0 0.0
    %v3428 = vand.u32 %v188, 4294901760
    %3429 = vmatpush1.msra.mxu0 %v3428
    %3430 = vmatprep.subr.mxu0 0.0
    %v3431 = vand.u32 %v189, 4294901760
    %3432 = vmatpush1.msra.mxu0 %v3431
    %3433 = vmatprep.subr.mxu0 0.0
    %v3434 = vand.u32 %v190, 4294901760
    %3435 = vmatpush1.msra.mxu0 %v3434
    %3436 = vmatprep.subr.mxu0 0.0
    %v3437 = vand.u32 %v191, 4294901760
    %3438 = vmatpush1.msra.mxu0 %v3437
    %3439 = vmatprep.subr.mxu0 0.0
    %v3440 = vand.u32 %v192, 4294901760
    %3441 = vmatpush1.msra.mxu0 %v3440
    %3442 = vmatprep.subr.mxu0 0.0
    %v3443 = vand.u32 %v193, 4294901760
    %3444 = vmatpush1.msra.mxu0 %v3443
    %3445 = vmatprep.subr.mxu0 0.0
    %v3446 = vand.u32 %v194, 4294901760
    %3447 = vmatpush1.msra.mxu0 %v3446
    %3448 = vmatprep.subr.mxu0 0.0
    %v3449 = vand.u32 %v195, 4294901760
    %3450 = vmatpush1.msra.mxu0 %v3449
    %3451 = vmatprep.subr.mxu0 0.0
    %v3452 = vand.u32 %v196, 4294901760
    %3453 = vmatpush1.msra.mxu0 %v3452
    %3454 = vmatprep.subr.mxu0 0.0
    %v3455 = vand.u32 %v197, 4294901760
    %3456 = vmatpush1.msra.mxu0 %v3455
    %v3457 = vand.u32 %v284, 4294901760
    %v3458 = vsub.f32 %v284, %v3457
    %v3459 = vand.u32 %v3458, 4294901760
    %3460 = vmatprep.mubr.f32.mxu0 %v3459
    %v3461 = vand.u32 %v283, 4294901760
    %v3462 = vsub.f32 %v283, %v3461
    %v3463 = vand.u32 %v3462, 4294901760
    %3464 = vmatmul.mubr.f32.gmra.mrb[0].mxu0 %v3463
    %v3465 = vpop.f32.mrb[0].mxu0
    %v3466 = vadd.f32 %v3358, %v3465
    %v3467 = vpop.f32.mrb[0].mxu0
    %3468 = vdwg.mxu0
    %3469 = vmatprep.subr.mxu0 0.0
    %v3470 = vand.u32 %v166, 4294901760
    %v3471 = vsub.f32 %v166, %v3470
    %v3472 = vand.u32 %v3471, 4294901760
    %3473 = vmatpush1.msra.mxu0 %v3472
    %3474 = vmatprep.subr.mxu0 0.0
    %v3475 = vand.u32 %v167, 4294901760
    %v3476 = vsub.f32 %v167, %v3475
    %v3477 = vand.u32 %v3476, 4294901760
    %3478 = vmatpush1.msra.mxu0 %v3477
    %3479 = vmatprep.subr.mxu0 0.0
    %v3480 = vand.u32 %v168, 4294901760
    %v3481 = vsub.f32 %v168, %v3480
    %v3482 = vand.u32 %v3481, 4294901760
    %3483 = vmatpush1.msra.mxu0 %v3482
    %3484 = vmatprep.subr.mxu0 0.0
    %v3485 = vand.u32 %v169, 4294901760
    %v3486 = vsub.f32 %v169, %v3485
    %v3487 = vand.u32 %v3486, 4294901760
    %3488 = vmatpush1.msra.mxu0 %v3487
    %3489 = vmatprep.subr.mxu0 0.0
    %v3490 = vand.u32 %v170, 4294901760
    %v3491 = vsub.f32 %v170, %v3490
    %v3492 = vand.u32 %v3491, 4294901760
    %3493 = vmatpush1.msra.mxu0 %v3492
    %3494 = vmatprep.subr.mxu0 0.0
    %v3495 = vand.u32 %v171, 4294901760
    %v3496 = vsub.f32 %v171, %v3495
    %v3497 = vand.u32 %v3496, 4294901760
    %3498 = vmatpush1.msra.mxu0 %v3497
    %3499 = vmatprep.subr.mxu0 0.0
    %v3500 = vand.u32 %v172, 4294901760
    %v3501 = vsub.f32 %v172, %v3500
    %v3502 = vand.u32 %v3501, 4294901760
    %3503 = vmatpush1.msra.mxu0 %v3502
    %3504 = vmatprep.subr.mxu0 0.0
    %v3505 = vand.u32 %v173, 4294901760
    %v3506 = vsub.f32 %v173, %v3505
    %v3507 = vand.u32 %v3506, 4294901760
    %3508 = vmatpush1.msra.mxu0 %v3507
    %3509 = vmatprep.subr.mxu0 0.0
    %v3510 = vand.u32 %v174, 4294901760
    %v3511 = vsub.f32 %v174, %v3510
    %v3512 = vand.u32 %v3511, 4294901760
    %3513 = vmatpush1.msra.mxu0 %v3512
    %3514 = vmatprep.subr.mxu0 0.0
    %v3515 = vand.u32 %v175, 4294901760
    %v3516 = vsub.f32 %v175, %v3515
    %v3517 = vand.u32 %v3516, 4294901760
    %3518 = vmatpush1.msra.mxu0 %v3517
    %3519 = vmatprep.subr.mxu0 0.0
    %v3520 = vand.u32 %v176, 4294901760
    %v3521 = vsub.f32 %v176, %v3520
    %v3522 = vand.u32 %v3521, 4294901760
    %3523 = vmatpush1.msra.mxu0 %v3522
    %3524 = vmatprep.subr.mxu0 0.0
    %v3525 = vand.u32 %v177, 4294901760
    %v3526 = vsub.f32 %v177, %v3525
    %v3527 = vand.u32 %v3526, 4294901760
    %3528 = vmatpush1.msra.mxu0 %v3527
    %3529 = vmatprep.subr.mxu0 0.0
    %v3530 = vand.u32 %v178, 4294901760
    %v3531 = vsub.f32 %v178, %v3530
    %v3532 = vand.u32 %v3531, 4294901760
    %3533 = vmatpush1.msra.mxu0 %v3532
    %3534 = vmatprep.subr.mxu0 0.0
    %v3535 = vand.u32 %v179, 4294901760
    %v3536 = vsub.f32 %v179, %v3535
    %v3537 = vand.u32 %v3536, 4294901760
    %3538 = vmatpush1.msra.mxu0 %v3537
    %3539 = vmatprep.subr.mxu0 0.0
    %v3540 = vand.u32 %v180, 4294901760
    %v3541 = vsub.f32 %v180, %v3540
    %v3542 = vand.u32 %v3541, 4294901760
    %3543 = vmatpush1.msra.mxu0 %v3542
    %3544 = vmatprep.subr.mxu0 0.0
    %v3545 = vand.u32 %v181, 4294901760
    %v3546 = vsub.f32 %v181, %v3545
    %v3547 = vand.u32 %v3546, 4294901760
    %3548 = vmatpush1.msra.mxu0 %v3547
    %3549 = vmatprep.subr.mxu0 0.0
    %v3550 = vand.u32 %v182, 4294901760
    %v3551 = vsub.f32 %v182, %v3550
    %v3552 = vand.u32 %v3551, 4294901760
    %3553 = vmatpush1.msra.mxu0 %v3552
    %3554 = vmatprep.subr.mxu0 0.0
    %v3555 = vand.u32 %v183, 4294901760
    %v3556 = vsub.f32 %v183, %v3555
    %v3557 = vand.u32 %v3556, 4294901760
    %3558 = vmatpush1.msra.mxu0 %v3557
    %3559 = vmatprep.subr.mxu0 0.0
    %v3560 = vand.u32 %v184, 4294901760
    %v3561 = vsub.f32 %v184, %v3560
    %v3562 = vand.u32 %v3561, 4294901760
    %3563 = vmatpush1.msra.mxu0 %v3562
    %3564 = vmatprep.subr.mxu0 0.0
    %v3565 = vand.u32 %v185, 4294901760
    %v3566 = vsub.f32 %v185, %v3565
    %v3567 = vand.u32 %v3566, 4294901760
    %3568 = vmatpush1.msra.mxu0 %v3567
    %3569 = vmatprep.subr.mxu0 0.0
    %v3570 = vand.u32 %v186, 4294901760
    %v3571 = vsub.f32 %v186, %v3570
    %v3572 = vand.u32 %v3571, 4294901760
    %3573 = vmatpush1.msra.mxu0 %v3572
    %3574 = vmatprep.subr.mxu0 0.0
    %v3575 = vand.u32 %v187, 4294901760
    %v3576 = vsub.f32 %v187, %v3575
    %v3577 = vand.u32 %v3576, 4294901760
    %3578 = vmatpush1.msra.mxu0 %v3577
    %3579 = vmatprep.subr.mxu0 0.0
    %v3580 = vand.u32 %v188, 4294901760
    %v3581 = vsub.f32 %v188, %v3580
    %v3582 = vand.u32 %v3581, 4294901760
    %3583 = vmatpush1.msra.mxu0 %v3582
    %3584 = vmatprep.subr.mxu0 0.0
    %v3585 = vand.u32 %v189, 4294901760
    %v3586 = vsub.f32 %v189, %v3585
    %v3587 = vand.u32 %v3586, 4294901760
    %3588 = vmatpush1.msra.mxu0 %v3587
    %3589 = vmatprep.subr.mxu0 0.0
    %v3590 = vand.u32 %v190, 4294901760
    %v3591 = vsub.f32 %v190, %v3590
    %v3592 = vand.u32 %v3591, 4294901760
    %3593 = vmatpush1.msra.mxu0 %v3592
    %3594 = vmatprep.subr.mxu0 0.0
    %v3595 = vand.u32 %v191, 4294901760
    %v3596 = vsub.f32 %v191, %v3595
    %v3597 = vand.u32 %v3596, 4294901760
    %3598 = vmatpush1.msra.mxu0 %v3597
    %3599 = vmatprep.subr.mxu0 0.0
    %v3600 = vand.u32 %v192, 4294901760
    %v3601 = vsub.f32 %v192, %v3600
    %v3602 = vand.u32 %v3601, 4294901760
    %3603 = vmatpush1.msra.mxu0 %v3602
    %3604 = vmatprep.subr.mxu0 0.0
    %v3605 = vand.u32 %v193, 4294901760
    %v3606 = vsub.f32 %v193, %v3605
    %v3607 = vand.u32 %v3606, 4294901760
    %3608 = vmatpush1.msra.mxu0 %v3607
    %3609 = vmatprep.subr.mxu0 0.0
    %v3610 = vand.u32 %v194, 4294901760
    %v3611 = vsub.f32 %v194, %v3610
    %v3612 = vand.u32 %v3611, 4294901760
    %3613 = vmatpush1.msra.mxu0 %v3612
    %3614 = vmatprep.subr.mxu0 0.0
    %v3615 = vand.u32 %v195, 4294901760
    %v3616 = vsub.f32 %v195, %v3615
    %v3617 = vand.u32 %v3616, 4294901760
    %3618 = vmatpush1.msra.mxu0 %v3617
    %3619 = vmatprep.subr.mxu0 0.0
    %v3620 = vand.u32 %v196, 4294901760
    %v3621 = vsub.f32 %v196, %v3620
    %v3622 = vand.u32 %v3621, 4294901760
    %3623 = vmatpush1.msra.mxu0 %v3622
    %3624 = vmatprep.subr.mxu0 0.0
    %v3625 = vand.u32 %v197, 4294901760
    %v3626 = vsub.f32 %v197, %v3625
    %v3627 = vand.u32 %v3626, 4294901760
    %3628 = vmatpush1.msra.mxu0 %v3627
    %v3629 = vand.u32 %v284, 4294901760
    %3630 = vmatprep.mubr.f32.mxu0 %v3629
    %v3631 = vand.u32 %v283, 4294901760
    %3632 = vmatmul.mubr.f32.gmra.mrb[0].mxu0 %v3631
    %v3633 = vpop.f32.mrb[0].mxu0
    %v3634 = vadd.f32 %v3466, %v3633
    %v3635 = vpop.f32.mrb[0].mxu0
    %3636 = vdwg.mxu0
    %3637 = vmatprep.subr.mxu0 0.0
    %v3638 = vand.u32 %v166, 4294901760
    %3639 = vmatpush1.msra.mxu0 %v3638
    %3640 = vmatprep.subr.mxu0 0.0
    %v3641 = vand.u32 %v167, 4294901760
    %3642 = vmatpush1.msra.mxu0 %v3641
    %3643 = vmatprep.subr.mxu0 0.0
    %v3644 = vand.u32 %v168, 4294901760
    %3645 = vmatpush1.msra.mxu0 %v3644
    %3646 = vmatprep.subr.mxu0 0.0
    %v3647 = vand.u32 %v169, 4294901760
    %3648 = vmatpush1.msra.mxu0 %v3647
    %3649 = vmatprep.subr.mxu0 0.0
    %v3650 = vand.u32 %v170, 4294901760
    %3651 = vmatpush1.msra.mxu0 %v3650
    %3652 = vmatprep.subr.mxu0 0.0
    %v3653 = vand.u32 %v171, 4294901760
    %3654 = vmatpush1.msra.mxu0 %v3653
    %3655 = vmatprep.subr.mxu0 0.0
    %v3656 = vand.u32 %v172, 4294901760
    %3657 = vmatpush1.msra.mxu0 %v3656
    %3658 = vmatprep.subr.mxu0 0.0
    %v3659 = vand.u32 %v173, 4294901760
    %3660 = vmatpush1.msra.mxu0 %v3659
    %3661 = vmatprep.subr.mxu0 0.0
    %v3662 = vand.u32 %v174, 4294901760
    %3663 = vmatpush1.msra.mxu0 %v3662
    %3664 = vmatprep.subr.mxu0 0.0
    %v3665 = vand.u32 %v175, 4294901760
    %3666 = vmatpush1.msra.mxu0 %v3665
    %3667 = vmatprep.subr.mxu0 0.0
    %v3668 = vand.u32 %v176, 4294901760
    %3669 = vmatpush1.msra.mxu0 %v3668
    %3670 = vmatprep.subr.mxu0 0.0
    %v3671 = vand.u32 %v177, 4294901760
    %3672 = vmatpush1.msra.mxu0 %v3671
    %3673 = vmatprep.subr.mxu0 0.0
    %v3674 = vand.u32 %v178, 4294901760
    %3675 = vmatpush1.msra.mxu0 %v3674
    %3676 = vmatprep.subr.mxu0 0.0
    %v3677 = vand.u32 %v179, 4294901760
    %3678 = vmatpush1.msra.mxu0 %v3677
    %3679 = vmatprep.subr.mxu0 0.0
    %v3680 = vand.u32 %v180, 4294901760
    %3681 = vmatpush1.msra.mxu0 %v3680
    %3682 = vmatprep.subr.mxu0 0.0
    %v3683 = vand.u32 %v181, 4294901760
    %3684 = vmatpush1.msra.mxu0 %v3683
    %3685 = vmatprep.subr.mxu0 0.0
    %v3686 = vand.u32 %v182, 4294901760
    %3687 = vmatpush1.msra.mxu0 %v3686
    %3688 = vmatprep.subr.mxu0 0.0
    %v3689 = vand.u32 %v183, 4294901760
    %3690 = vmatpush1.msra.mxu0 %v3689
    %3691 = vmatprep.subr.mxu0 0.0
    %v3692 = vand.u32 %v184, 4294901760
    %3693 = vmatpush1.msra.mxu0 %v3692
    %3694 = vmatprep.subr.mxu0 0.0
    %v3695 = vand.u32 %v185, 4294901760
    %3696 = vmatpush1.msra.mxu0 %v3695
    %3697 = vmatprep.subr.mxu0 0.0
    %v3698 = vand.u32 %v186, 4294901760
    %3699 = vmatpush1.msra.mxu0 %v3698
    %3700 = vmatprep.subr.mxu0 0.0
    %v3701 = vand.u32 %v187, 4294901760
    %3702 = vmatpush1.msra.mxu0 %v3701
    %3703 = vmatprep.subr.mxu0 0.0
    %v3704 = vand.u32 %v188, 4294901760
    %3705 = vmatpush1.msra.mxu0 %v3704
    %3706 = vmatprep.subr.mxu0 0.0
    %v3707 = vand.u32 %v189, 4294901760
    %3708 = vmatpush1.msra.mxu0 %v3707
    %3709 = vmatprep.subr.mxu0 0.0
    %v3710 = vand.u32 %v190, 4294901760
    %3711 = vmatpush1.msra.mxu0 %v3710
    %3712 = vmatprep.subr.mxu0 0.0
    %v3713 = vand.u32 %v191, 4294901760
    %3714 = vmatpush1.msra.mxu0 %v3713
    %3715 = vmatprep.subr.mxu0 0.0
    %v3716 = vand.u32 %v192, 4294901760
    %3717 = vmatpush1.msra.mxu0 %v3716
    %3718 = vmatprep.subr.mxu0 0.0
    %v3719 = vand.u32 %v193, 4294901760
    %3720 = vmatpush1.msra.mxu0 %v3719
    %3721 = vmatprep.subr.mxu0 0.0
    %v3722 = vand.u32 %v194, 4294901760
    %3723 = vmatpush1.msra.mxu0 %v3722
    %3724 = vmatprep.subr.mxu0 0.0
    %v3725 = vand.u32 %v195, 4294901760
    %3726 = vmatpush1.msra.mxu0 %v3725
    %3727 = vmatprep.subr.mxu0 0.0
    %v3728 = vand.u32 %v196, 4294901760
    %3729 = vmatpush1.msra.mxu0 %v3728
    %3730 = vmatprep.subr.mxu0 0.0
    %v3731 = vand.u32 %v197, 4294901760
    %3732 = vmatpush1.msra.mxu0 %v3731
    %v3733 = vand.u32 %v284, 4294901760
    %3734 = vmatprep.mubr.f32.mxu0 %v3733
    %v3735 = vand.u32 %v283, 4294901760
    %3736 = vmatmul.mubr.f32.gmra.mrb[0].mxu0 %v3735
    %v3737 = vpop.f32.mrb[0].mxu0
    %v3738 = vadd.f32 %v3634, %v3737
    %v3739 = vpop.f32.mrb[0].mxu0
    %3740 = vdwg.mxu0
    %v3741 = vmax.f32 %v3738, 0.0
    %v3742 = vld [vmem:[#allocation7] sm:$0xff]
    %v3743 = vld [vmem:[#allocation7 + $0x8] sm:$0xff]
    %v3744 = vld [vmem:[#allocation7 + $0x10] sm:$0xff]
    %v3745 = vld [vmem:[#allocation7 + $0x18] sm:$0xff]
    %v3746 = vld [vmem:[#allocation7 + $0x20] sm:$0xff]
    %v3747 = vld [vmem:[#allocation7 + $0x28] sm:$0xff]
    %v3748 = vld [vmem:[#allocation7 + $0x30] sm:$0xff]
    %v3749 = vld [vmem:[#allocation7 + $0x38] sm:$0xff]
    %v3750 = vld [vmem:[#allocation7 + $0x40] sm:$0xff]
    %v3751 = vld [vmem:[#allocation7 + $0x48] sm:$0xff]
    %v3752 = vld [vmem:[#allocation7 + $0x50] sm:$0xff]
    %v3753 = vld [vmem:[#allocation7 + $0x58] sm:$0xff]
    %v3754 = vld [vmem:[#allocation7 + $0x60] sm:$0xff]
    %v3755 = vld [vmem:[#allocation7 + $0x68] sm:$0xff]
    %v3756 = vld [vmem:[#allocation7 + $0x70] sm:$0xff]
    %v3757 = vld [vmem:[#allocation7 + $0x78] sm:$0xff]
    %v3758 = vld [vmem:[%s4] sm:$0x1]
    %v3760 = vlaneseq
    %v3761 = vshrl.u32 %v3760, 7
    %v3762 = vsub.s32 0, %v3761
    %v3763 = vrot.slane %v3758, %v3762
    %3765 = vmatprep.subr.mxu0 0.0
    %v3766 = vand.u32 %v3742, 4294901760
    %3767 = vmatpush1.msra.mxu0 %v3766
    %3768 = vmatprep.subr.mxu0 0.0
    %v3769 = vand.u32 %v3743, 4294901760
    %3770 = vmatpush1.msra.mxu0 %v3769
    %3771 = vmatprep.subr.mxu0 0.0
    %v3772 = vand.u32 %v3744, 4294901760
    %3773 = vmatpush1.msra.mxu0 %v3772
    %3774 = vmatprep.subr.mxu0 0.0
    %v3775 = vand.u32 %v3745, 4294901760
    %3776 = vmatpush1.msra.mxu0 %v3775
    %3777 = vmatprep.subr.mxu0 0.0
    %v3778 = vand.u32 %v3746, 4294901760
    %3779 = vmatpush1.msra.mxu0 %v3778
    %3780 = vmatprep.subr.mxu0 0.0
    %v3781 = vand.u32 %v3747, 4294901760
    %3782 = vmatpush1.msra.mxu0 %v3781
    %3783 = vmatprep.subr.mxu0 0.0
    %v3784 = vand.u32 %v3748, 4294901760
    %3785 = vmatpush1.msra.mxu0 %v3784
    %3786 = vmatprep.subr.mxu0 0.0
    %v3787 = vand.u32 %v3749, 4294901760
    %3788 = vmatpush1.msra.mxu0 %v3787
    %3789 = vmatprep.subr.mxu0 0.0
    %v3790 = vand.u32 %v3750, 4294901760
    %3791 = vmatpush1.msra.mxu0 %v3790
    %3792 = vmatprep.subr.mxu0 0.0
    %v3793 = vand.u32 %v3751, 4294901760
    %3794 = vmatpush1.msra.mxu0 %v3793
    %3795 = vmatprep.subr.mxu0 0.0
    %v3796 = vand.u32 %v3752, 4294901760
    %3797 = vmatpush1.msra.mxu0 %v3796
    %3798 = vmatprep.subr.mxu0 0.0
    %v3799 = vand.u32 %v3753, 4294901760
    %3800 = vmatpush1.msra.mxu0 %v3799
    %3801 = vmatprep.subr.mxu0 0.0
    %v3802 = vand.u32 %v3754, 4294901760
    %3803 = vmatpush1.msra.mxu0 %v3802
    %3804 = vmatprep.subr.mxu0 0.0
    %v3805 = vand.u32 %v3755, 4294901760
    %3806 = vmatpush1.msra.mxu0 %v3805
    %3807 = vmatprep.subr.mxu0 0.0
    %v3808 = vand.u32 %v3756, 4294901760
    %3809 = vmatpush1.msra.mxu0 %v3808
    %3810 = vmatprep.subr.mxu0 0.0
    %v3811 = vand.u32 %v3757, 4294901760
    %3812 = vmatpush1.msra.mxu0 %v3811
    %3813 = vmatprep.subr.mxu0 0.0
    %3814 = vmatpush1.msra.mxu0 0.0
    %3815 = vmatprep.subr.mxu0 0.0
    %3816 = vmatpush1.msra.mxu0 0.0
    %3817 = vmatprep.subr.mxu0 0.0
    %3818 = vmatpush1.msra.mxu0 0.0
    %3819 = vmatprep.subr.mxu0 0.0
    %3820 = vmatpush1.msra.mxu0 0.0
    %3821 = vmatprep.subr.mxu0 0.0
    %3822 = vmatpush1.msra.mxu0 0.0
    %3823 = vmatprep.subr.mxu0 0.0
    %3824 = vmatpush1.msra.mxu0 0.0
    %3825 = vmatprep.subr.mxu0 0.0
    %3826 = vmatpush1.msra.mxu0 0.0
    %3827 = vmatprep.subr.mxu0 0.0
    %3828 = vmatpush1.msra.mxu0 0.0
    %3829 = vmatprep.subr.mxu0 0.0
    %3830 = vmatpush1.msra.mxu0 0.0
    %3831 = vmatprep.subr.mxu0 0.0
    %3832 = vmatpush1.msra.mxu0 0.0
    %3833 = vmatprep.subr.mxu0 0.0
    %3834 = vmatpush1.msra.mxu0 0.0
    %3835 = vmatprep.subr.mxu0 0.0
    %3836 = vmatpush1.msra.mxu0 0.0
    %3837 = vmatprep.subr.mxu0 0.0
    %3838 = vmatpush1.msra.mxu0 0.0
    %3839 = vmatprep.subr.mxu0 0.0
    %3840 = vmatpush1.msra.mxu0 0.0
    %3841 = vmatprep.subr.mxu0 0.0
    %3842 = vmatpush1.msra.mxu0 0.0
    %3843 = vmatprep.subr.mxu0 0.0
    %3844 = vmatpush1.msra.mxu0 0.0
    %3845 = vmatprep.mubr.f32.mxu0 0.0
    %v3846 = vand.u32 %v3741, 4294901760
    %v3847 = vsub.f32 %v3741, %v3846
    %v3848 = vand.u32 %v3847, 4294901760
    %v3849 = vsub.f32 %v3847, %v3848
    %v3850 = vand.u32 %v3849, 4294901760
    %3851 = vmatmul.mubr.f32.gmra.mrb[0].mxu0 %v3850
    %v3852 = vpop.f32.mrb[0].mxu0
    %v3853 = vadd.f32 %v3763, %v3852
    %v3854 = vpop.f32.mrb[0].mxu0
    %3855 = vdwg.mxu0
    %3856 = vmatprep.subr.mxu0 0.0
    %v3857 = vand.u32 %v3742, 4294901760
    %v3858 = vsub.f32 %v3742, %v3857
    %v3859 = vand.u32 %v3858, 4294901760
    %v3860 = vsub.f32 %v3858, %v3859
    %v3861 = vand.u32 %v3860, 4294901760
    %3862 = vmatpush1.msra.mxu0 %v3861
    %3863 = vmatprep.subr.mxu0 0.0
    %v3864 = vand.u32 %v3743, 4294901760
    %v3865 = vsub.f32 %v3743, %v3864
    %v3866 = vand.u32 %v3865, 4294901760
    %v3867 = vsub.f32 %v3865, %v3866
    %v3868 = vand.u32 %v3867, 4294901760
    %3869 = vmatpush1.msra.mxu0 %v3868
    %3870 = vmatprep.subr.mxu0 0.0
    %v3871 = vand.u32 %v3744, 4294901760
    %v3872 = vsub.f32 %v3744, %v3871
    %v3873 = vand.u32 %v3872, 4294901760
    %v3874 = vsub.f32 %v3872, %v3873
    %v3875 = vand.u32 %v3874, 4294901760
    %3876 = vmatpush1.msra.mxu0 %v3875
    %3877 = vmatprep.subr.mxu0 0.0
    %v3878 = vand.u32 %v3745, 4294901760
    %v3879 = vsub.f32 %v3745, %v3878
    %v3880 = vand.u32 %v3879, 4294901760
    %v3881 = vsub.f32 %v3879, %v3880
    %v3882 = vand.u32 %v3881, 4294901760
    %3883 = vmatpush1.msra.mxu0 %v3882
    %3884 = vmatprep.subr.mxu0 0.0
    %v3885 = vand.u32 %v3746, 4294901760
    %v3886 = vsub.f32 %v3746, %v3885
    %v3887 = vand.u32 %v3886, 4294901760
    %v3888 = vsub.f32 %v3886, %v3887
    %v3889 = vand.u32 %v3888, 4294901760
    %3890 = vmatpush1.msra.mxu0 %v3889
    %3891 = vmatprep.subr.mxu0 0.0
    %v3892 = vand.u32 %v3747, 4294901760
    %v3893 = vsub.f32 %v3747, %v3892
    %v3894 = vand.u32 %v3893, 4294901760
    %v3895 = vsub.f32 %v3893, %v3894
    %v3896 = vand.u32 %v3895, 4294901760
    %3897 = vmatpush1.msra.mxu0 %v3896
    %3898 = vmatprep.subr.mxu0 0.0
    %v3899 = vand.u32 %v3748, 4294901760
    %v3900 = vsub.f32 %v3748, %v3899
    %v3901 = vand.u32 %v3900, 4294901760
    %v3902 = vsub.f32 %v3900, %v3901
    %v3903 = vand.u32 %v3902, 4294901760
    %3904 = vmatpush1.msra.mxu0 %v3903
    %3905 = vmatprep.subr.mxu0 0.0
    %v3906 = vand.u32 %v3749, 4294901760
    %v3907 = vsub.f32 %v3749, %v3906
    %v3908 = vand.u32 %v3907, 4294901760
    %v3909 = vsub.f32 %v3907, %v3908
    %v3910 = vand.u32 %v3909, 4294901760
    %3911 = vmatpush1.msra.mxu0 %v3910
    %3912 = vmatprep.subr.mxu0 0.0
    %v3913 = vand.u32 %v3750, 4294901760
    %v3914 = vsub.f32 %v3750, %v3913
    %v3915 = vand.u32 %v3914, 4294901760
    %v3916 = vsub.f32 %v3914, %v3915
    %v3917 = vand.u32 %v3916, 4294901760
    %3918 = vmatpush1.msra.mxu0 %v3917
    %3919 = vmatprep.subr.mxu0 0.0
    %v3920 = vand.u32 %v3751, 4294901760
    %v3921 = vsub.f32 %v3751, %v3920
    %v3922 = vand.u32 %v3921, 4294901760
    %v3923 = vsub.f32 %v3921, %v3922
    %v3924 = vand.u32 %v3923, 4294901760
    %3925 = vmatpush1.msra.mxu0 %v3924
    %3926 = vmatprep.subr.mxu0 0.0
    %v3927 = vand.u32 %v3752, 4294901760
    %v3928 = vsub.f32 %v3752, %v3927
    %v3929 = vand.u32 %v3928, 4294901760
    %v3930 = vsub.f32 %v3928, %v3929
    %v3931 = vand.u32 %v3930, 4294901760
    %3932 = vmatpush1.msra.mxu0 %v3931
    %3933 = vmatprep.subr.mxu0 0.0
    %v3934 = vand.u32 %v3753, 4294901760
    %v3935 = vsub.f32 %v3753, %v3934
    %v3936 = vand.u32 %v3935, 4294901760
    %v3937 = vsub.f32 %v3935, %v3936
    %v3938 = vand.u32 %v3937, 4294901760
    %3939 = vmatpush1.msra.mxu0 %v3938
    %3940 = vmatprep.subr.mxu0 0.0
    %v3941 = vand.u32 %v3754, 4294901760
    %v3942 = vsub.f32 %v3754, %v3941
    %v3943 = vand.u32 %v3942, 4294901760
    %v3944 = vsub.f32 %v3942, %v3943
    %v3945 = vand.u32 %v3944, 4294901760
    %3946 = vmatpush1.msra.mxu0 %v3945
    %3947 = vmatprep.subr.mxu0 0.0
    %v3948 = vand.u32 %v3755, 4294901760
    %v3949 = vsub.f32 %v3755, %v3948
    %v3950 = vand.u32 %v3949, 4294901760
    %v3951 = vsub.f32 %v3949, %v3950
    %v3952 = vand.u32 %v3951, 4294901760
    %3953 = vmatpush1.msra.mxu0 %v3952
    %3954 = vmatprep.subr.mxu0 0.0
    %v3955 = vand.u32 %v3756, 4294901760
    %v3956 = vsub.f32 %v3756, %v3955
    %v3957 = vand.u32 %v3956, 4294901760
    %v3958 = vsub.f32 %v3956, %v3957
    %v3959 = vand.u32 %v3958, 4294901760
    %3960 = vmatpush1.msra.mxu0 %v3959
    %3961 = vmatprep.subr.mxu0 0.0
    %v3962 = vand.u32 %v3757, 4294901760
    %v3963 = vsub.f32 %v3757, %v3962
    %v3964 = vand.u32 %v3963, 4294901760
    %v3965 = vsub.f32 %v3963, %v3964
    %v3966 = vand.u32 %v3965, 4294901760
    %3967 = vmatpush1.msra.mxu0 %v3966
    %3968 = vmatprep.subr.mxu0 0.0
    %3969 = vmatpush1.msra.mxu0 0.0
    %3970 = vmatprep.subr.mxu0 0.0
    %3971 = vmatpush1.msra.mxu0 0.0
    %3972 = vmatprep.subr.mxu0 0.0
    %3973 = vmatpush1.msra.mxu0 0.0
    %3974 = vmatprep.subr.mxu0 0.0
    %3975 = vmatpush1.msra.mxu0 0.0
    %3976 = vmatprep.subr.mxu0 0.0
    %3977 = vmatpush1.msra.mxu0 0.0
    %3978 = vmatprep.subr.mxu0 0.0
    %3979 = vmatpush1.msra.mxu0 0.0
    %3980 = vmatprep.subr.mxu0 0.0
    %3981 = vmatpush1.msra.mxu0 0.0
    %3982 = vmatprep.subr.mxu0 0.0
    %3983 = vmatpush1.msra.mxu0 0.0
    %3984 = vmatprep.subr.mxu0 0.0
    %3985 = vmatpush1.msra.mxu0 0.0
    %3986 = vmatprep.subr.mxu0 0.0
    %3987 = vmatpush1.msra.mxu0 0.0
    %3988 = vmatprep.subr.mxu0 0.0
    %3989 = vmatpush1.msra.mxu0 0.0
    %3990 = vmatprep.subr.mxu0 0.0
    %3991 = vmatpush1.msra.mxu0 0.0
    %3992 = vmatprep.subr.mxu0 0.0
    %3993 = vmatpush1.msra.mxu0 0.0
    %3994 = vmatprep.subr.mxu0 0.0
    %3995 = vmatpush1.msra.mxu0 0.0
    %3996 = vmatprep.subr.mxu0 0.0
    %3997 = vmatpush1.msra.mxu0 0.0
    %3998 = vmatprep.subr.mxu0 0.0
    %3999 = vmatpush1.msra.mxu0 0.0
    %4000 = vmatprep.mubr.f32.mxu0 0.0
    %v4001 = vand.u32 %v3741, 4294901760
    %4002 = vmatmul.mubr.f32.gmra.mrb[0].mxu0 %v4001
    %v4003 = vpop.f32.mrb[0].mxu0
    %v4004 = vadd.f32 %v3853, %v4003
    %v4005 = vpop.f32.mrb[0].mxu0
    %4006 = vdwg.mxu0
    %4007 = vmatprep.subr.mxu0 0.0
    %v4008 = vand.u32 %v3742, 4294901760
    %v4009 = vsub.f32 %v3742, %v4008
    %4010 = vmatpush1.msra.mxu0 %v4009
    %4011 = vmatprep.subr.mxu0 0.0
    %v4012 = vand.u32 %v3743, 4294901760
    %v4013 = vsub.f32 %v3743, %v4012
    %4014 = vmatpush1.msra.mxu0 %v4013
    %4015 = vmatprep.subr.mxu0 0.0
    %v4016 = vand.u32 %v3744, 4294901760
    %v4017 = vsub.f32 %v3744, %v4016
    %4018 = vmatpush1.msra.mxu0 %v4017
    %4019 = vmatprep.subr.mxu0 0.0
    %v4020 = vand.u32 %v3745, 4294901760
    %v4021 = vsub.f32 %v3745, %v4020
    %4022 = vmatpush1.msra.mxu0 %v4021
    %4023 = vmatprep.subr.mxu0 0.0
    %v4024 = vand.u32 %v3746, 4294901760
    %v4025 = vsub.f32 %v3746, %v4024
    %4026 = vmatpush1.msra.mxu0 %v4025
    %4027 = vmatprep.subr.mxu0 0.0
    %v4028 = vand.u32 %v3747, 4294901760
    %v4029 = vsub.f32 %v3747, %v4028
    %4030 = vmatpush1.msra.mxu0 %v4029
    %4031 = vmatprep.subr.mxu0 0.0
    %v4032 = vand.u32 %v3748, 4294901760
    %v4033 = vsub.f32 %v3748, %v4032
    %4034 = vmatpush1.msra.mxu0 %v4033
    %4035 = vmatprep.subr.mxu0 0.0
    %v4036 = vand.u32 %v3749, 4294901760
    %v4037 = vsub.f32 %v3749, %v4036
    %4038 = vmatpush1.msra.mxu0 %v4037
    %4039 = vmatprep.subr.mxu0 0.0
    %v4040 = vand.u32 %v3750, 4294901760
    %v4041 = vsub.f32 %v3750, %v4040
    %4042 = vmatpush1.msra.mxu0 %v4041
    %4043 = vmatprep.subr.mxu0 0.0
    %v4044 = vand.u32 %v3751, 4294901760
    %v4045 = vsub.f32 %v3751, %v4044
    %4046 = vmatpush1.msra.mxu0 %v4045
    %4047 = vmatprep.subr.mxu0 0.0
    %v4048 = vand.u32 %v3752, 4294901760
    %v4049 = vsub.f32 %v3752, %v4048
    %4050 = vmatpush1.msra.mxu0 %v4049
    %4051 = vmatprep.subr.mxu0 0.0
    %v4052 = vand.u32 %v3753, 4294901760
    %v4053 = vsub.f32 %v3753, %v4052
    %4054 = vmatpush1.msra.mxu0 %v4053
    %4055 = vmatprep.subr.mxu0 0.0
    %v4056 = vand.u32 %v3754, 4294901760
    %v4057 = vsub.f32 %v3754, %v4056
    %4058 = vmatpush1.msra.mxu0 %v4057
    %4059 = vmatprep.subr.mxu0 0.0
    %v4060 = vand.u32 %v3755, 4294901760
    %v4061 = vsub.f32 %v3755, %v4060
    %4062 = vmatpush1.msra.mxu0 %v4061
    %4063 = vmatprep.subr.mxu0 0.0
    %v4064 = vand.u32 %v3756, 4294901760
    %v4065 = vsub.f32 %v3756, %v4064
    %4066 = vmatpush1.msra.mxu0 %v4065
    %4067 = vmatprep.subr.mxu0 0.0
    %v4068 = vand.u32 %v3757, 4294901760
    %v4069 = vsub.f32 %v3757, %v4068
    %4070 = vmatpush1.msra.mxu0 %v4069
    %4071 = vmatprep.subr.mxu0 0.0
    %4072 = vmatpush1.msra.mxu0 0.0
    %4073 = vmatprep.subr.mxu0 0.0
    %4074 = vmatpush1.msra.mxu0 0.0
    %4075 = vmatprep.subr.mxu0 0.0
    %4076 = vmatpush1.msra.mxu0 0.0
    %4077 = vmatprep.subr.mxu0 0.0
    %4078 = vmatpush1.msra.mxu0 0.0
    %4079 = vmatprep.subr.mxu0 0.0
    %4080 = vmatpush1.msra.mxu0 0.0
    %4081 = vmatprep.subr.mxu0 0.0
    %4082 = vmatpush1.msra.mxu0 0.0
    %4083 = vmatprep.subr.mxu0 0.0
    %4084 = vmatpush1.msra.mxu0 0.0
    %4085 = vmatprep.subr.mxu0 0.0
    %4086 = vmatpush1.msra.mxu0 0.0
    %4087 = vmatprep.subr.mxu0 0.0
    %4088 = vmatpush1.msra.mxu0 0.0
    %4089 = vmatprep.subr.mxu0 0.0
    %4090 = vmatpush1.msra.mxu0 0.0
    %4091 = vmatprep.subr.mxu0 0.0
    %4092 = vmatpush1.msra.mxu0 0.0
    %4093 = vmatprep.subr.mxu0 0.0
    %4094 = vmatpush1.msra.mxu0 0.0
    %4095 = vmatprep.subr.mxu0 0.0
    %4096 = vmatpush1.msra.mxu0 0.0
    %4097 = vmatprep.subr.mxu0 0.0
    %4098 = vmatpush1.msra.mxu0 0.0
    %4099 = vmatprep.subr.mxu0 0.0
    %4100 = vmatpush1.msra.mxu0 0.0
    %4101 = vmatprep.subr.mxu0 0.0
    %4102 = vmatpush1.msra.mxu0 0.0
    %4103 = vmatprep.mubr.f32.mxu0 0.0
    %v4104 = vand.u32 %v3741, 4294901760
    %v4105 = vsub.f32 %v3741, %v4104
    %4106 = vmatmul.mubr.f32.gmra.mrb[0].mxu0 %v4105
    %v4107 = vpop.f32.mrb[0].mxu0
    %v4108 = vadd.f32 %v4004, %v4107
    %v4109 = vpop.f32.mrb[0].mxu0
    %4110 = vdwg.mxu0
    %4111 = vmatprep.subr.mxu0 0.0
    %v4112 = vand.u32 %v3742, 4294901760
    %4113 = vmatpush1.msra.mxu0 %v4112
    %4114 = vmatprep.subr.mxu0 0.0
    %v4115 = vand.u32 %v3743, 4294901760
    %4116 = vmatpush1.msra.mxu0 %v4115
    %4117 = vmatprep.subr.mxu0 0.0
    %v4118 = vand.u32 %v3744, 4294901760
    %4119 = vmatpush1.msra.mxu0 %v4118
    %4120 = vmatprep.subr.mxu0 0.0
    %v4121 = vand.u32 %v3745, 4294901760
    %4122 = vmatpush1.msra.mxu0 %v4121
    %4123 = vmatprep.subr.mxu0 0.0
    %v4124 = vand.u32 %v3746, 4294901760
    %4125 = vmatpush1.msra.mxu0 %v4124
    %4126 = vmatprep.subr.mxu0 0.0
    %v4127 = vand.u32 %v3747, 4294901760
    %4128 = vmatpush1.msra.mxu0 %v4127
    %4129 = vmatprep.subr.mxu0 0.0
    %v4130 = vand.u32 %v3748, 4294901760
    %4131 = vmatpush1.msra.mxu0 %v4130
    %4132 = vmatprep.subr.mxu0 0.0
    %v4133 = vand.u32 %v3749, 4294901760
    %4134 = vmatpush1.msra.mxu0 %v4133
    %4135 = vmatprep.subr.mxu0 0.0
    %v4136 = vand.u32 %v3750, 4294901760
    %4137 = vmatpush1.msra.mxu0 %v4136
    %4138 = vmatprep.subr.mxu0 0.0
    %v4139 = vand.u32 %v3751, 4294901760
    %4140 = vmatpush1.msra.mxu0 %v4139
    %4141 = vmatprep.subr.mxu0 0.0
    %v4142 = vand.u32 %v3752, 4294901760
    %4143 = vmatpush1.msra.mxu0 %v4142
    %4144 = vmatprep.subr.mxu0 0.0
    %v4145 = vand.u32 %v3753, 4294901760
    %4146 = vmatpush1.msra.mxu0 %v4145
    %4147 = vmatprep.subr.mxu0 0.0
    %v4148 = vand.u32 %v3754, 4294901760
    %4149 = vmatpush1.msra.mxu0 %v4148
    %4150 = vmatprep.subr.mxu0 0.0
    %v4151 = vand.u32 %v3755, 4294901760
    %4152 = vmatpush1.msra.mxu0 %v4151
    %4153 = vmatprep.subr.mxu0 0.0
    %v4154 = vand.u32 %v3756, 4294901760
    %4155 = vmatpush1.msra.mxu0 %v4154
    %4156 = vmatprep.subr.mxu0 0.0
    %v4157 = vand.u32 %v3757, 4294901760
    %4158 = vmatpush1.msra.mxu0 %v4157
    %4159 = vmatprep.subr.mxu0 0.0
    %4160 = vmatpush1.msra.mxu0 0.0
    %4161 = vmatprep.subr.mxu0 0.0
    %4162 = vmatpush1.msra.mxu0 0.0
    %4163 = vmatprep.subr.mxu0 0.0
    %4164 = vmatpush1.msra.mxu0 0.0
    %4165 = vmatprep.subr.mxu0 0.0
    %4166 = vmatpush1.msra.mxu0 0.0
    %4167 = vmatprep.subr.mxu0 0.0
    %4168 = vmatpush1.msra.mxu0 0.0
    %4169 = vmatprep.subr.mxu0 0.0
    %4170 = vmatpush1.msra.mxu0 0.0
    %4171 = vmatprep.subr.mxu0 0.0
    %4172 = vmatpush1.msra.mxu0 0.0
    %4173 = vmatprep.subr.mxu0 0.0
    %4174 = vmatpush1.msra.mxu0 0.0
    %4175 = vmatprep.subr.mxu0 0.0
    %4176 = vmatpush1.msra.mxu0 0.0
    %4177 = vmatprep.subr.mxu0 0.0
    %4178 = vmatpush1.msra.mxu0 0.0
    %4179 = vmatprep.subr.mxu0 0.0
    %4180 = vmatpush1.msra.mxu0 0.0
    %4181 = vmatprep.subr.mxu0 0.0
    %4182 = vmatpush1.msra.mxu0 0.0
    %4183 = vmatprep.subr.mxu0 0.0
    %4184 = vmatpush1.msra.mxu0 0.0
    %4185 = vmatprep.subr.mxu0 0.0
    %4186 = vmatpush1.msra.mxu0 0.0
    %4187 = vmatprep.subr.mxu0 0.0
    %4188 = vmatpush1.msra.mxu0 0.0
    %4189 = vmatprep.subr.mxu0 0.0
    %4190 = vmatpush1.msra.mxu0 0.0
    %4191 = vmatprep.mubr.f32.mxu0 0.0
    %v4192 = vand.u32 %v3741, 4294901760
    %v4193 = vsub.f32 %v3741, %v4192
    %v4194 = vand.u32 %v4193, 4294901760
    %4195 = vmatmul.mubr.f32.gmra.mrb[0].mxu0 %v4194
    %v4196 = vpop.f32.mrb[0].mxu0
    %v4197 = vadd.f32 %v4108, %v4196
    %v4198 = vpop.f32.mrb[0].mxu0
    %4199 = vdwg.mxu0
    %4200 = vmatprep.subr.mxu0 0.0
    %v4201 = vand.u32 %v3742, 4294901760
    %v4202 = vsub.f32 %v3742, %v4201
    %v4203 = vand.u32 %v4202, 4294901760
    %4204 = vmatpush1.msra.mxu0 %v4203
    %4205 = vmatprep.subr.mxu0 0.0
    %v4206 = vand.u32 %v3743, 4294901760
    %v4207 = vsub.f32 %v3743, %v4206
    %v4208 = vand.u32 %v4207, 4294901760
    %4209 = vmatpush1.msra.mxu0 %v4208
    %4210 = vmatprep.subr.mxu0 0.0
    %v4211 = vand.u32 %v3744, 4294901760
    %v4212 = vsub.f32 %v3744, %v4211
    %v4213 = vand.u32 %v4212, 4294901760
    %4214 = vmatpush1.msra.mxu0 %v4213
    %4215 = vmatprep.subr.mxu0 0.0
    %v4216 = vand.u32 %v3745, 4294901760
    %v4217 = vsub.f32 %v3745, %v4216
    %v4218 = vand.u32 %v4217, 4294901760
    %4219 = vmatpush1.msra.mxu0 %v4218
    %4220 = vmatprep.subr.mxu0 0.0
    %v4221 = vand.u32 %v3746, 4294901760
    %v4222 = vsub.f32 %v3746, %v4221
    %v4223 = vand.u32 %v4222, 4294901760
    %4224 = vmatpush1.msra.mxu0 %v4223
    %4225 = vmatprep.subr.mxu0 0.0
    %v4226 = vand.u32 %v3747, 4294901760
    %v4227 = vsub.f32 %v3747, %v4226
    %v4228 = vand.u32 %v4227, 4294901760
    %4229 = vmatpush1.msra.mxu0 %v4228
    %4230 = vmatprep.subr.mxu0 0.0
    %v4231 = vand.u32 %v3748, 4294901760
    %v4232 = vsub.f32 %v3748, %v4231
    %v4233 = vand.u32 %v4232, 4294901760
    %4234 = vmatpush1.msra.mxu0 %v4233
    %4235 = vmatprep.subr.mxu0 0.0
    %v4236 = vand.u32 %v3749, 4294901760
    %v4237 = vsub.f32 %v3749, %v4236
    %v4238 = vand.u32 %v4237, 4294901760
    %4239 = vmatpush1.msra.mxu0 %v4238
    %4240 = vmatprep.subr.mxu0 0.0
    %v4241 = vand.u32 %v3750, 4294901760
    %v4242 = vsub.f32 %v3750, %v4241
    %v4243 = vand.u32 %v4242, 4294901760
    %4244 = vmatpush1.msra.mxu0 %v4243
    %4245 = vmatprep.subr.mxu0 0.0
    %v4246 = vand.u32 %v3751, 4294901760
    %v4247 = vsub.f32 %v3751, %v4246
    %v4248 = vand.u32 %v4247, 4294901760
    %4249 = vmatpush1.msra.mxu0 %v4248
    %4250 = vmatprep.subr.mxu0 0.0
    %v4251 = vand.u32 %v3752, 4294901760
    %v4252 = vsub.f32 %v3752, %v4251
    %v4253 = vand.u32 %v4252, 4294901760
    %4254 = vmatpush1.msra.mxu0 %v4253
    %4255 = vmatprep.subr.mxu0 0.0
    %v4256 = vand.u32 %v3753, 4294901760
    %v4257 = vsub.f32 %v3753, %v4256
    %v4258 = vand.u32 %v4257, 4294901760
    %4259 = vmatpush1.msra.mxu0 %v4258
    %4260 = vmatprep.subr.mxu0 0.0
    %v4261 = vand.u32 %v3754, 4294901760
    %v4262 = vsub.f32 %v3754, %v4261
    %v4263 = vand.u32 %v4262, 4294901760
    %4264 = vmatpush1.msra.mxu0 %v4263
    %4265 = vmatprep.subr.mxu0 0.0
    %v4266 = vand.u32 %v3755, 4294901760
    %v4267 = vsub.f32 %v3755, %v4266
    %v4268 = vand.u32 %v4267, 4294901760
    %4269 = vmatpush1.msra.mxu0 %v4268
    %4270 = vmatprep.subr.mxu0 0.0
    %v4271 = vand.u32 %v3756, 4294901760
    %v4272 = vsub.f32 %v3756, %v4271
    %v4273 = vand.u32 %v4272, 4294901760
    %4274 = vmatpush1.msra.mxu0 %v4273
    %4275 = vmatprep.subr.mxu0 0.0
    %v4276 = vand.u32 %v3757, 4294901760
    %v4277 = vsub.f32 %v3757, %v4276
    %v4278 = vand.u32 %v4277, 4294901760
    %4279 = vmatpush1.msra.mxu0 %v4278
    %4280 = vmatprep.subr.mxu0 0.0
    %4281 = vmatpush1.msra.mxu0 0.0
    %4282 = vmatprep.subr.mxu0 0.0
    %4283 = vmatpush1.msra.mxu0 0.0
    %4284 = vmatprep.subr.mxu0 0.0
    %4285 = vmatpush1.msra.mxu0 0.0
    %4286 = vmatprep.subr.mxu0 0.0
    %4287 = vmatpush1.msra.mxu0 0.0
    %4288 = vmatprep.subr.mxu0 0.0
    %4289 = vmatpush1.msra.mxu0 0.0
    %4290 = vmatprep.subr.mxu0 0.0
    %4291 = vmatpush1.msra.mxu0 0.0
    %4292 = vmatprep.subr.mxu0 0.0
    %4293 = vmatpush1.msra.mxu0 0.0
    %4294 = vmatprep.subr.mxu0 0.0
    %4295 = vmatpush1.msra.mxu0 0.0
    %4296 = vmatprep.subr.mxu0 0.0
    %4297 = vmatpush1.msra.mxu0 0.0
    %4298 = vmatprep.subr.mxu0 0.0
    %4299 = vmatpush1.msra.mxu0 0.0
    %4300 = vmatprep.subr.mxu0 0.0
    %4301 = vmatpush1.msra.mxu0 0.0
    %4302 = vmatprep.subr.mxu0 0.0
    %4303 = vmatpush1.msra.mxu0 0.0
    %4304 = vmatprep.subr.mxu0 0.0
    %4305 = vmatpush1.msra.mxu0 0.0
    %4306 = vmatprep.subr.mxu0 0.0
    %4307 = vmatpush1.msra.mxu0 0.0
    %4308 = vmatprep.subr.mxu0 0.0
    %4309 = vmatpush1.msra.mxu0 0.0
    %4310 = vmatprep.subr.mxu0 0.0
    %4311 = vmatpush1.msra.mxu0 0.0
    %4312 = vmatprep.mubr.f32.mxu0 0.0
    %v4313 = vand.u32 %v3741, 4294901760
    %4314 = vmatmul.mubr.f32.gmra.mrb[0].mxu0 %v4313
    %v4315 = vpop.f32.mrb[0].mxu0
    %v4316 = vadd.f32 %v4197, %v4315
    %v4317 = vpop.f32.mrb[0].mxu0
    %4318 = vdwg.mxu0
    %4319 = vmatprep.subr.mxu0 0.0
    %v4320 = vand.u32 %v3742, 4294901760
    %4321 = vmatpush1.msra.mxu0 %v4320
    %4322 = vmatprep.subr.mxu0 0.0
    %v4323 = vand.u32 %v3743, 4294901760
    %4324 = vmatpush1.msra.mxu0 %v4323
    %4325 = vmatprep.subr.mxu0 0.0
    %v4326 = vand.u32 %v3744, 4294901760
    %4327 = vmatpush1.msra.mxu0 %v4326
    %4328 = vmatprep.subr.mxu0 0.0
    %v4329 = vand.u32 %v3745, 4294901760
    %4330 = vmatpush1.msra.mxu0 %v4329
    %4331 = vmatprep.subr.mxu0 0.0
    %v4332 = vand.u32 %v3746, 4294901760
    %4333 = vmatpush1.msra.mxu0 %v4332
    %4334 = vmatprep.subr.mxu0 0.0
    %v4335 = vand.u32 %v3747, 4294901760
    %4336 = vmatpush1.msra.mxu0 %v4335
    %4337 = vmatprep.subr.mxu0 0.0
    %v4338 = vand.u32 %v3748, 4294901760
    %4339 = vmatpush1.msra.mxu0 %v4338
    %4340 = vmatprep.subr.mxu0 0.0
    %v4341 = vand.u32 %v3749, 4294901760
    %4342 = vmatpush1.msra.mxu0 %v4341
    %4343 = vmatprep.subr.mxu0 0.0
    %v4344 = vand.u32 %v3750, 4294901760
    %4345 = vmatpush1.msra.mxu0 %v4344
    %4346 = vmatprep.subr.mxu0 0.0
    %v4347 = vand.u32 %v3751, 4294901760
    %4348 = vmatpush1.msra.mxu0 %v4347
    %4349 = vmatprep.subr.mxu0 0.0
    %v4350 = vand.u32 %v3752, 4294901760
    %4351 = vmatpush1.msra.mxu0 %v4350
    %4352 = vmatprep.subr.mxu0 0.0
    %v4353 = vand.u32 %v3753, 4294901760
    %4354 = vmatpush1.msra.mxu0 %v4353
    %4355 = vmatprep.subr.mxu0 0.0
    %v4356 = vand.u32 %v3754, 4294901760
    %4357 = vmatpush1.msra.mxu0 %v4356
    %4358 = vmatprep.subr.mxu0 0.0
    %v4359 = vand.u32 %v3755, 4294901760
    %4360 = vmatpush1.msra.mxu0 %v4359
    %4361 = vmatprep.subr.mxu0 0.0
    %v4362 = vand.u32 %v3756, 4294901760
    %4363 = vmatpush1.msra.mxu0 %v4362
    %4364 = vmatprep.subr.mxu0 0.0
    %v4365 = vand.u32 %v3757, 4294901760
    %4366 = vmatpush1.msra.mxu0 %v4365
    %4367 = vmatprep.subr.mxu0 0.0
    %4368 = vmatpush1.msra.mxu0 0.0
    %4369 = vmatprep.subr.mxu0 0.0
    %4370 = vmatpush1.msra.mxu0 0.0
    %4371 = vmatprep.subr.mxu0 0.0
    %4372 = vmatpush1.msra.mxu0 0.0
    %4373 = vmatprep.subr.mxu0 0.0
    %4374 = vmatpush1.msra.mxu0 0.0
    %4375 = vmatprep.subr.mxu0 0.0
    %4376 = vmatpush1.msra.mxu0 0.0
    %4377 = vmatprep.subr.mxu0 0.0
    %4378 = vmatpush1.msra.mxu0 0.0
    %4379 = vmatprep.subr.mxu0 0.0
    %4380 = vmatpush1.msra.mxu0 0.0
    %4381 = vmatprep.subr.mxu0 0.0
    %4382 = vmatpush1.msra.mxu0 0.0
    %4383 = vmatprep.subr.mxu0 0.0
    %4384 = vmatpush1.msra.mxu0 0.0
    %4385 = vmatprep.subr.mxu0 0.0
    %4386 = vmatpush1.msra.mxu0 0.0
    %4387 = vmatprep.subr.mxu0 0.0
    %4388 = vmatpush1.msra.mxu0 0.0
    %4389 = vmatprep.subr.mxu0 0.0
    %4390 = vmatpush1.msra.mxu0 0.0
    %4391 = vmatprep.subr.mxu0 0.0
    %4392 = vmatpush1.msra.mxu0 0.0
    %4393 = vmatprep.subr.mxu0 0.0
    %4394 = vmatpush1.msra.mxu0 0.0
    %4395 = vmatprep.subr.mxu0 0.0
    %4396 = vmatpush1.msra.mxu0 0.0
    %4397 = vmatprep.subr.mxu0 0.0
    %4398 = vmatpush1.msra.mxu0 0.0
    %4399 = vmatprep.mubr.f32.mxu0 0.0
    %v4400 = vand.u32 %v3741, 4294901760
    %4401 = vmatmul.mubr.f32.gmra.mrb[0].mxu0 %v4400
    %v4402 = vpop.f32.mrb[0].mxu0
    %v4403 = vadd.f32 %v4316, %v4402
    %v4404 = vpop.f32.mrb[0].mxu0
    %4405 = vdwg.mxu0
    %4406 = vst [vmem:[#allocation8] sm:$0xff] %v4403
    // Predicated region
    $region34: #{tpu_custom_call.1} parent=1 // pred_check
      _
    $region35: #{tpu_custom_call.1} parent=1 // pred_check_branch
      %4408 = sbr.rel (0) target = $region37
    $region36: #{tpu_custom_call.1} parent=1 // pred_region
      %s4410 = ssub.s32 128, 32
      %4411 = vsyncadd [#allocation4], %s4410
      %s4412 = sshll.u32 [#allocation8], 4
      %s4413 = int_to_ptr.vmem [resolvable:$true] %s4412
      %4418 = dma.vmem_to_hbm [thread:$0]  %s4413, 32, %s5, [#allocation4], 32, 32, 2
    $region37: #{tpu_custom_call.1} parent=1 // pred_fallthru
      _
    // Predicated region
    $region38: #{tpu_custom_call.1} parent=1 // pred_check
      _
    $region39: #{tpu_custom_call.1} parent=1 // pred_check_branch
      %4420 = sbr.rel (0) target = $region41
    $region40: #{tpu_custom_call.1} parent=1 // pred_region
      %4421 = dma.done [#allocation4], 128
    $region41: #{tpu_custom_call.1} parent=1 // pred_fallthru
      _
    %4422 = vsyncpa [#allocation3], 1
    %4423 = vsyncpa [#allocation6], 1
    %4424 = vsyncpa [#allocation4], 1

</llo_original>
